<compile_context>
chip_gen: v6e
topology: v6e:2x2x1
jax: 0.10.0
libtpu: 0.0.40
codegen_flags: <defaults>
</compile_context>

<pallas_src>
import functools

import jax
import jax.numpy as jnp
from jax.experimental import pallas as pl
from jax.experimental.pallas import tpu as pltpu

C = 64            # fixed by the module (Conv2d 64 -> 64)
EPS = 1e-5        # BatchNorm2d default eps
NEG_SLOPE = 0.2   # LeakyReLU slope


def _resblock_kernel(x_ref, w1_ref, s1_ref, b1_ref, w2_ref, s2_ref, b2_ref,
                     out_ref, xpad_ref, midpad_ref, *, width, front):
    # x_ref:        (Nb, C, H*W)  f32   one batch block, channels-major, spatial on lanes
    # w{1,2}_ref:   (3, C, 3*C)   bf16  per-kernel-row K-packed weights
    # s/b refs:     (C, 1)        f32   folded BN scale / bias
    # out_ref:      (Nb, C, H*W)  f32
    # xpad/midpad:  (C, L)        bf16  VMEM scratch, row-padded flattened spatial
    #   layout: value of padded row r (r=0 / H+1 are zero rows), col w lives at
    #   lane front + r*width + w; the image interior starts at lane front+width,
    #   which is a multiple of 128 (aligned, unmasked stores).
    nb, ch, hw = x_ref.shape
    L = xpad_ref.shape[1]
    lo = front + width          # first interior lane (multiple of 128)
    hi = lo + hw                # one past the interior

    # Column-position masks for the dx = 0 / dx = 2 taps (their lane-shifted
    # reads wrap across image rows at w == 0 / w == W-1).  Hoisted once.
    col = jax.lax.broadcasted_iota(jnp.int32, (1, hw), 1) % width
    mask_l = col != 0
    mask_r = col != (width - 1)

    # Re-zero only the halo lanes (padding rows + alignment slop) each step.
    zl = jnp.zeros((ch, lo), jnp.bfloat16)
    zr = jnp.zeros((ch, L - hi), jnp.bfloat16)
    xpad_ref[:, :lo] = zl
    xpad_ref[:, hi:] = zr
    midpad_ref[:, :lo] = zl
    midpad_ref[:, hi:] = zr

    def conv3x3(src_ref, wk_ref):
        # 3 K-packed MXU matmuls: (C, 3C) x (3C, H*W), f32 accumulation.
        acc = jnp.zeros((ch, hw), jnp.float32)
        for dy in range(3):
            o = front + dy * width - 1
            left = src_ref[:, o:o + hw]
            center = src_ref[:, o + 1:o + 1 + hw]
            right = src_ref[:, o + 2:o + 2 + hw]
            left = jnp.where(mask_l, left, jnp.zeros_like(left))
            right = jnp.where(mask_r, right, jnp.zeros_like(right))
            patch = jnp.concatenate([left, center, right], axis=0)  # (3C, H*W) bf16
            acc = acc + jnp.dot(wk_ref[dy], patch,
                                preferred_element_type=jnp.float32)
        return acc

    for n in range(nb):
        x_n = x_ref[n]                                   # (C, H*W) f32
        xpad_ref[:, lo:hi] = x_n.astype(jnp.bfloat16)    # aligned interior write

        # conv1 -> bn1 (folded) -> LeakyReLU(0.2), all f32 except MXU operands.
        mid = conv3x3(xpad_ref, w1_ref) * s1_ref[...] + b1_ref[...]
        mid = jnp.where(mid >= 0, mid, NEG_SLOPE * mid)
        midpad_ref[:, lo:hi] = mid.astype(jnp.bfloat16)

        # conv2 -> bn2 (folded) -> residual add (identity read from f32 input).
        out = conv3x3(midpad_ref, w2_ref) * s2_ref[...] + b2_ref[...] + x_n
        out_ref[n] = out.astype(out_ref.dtype)           # lane-dense store


@functools.partial(jax.jit, static_argnames=("nb",))
def residual_block(x_nchw, w1, g1, b1, m1, v1, w2, g2, b2, m2, v2, *, nb=1):
    """x_nchw: (N, 64, H, W) float32.  Weights/BN params in PyTorch layouts."""
    N, Cin, H, W = x_nchw.shape
    assert Cin == C
    assert N % nb == 0
    HW = H * W

    # Front lane padding so the image interior starts at a multiple of 128.
    F = (-W) % 128
    if F == 0:
        F = 128
    L = F + (H + 2) * W + 1
    L = ((L + 127) // 128) * 128       # scratch lane length (rounded up)

    # No transpose / no pad: NCHW is already channels-on-sublanes,
    # spatial-on-lanes; just merge H,W (free, contiguous).
    x_flat = x_nchw.reshape(N, C, HW).astype(jnp.float32)

    # Conv weights (O, I, 3, 3) -> (dy, O, dx*C + I) = (3, C, 3C), bf16 operands.
    def prep_w(w):
        return jnp.transpose(w, (2, 0, 3, 1)).reshape(3, C, 3 * C).astype(jnp.bfloat16)

    # Fold eval-mode BN into per-output-channel scale/bias, shaped (C, 1), f32.
    def fold_bn(g, b, m, v):
        scale = (g / jnp.sqrt(v + EPS)).astype(jnp.float32)
        bias = (b - m * scale).astype(jnp.float32)
        return scale.reshape(C, 1), bias.reshape(C, 1)

    w1p, w2p = prep_w(w1), prep_w(w2)
    s1, bb1 = fold_bn(g1, b1, m1, v1)
    s2, bb2 = fold_bn(g2, b2, m2, v2)

    kern = functools.partial(_resblock_kernel, width=W, front=F)

    grid_spec = pltpu.PrefetchScalarGridSpec(
        num_scalar_prefetch=0,
        grid=(N // nb,),
        in_specs=[
            pl.BlockSpec((nb, C, HW), lambda i: (i, 0, 0)),
            pl.BlockSpec((3, C, 3 * C), lambda i: (0, 0, 0)),
            pl.BlockSpec((C, 1), lambda i: (0, 0)),
            pl.BlockSpec((C, 1), lambda i: (0, 0)),
            pl.BlockSpec((3, C, 3 * C), lambda i: (0, 0, 0)),
            pl.BlockSpec((C, 1), lambda i: (0, 0)),
            pl.BlockSpec((C, 1), lambda i: (0, 0)),
        ],
        out_specs=pl.BlockSpec((nb, C, HW), lambda i: (i, 0, 0)),
        scratch_shapes=[
            pltpu.VMEM((C, L), jnp.bfloat16),   # padded input (bf16 MXU operand)
            pltpu.VMEM((C, L), jnp.bfloat16),   # padded conv1 output
        ],
    )

    out_flat = pl.pallas_call(
        kern,
        out_shape=jax.ShapeDtypeStruct((N, C, HW), jnp.float32),
        grid_spec=grid_spec,
        compiler_params=pltpu.CompilerParams(
            dimension_semantics=("parallel",),
            vmem_limit_bytes=32 * 1024 * 1024,
        ),
    )(x_flat, w1p, s1, bb1, w2p, s2, bb2)

    return out_flat.reshape(N, C, H, W)   # still NCHW


def residual_block_ref(x, w1, g1, b1, m1, v1, w2, g2, b2, m2, v2):
    """Pure-JAX reference (NCHW), mirrors the PyTorch forward in eval mode."""
    def conv(x, w):
        return jax.lax.conv_general_dilated(
            x, w, window_strides=(1, 1), padding=((1, 1), (1, 1)),
            dimension_numbers=("NCHW", "OIHW", "NCHW"))

    def bn(x, g, b, m, v):
        sc = (g / jnp.sqrt(v + EPS))[None, :, None, None]
        return (x - m[None, :, None, None]) * sc + b[None, :, None, None]

    out = bn(conv(x, w1), g1, b1, m1, v1)
    out = jnp.where(out >= 0, out, NEG_SLOPE * out)
    out = bn(conv(out, w2), g2, b2, m2, v2)
    return out + x


if __name__ == "__main__":
    key = jax.random.PRNGKey(0)
    k_x, k_w1, k_w2 = jax.random.split(key, 3)

    N, H, W = 2, 16, 16
    x = jax.random.normal(k_x, (N, C, H, W), dtype=jnp.float32)

    # Deterministic parameter init (shapes as in the module's __init__).
    fan_in = C * 3 * 3
    std = (2.0 / fan_in) ** 0.5
    w1 = jax.random.normal(k_w1, (C, C, 3, 3), dtype=jnp.float32) * std
    w2 = jax.random.normal(k_w2, (C, C, 3, 3), dtype=jnp.float32) * std
    # BatchNorm2d defaults: weight=1, bias=0, running_mean=0, running_var=1.
    g1 = jnp.ones((C,), jnp.float32); b1 = jnp.zeros((C,), jnp.float32)
    m1 = jnp.zeros((C,), jnp.float32); v1 = jnp.ones((C,), jnp.float32)
    g2 = jnp.ones((C,), jnp.float32); b2 = jnp.zeros((C,), jnp.float32)
    m2 = jnp.zeros((C,), jnp.float32); v2 = jnp.ones((C,), jnp.float32)

    out = residual_block(x, w1, g1, b1, m1, v1, w2, g2, b2, m2, v2)
    out = jax.block_until_ready(out)

    ref = residual_block_ref(x, w1, g1, b1, m1, v1, w2, g2, b2, m2, v2)
    assert out.shape == (N, C, H, W)
    # bf16 matmul operands (f32 accumulation) -> loosened tolerance.
    err = jnp.max(jnp.abs(out - ref))
    assert jnp.allclose(out, ref, rtol=5e-2, atol=5e-2), f"max abs err = {err}"

    print("KERNEL_OK")
</pallas_src>

<mosaic_0001>
module attributes {stable_mosaic.version = 11 : i64} {
  func.func @_resblock_kernel(%arg0: i32, %arg1: memref<1x64x256xf32, #tpu.memory_space<vmem>>, %arg2: memref<3x64x192xbf16, #tpu.memory_space<vmem>>, %arg3: memref<64x1xf32, #tpu.memory_space<vmem>>, %arg4: memref<64x1xf32, #tpu.memory_space<vmem>>, %arg5: memref<3x64x192xbf16, #tpu.memory_space<vmem>>, %arg6: memref<64x1xf32, #tpu.memory_space<vmem>>, %arg7: memref<64x1xf32, #tpu.memory_space<vmem>>, %arg8: memref<1x64x256xf32, #tpu.memory_space<vmem>>, %arg9: memref<64x512xbf16, #tpu.memory_space<vmem>>, %arg10: memref<64x512xbf16, #tpu.memory_space<vmem>>) attributes {dimension_semantics = [#tpu.dimension_semantics<parallel>], iteration_bounds = array<i64: 2>, scalar_prefetch = 0 : i64, scratch_operands = 2 : i64, tpu.core_type = #tpu.core_type<tc>, window_params = [{transform_indices = @transform_0, window_bounds = array<i64: 1, 64, 256>}, {pipeline_mode = #tpu.pipeline_mode<synchronous>, transform_indices = @transform_1, window_bounds = array<i64: 3, 64, 192>}, {pipeline_mode = #tpu.pipeline_mode<synchronous>, transform_indices = @transform_2, window_bounds = array<i64: 64, 1>}, {pipeline_mode = #tpu.pipeline_mode<synchronous>, transform_indices = @transform_3, window_bounds = array<i64: 64, 1>}, {pipeline_mode = #tpu.pipeline_mode<synchronous>, transform_indices = @transform_4, window_bounds = array<i64: 3, 64, 192>}, {pipeline_mode = #tpu.pipeline_mode<synchronous>, transform_indices = @transform_5, window_bounds = array<i64: 64, 1>}, {pipeline_mode = #tpu.pipeline_mode<synchronous>, transform_indices = @transform_6, window_bounds = array<i64: 64, 1>}, {transform_indices = @transform_7, window_bounds = array<i64: 1, 64, 256>}]} {
    %0 = tpu.iota {dimensions = array<i32: 1>} : vector<1x256xi32>
    %c16_i32 = arith.constant 16 : i32
    %c0_i32 = arith.constant 0 : i32
    %1 = arith.cmpi eq, %c16_i32, %c0_i32 : i32
    %c1_i32 = arith.constant 1 : i32
    %2 = arith.select %1, %c1_i32, %c16_i32 : i32
    %3 = vector.broadcast %2 : i32 to vector<1x256xi32>
    %4 = arith.remsi %0, %3 : vector<1x256xi32>
    %c0_i32_0 = arith.constant 0 : i32
    %5 = vector.broadcast %c0_i32_0 : i32 to vector<1x256xi32>
    %6 = arith.cmpi ne, %4, %5 : vector<1x256xi32>
    %c0_i32_1 = arith.constant 0 : i32
    %7 = vector.broadcast %c0_i32_1 : i32 to vector<1x256xi32>
    %8 = arith.cmpi slt, %4, %7 : vector<1x256xi32>
    %c0_i32_2 = arith.constant 0 : i32
    %9 = arith.cmpi slt, %2, %c0_i32_2 : i32
    %10 = vector.broadcast %9 : i1 to vector<1x256xi1>
    %11 = vector.broadcast %10 : vector<1x256xi1> to vector<1x256xi1>
    %12 = arith.xori %8, %11 : vector<1x256xi1>
    %13 = arith.andi %12, %6 : vector<1x256xi1>
    %14 = vector.broadcast %2 : i32 to vector<1x256xi32>
    %15 = arith.addi %4, %14 : vector<1x256xi32>
    %16 = arith.select %13, %15, %4 : vector<1x256xi1>, vector<1x256xi32>
    %c0_i32_3 = arith.constant 0 : i32
    %17 = vector.broadcast %c0_i32_3 : i32 to vector<1x256xi32>
    %18 = arith.cmpi ne, %16, %17 : vector<1x256xi32>
    %c15_i32 = arith.constant 15 : i32
    %19 = vector.broadcast %c15_i32 : i32 to vector<1x256xi32>
    %20 = arith.cmpi ne, %16, %19 : vector<1x256xi32>
    %cst = arith.constant 0.000000e+00 : bf16
    %21 = vector.broadcast %cst : bf16 to vector<64x128xbf16>
    %cst_4 = arith.constant 0.000000e+00 : bf16
    %22 = vector.broadcast %cst_4 : bf16 to vector<64x128xbf16>
    %c0 = arith.constant 0 : index
    %c0_5 = arith.constant 0 : index
    %23 = vector.load %arg9[%c0, %c0_5] : memref<64x512xbf16, #tpu.memory_space<vmem>>, vector<64x128xbf16>
    tpu.vector_store %arg9[%c0, %c0_5], %21 {strides = array<i32>} : memref<64x512xbf16, #tpu.memory_space<vmem>>, vector<64x128xbf16>,
    %c0_6 = arith.constant 0 : index
    %c384 = arith.constant 384 : index
    %24 = vector.load %arg9[%c0_6, %c384] : memref<64x512xbf16, #tpu.memory_space<vmem>>, vector<64x128xbf16>
    tpu.vector_store %arg9[%c0_6, %c384], %22 {strides = array<i32>} : memref<64x512xbf16, #tpu.memory_space<vmem>>, vector<64x128xbf16>,
    %c0_7 = arith.constant 0 : index
    %c0_8 = arith.constant 0 : index
    %25 = vector.load %arg10[%c0_7, %c0_8] : memref<64x512xbf16, #tpu.memory_space<vmem>>, vector<64x128xbf16>
    tpu.vector_store %arg10[%c0_7, %c0_8], %21 {strides = array<i32>} : memref<64x512xbf16, #tpu.memory_space<vmem>>, vector<64x128xbf16>,
    %c0_9 = arith.constant 0 : index
    %c384_10 = arith.constant 384 : index
    %26 = vector.load %arg10[%c0_9, %c384_10] : memref<64x512xbf16, #tpu.memory_space<vmem>>, vector<64x128xbf16>
    tpu.vector_store %arg10[%c0_9, %c384_10], %22 {strides = array<i32>} : memref<64x512xbf16, #tpu.memory_space<vmem>>, vector<64x128xbf16>,
    %c0_11 = arith.constant 0 : index
    %c0_12 = arith.constant 0 : index
    %c0_13 = arith.constant 0 : index
    %27 = vector.load %arg1[%c0_11, %c0_12, %c0_13] : memref<1x64x256xf32, #tpu.memory_space<vmem>>, vector<1x64x256xf32>
    %28 = vector.shape_cast %27 : vector<1x64x256xf32> to vector<64x256xf32>
    %29 = arith.truncf %28 : vector<64x256xf32> to vector<64x256xbf16>
    %c0_14 = arith.constant 0 : index
    %c128 = arith.constant 128 : index
    %30 = vector.load %arg9[%c0_14, %c128] : memref<64x512xbf16, #tpu.memory_space<vmem>>, vector<64x256xbf16>
    tpu.vector_store %arg9[%c0_14, %c128], %29 {strides = array<i32>} : memref<64x512xbf16, #tpu.memory_space<vmem>>, vector<64x256xbf16>,
    %cst_15 = arith.constant 0.000000e+00 : f32
    %31 = vector.broadcast %cst_15 : f32 to vector<64x256xf32>
    %c0_16 = arith.constant 0 : index
    %c111 = arith.constant 111 : index
    %32 = vector.load %arg9[%c0_16, %c111] : memref<64x512xbf16, #tpu.memory_space<vmem>>, vector<64x256xbf16>
    %c0_17 = arith.constant 0 : index
    %c112 = arith.constant 112 : index
    %33 = vector.load %arg9[%c0_17, %c112] : memref<64x512xbf16, #tpu.memory_space<vmem>>, vector<64x256xbf16>
    %c0_18 = arith.constant 0 : index
    %c113 = arith.constant 113 : index
    %34 = vector.load %arg9[%c0_18, %c113] : memref<64x512xbf16, #tpu.memory_space<vmem>>, vector<64x256xbf16>
    %cst_19 = arith.constant 0.000000e+00 : bf16
    %35 = vector.broadcast %cst_19 : bf16 to vector<64x256xbf16>
    %36 = vector.shape_cast %18 : vector<1x256xi1> to vector<1x256xi1>
    %37 = vector.broadcast %36 : vector<1x256xi1> to vector<64x256xi1>
    %38 = arith.select %37, %32, %35 : vector<64x256xi1>, vector<64x256xbf16>
    %cst_20 = arith.constant 0.000000e+00 : bf16
    %39 = vector.broadcast %cst_20 : bf16 to vector<64x256xbf16>
    %40 = vector.shape_cast %20 : vector<1x256xi1> to vector<1x256xi1>
    %41 = vector.broadcast %40 : vector<1x256xi1> to vector<64x256xi1>
    %42 = arith.select %41, %34, %39 : vector<64x256xi1>, vector<64x256xbf16>
    %43 = tpu.concatenate %38, %33, %42 in 0 : vector<64x256xbf16>, vector<64x256xbf16>, vector<64x256xbf16> -> vector<192x256xbf16>
    %c0_21 = arith.constant 0 : index
    %c0_22 = arith.constant 0 : index
    %c0_23 = arith.constant 0 : index
    %44 = vector.load %arg2[%c0_21, %c0_22, %c0_23] : memref<3x64x192xbf16, #tpu.memory_space<vmem>>, vector<1x64x192xbf16>
    %45 = vector.shape_cast %44 : vector<1x64x192xbf16> to vector<64x192xbf16>
    %cst_24 = arith.constant dense<0.000000e+00> : vector<64x256xf32>
    %46 = tpu.matmul %45, %43, %cst_24 {dimension_numbers = #tpu.dot_dimension_numbers<[1], [0], [0], [1], [0, 0, 1, 1], [], []>} : vector<64x192xbf16>, vector<192x256xbf16>, vector<64x256xf32> -> vector<64x256xf32>
    %47 = arith.addf %31, %46 : vector<64x256xf32>
    %c0_25 = arith.constant 0 : index
    %c127 = arith.constant 127 : index
    %48 = vector.load %arg9[%c0_25, %c127] : memref<64x512xbf16, #tpu.memory_space<vmem>>, vector<64x256xbf16>
    %c0_26 = arith.constant 0 : index
    %c128_27 = arith.constant 128 : index
    %49 = vector.load %arg9[%c0_26, %c128_27] : memref<64x512xbf16, #tpu.memory_space<vmem>>, vector<64x256xbf16>
    %c0_28 = arith.constant 0 : index
    %c129 = arith.constant 129 : index
    %50 = vector.load %arg9[%c0_28, %c129] : memref<64x512xbf16, #tpu.memory_space<vmem>>, vector<64x256xbf16>
    %cst_29 = arith.constant 0.000000e+00 : bf16
    %51 = vector.broadcast %cst_29 : bf16 to vector<64x256xbf16>
    %52 = vector.shape_cast %18 : vector<1x256xi1> to vector<1x256xi1>
    %53 = vector.broadcast %52 : vector<1x256xi1> to vector<64x256xi1>
    %54 = arith.select %53, %48, %51 : vector<64x256xi1>, vector<64x256xbf16>
    %cst_30 = arith.constant 0.000000e+00 : bf16
    %55 = vector.broadcast %cst_30 : bf16 to vector<64x256xbf16>
    %56 = vector.shape_cast %20 : vector<1x256xi1> to vector<1x256xi1>
    %57 = vector.broadcast %56 : vector<1x256xi1> to vector<64x256xi1>
    %58 = arith.select %57, %50, %55 : vector<64x256xi1>, vector<64x256xbf16>
    %59 = tpu.concatenate %54, %49, %58 in 0 : vector<64x256xbf16>, vector<64x256xbf16>, vector<64x256xbf16> -> vector<192x256xbf16>
    %c1 = arith.constant 1 : index
    %c0_31 = arith.constant 0 : index
    %c0_32 = arith.constant 0 : index
    %60 = vector.load %arg2[%c1, %c0_31, %c0_32] : memref<3x64x192xbf16, #tpu.memory_space<vmem>>, vector<1x64x192xbf16>
    %61 = vector.shape_cast %60 : vector<1x64x192xbf16> to vector<64x192xbf16>
    %cst_33 = arith.constant dense<0.000000e+00> : vector<64x256xf32>
    %62 = tpu.matmul %61, %59, %cst_33 {dimension_numbers = #tpu.dot_dimension_numbers<[1], [0], [0], [1], [0, 0, 1, 1], [], []>} : vector<64x192xbf16>, vector<192x256xbf16>, vector<64x256xf32> -> vector<64x256xf32>
    %63 = arith.addf %47, %62 : vector<64x256xf32>
    %c0_34 = arith.constant 0 : index
    %c143 = arith.constant 143 : index
    %64 = vector.load %arg9[%c0_34, %c143] : memref<64x512xbf16, #tpu.memory_space<vmem>>, vector<64x256xbf16>
    %c0_35 = arith.constant 0 : index
    %c144 = arith.constant 144 : index
    %65 = vector.load %arg9[%c0_35, %c144] : memref<64x512xbf16, #tpu.memory_space<vmem>>, vector<64x256xbf16>
    %c0_36 = arith.constant 0 : index
    %c145 = arith.constant 145 : index
    %66 = vector.load %arg9[%c0_36, %c145] : memref<64x512xbf16, #tpu.memory_space<vmem>>, vector<64x256xbf16>
    %cst_37 = arith.constant 0.000000e+00 : bf16
    %67 = vector.broadcast %cst_37 : bf16 to vector<64x256xbf16>
    %68 = vector.shape_cast %18 : vector<1x256xi1> to vector<1x256xi1>
    %69 = vector.broadcast %68 : vector<1x256xi1> to vector<64x256xi1>
    %70 = arith.select %69, %64, %67 : vector<64x256xi1>, vector<64x256xbf16>
    %cst_38 = arith.constant 0.000000e+00 : bf16
    %71 = vector.broadcast %cst_38 : bf16 to vector<64x256xbf16>
    %72 = vector.shape_cast %20 : vector<1x256xi1> to vector<1x256xi1>
    %73 = vector.broadcast %72 : vector<1x256xi1> to vector<64x256xi1>
    %74 = arith.select %73, %66, %71 : vector<64x256xi1>, vector<64x256xbf16>
    %75 = tpu.concatenate %70, %65, %74 in 0 : vector<64x256xbf16>, vector<64x256xbf16>, vector<64x256xbf16> -> vector<192x256xbf16>
    %c2 = arith.constant 2 : index
    %c0_39 = arith.constant 0 : index
    %c0_40 = arith.constant 0 : index
    %76 = vector.load %arg2[%c2, %c0_39, %c0_40] : memref<3x64x192xbf16, #tpu.memory_space<vmem>>, vector<1x64x192xbf16>
    %77 = vector.shape_cast %76 : vector<1x64x192xbf16> to vector<64x192xbf16>
    %cst_41 = arith.constant dense<0.000000e+00> : vector<64x256xf32>
    %78 = tpu.matmul %77, %75, %cst_41 {dimension_numbers = #tpu.dot_dimension_numbers<[1], [0], [0], [1], [0, 0, 1, 1], [], []>} : vector<64x192xbf16>, vector<192x256xbf16>, vector<64x256xf32> -> vector<64x256xf32>
    %79 = arith.addf %63, %78 : vector<64x256xf32>
    %c0_42 = arith.constant 0 : index
    %c0_43 = arith.constant 0 : index
    %80 = vector.load %arg3[%c0_42, %c0_43] : memref<64x1xf32, #tpu.memory_space<vmem>>, vector<64x1xf32>
    %81 = vector.broadcast %80 : vector<64x1xf32> to vector<64x256xf32>
    %82 = arith.mulf %79, %81 : vector<64x256xf32>
    %c0_44 = arith.constant 0 : index
    %c0_45 = arith.constant 0 : index
    %83 = vector.load %arg4[%c0_44, %c0_45] : memref<64x1xf32, #tpu.memory_space<vmem>>, vector<64x1xf32>
    %84 = vector.broadcast %83 : vector<64x1xf32> to vector<64x256xf32>
    %85 = arith.addf %82, %84 : vector<64x256xf32>
    %cst_46 = arith.constant 0.000000e+00 : f32
    %86 = vector.broadcast %cst_46 : f32 to vector<64x256xf32>
    %87 = arith.cmpf oge, %85, %86 : vector<64x256xf32>
    %cst_47 = arith.constant 2.000000e-01 : f32
    %88 = vector.broadcast %cst_47 : f32 to vector<64x256xf32>
    %89 = arith.mulf %88, %85 : vector<64x256xf32>
    %90 = arith.select %87, %85, %89 : vector<64x256xi1>, vector<64x256xf32>
    %91 = arith.truncf %90 : vector<64x256xf32> to vector<64x256xbf16>
    %c0_48 = arith.constant 0 : index
    %c128_49 = arith.constant 128 : index
    %92 = vector.load %arg10[%c0_48, %c128_49] : memref<64x512xbf16, #tpu.memory_space<vmem>>, vector<64x256xbf16>
    tpu.vector_store %arg10[%c0_48, %c128_49], %91 {strides = array<i32>} : memref<64x512xbf16, #tpu.memory_space<vmem>>, vector<64x256xbf16>,
    %cst_50 = arith.constant 0.000000e+00 : f32
    %93 = vector.broadcast %cst_50 : f32 to vector<64x256xf32>
    %c0_51 = arith.constant 0 : index
    %c111_52 = arith.constant 111 : index
    %94 = vector.load %arg10[%c0_51, %c111_52] : memref<64x512xbf16, #tpu.memory_space<vmem>>, vector<64x256xbf16>
    %c0_53 = arith.constant 0 : index
    %c112_54 = arith.constant 112 : index
    %95 = vector.load %arg10[%c0_53, %c112_54] : memref<64x512xbf16, #tpu.memory_space<vmem>>, vector<64x256xbf16>
    %c0_55 = arith.constant 0 : index
    %c113_56 = arith.constant 113 : index
    %96 = vector.load %arg10[%c0_55, %c113_56] : memref<64x512xbf16, #tpu.memory_space<vmem>>, vector<64x256xbf16>
    %cst_57 = arith.constant 0.000000e+00 : bf16
    %97 = vector.broadcast %cst_57 : bf16 to vector<64x256xbf16>
    %98 = vector.shape_cast %18 : vector<1x256xi1> to vector<1x256xi1>
    %99 = vector.broadcast %98 : vector<1x256xi1> to vector<64x256xi1>
    %100 = arith.select %99, %94, %97 : vector<64x256xi1>, vector<64x256xbf16>
    %cst_58 = arith.constant 0.000000e+00 : bf16
    %101 = vector.broadcast %cst_58 : bf16 to vector<64x256xbf16>
    %102 = vector.shape_cast %20 : vector<1x256xi1> to vector<1x256xi1>
    %103 = vector.broadcast %102 : vector<1x256xi1> to vector<64x256xi1>
    %104 = arith.select %103, %96, %101 : vector<64x256xi1>, vector<64x256xbf16>
    %105 = tpu.concatenate %100, %95, %104 in 0 : vector<64x256xbf16>, vector<64x256xbf16>, vector<64x256xbf16> -> vector<192x256xbf16>
    %c0_59 = arith.constant 0 : index
    %c0_60 = arith.constant 0 : index
    %c0_61 = arith.constant 0 : index
    %106 = vector.load %arg5[%c0_59, %c0_60, %c0_61] : memref<3x64x192xbf16, #tpu.memory_space<vmem>>, vector<1x64x192xbf16>
    %107 = vector.shape_cast %106 : vector<1x64x192xbf16> to vector<64x192xbf16>
    %cst_62 = arith.constant dense<0.000000e+00> : vector<64x256xf32>
    %108 = tpu.matmul %107, %105, %cst_62 {dimension_numbers = #tpu.dot_dimension_numbers<[1], [0], [0], [1], [0, 0, 1, 1], [], []>} : vector<64x192xbf16>, vector<192x256xbf16>, vector<64x256xf32> -> vector<64x256xf32>
    %109 = arith.addf %93, %108 : vector<64x256xf32>
    %c0_63 = arith.constant 0 : index
    %c127_64 = arith.constant 127 : index
    %110 = vector.load %arg10[%c0_63, %c127_64] : memref<64x512xbf16, #tpu.memory_space<vmem>>, vector<64x256xbf16>
    %c0_65 = arith.constant 0 : index
    %c128_66 = arith.constant 128 : index
    %111 = vector.load %arg10[%c0_65, %c128_66] : memref<64x512xbf16, #tpu.memory_space<vmem>>, vector<64x256xbf16>
    %c0_67 = arith.constant 0 : index
    %c129_68 = arith.constant 129 : index
    %112 = vector.load %arg10[%c0_67, %c129_68] : memref<64x512xbf16, #tpu.memory_space<vmem>>, vector<64x256xbf16>
    %cst_69 = arith.constant 0.000000e+00 : bf16
    %113 = vector.broadcast %cst_69 : bf16 to vector<64x256xbf16>
    %114 = vector.shape_cast %18 : vector<1x256xi1> to vector<1x256xi1>
    %115 = vector.broadcast %114 : vector<1x256xi1> to vector<64x256xi1>
    %116 = arith.select %115, %110, %113 : vector<64x256xi1>, vector<64x256xbf16>
    %cst_70 = arith.constant 0.000000e+00 : bf16
    %117 = vector.broadcast %cst_70 : bf16 to vector<64x256xbf16>
    %118 = vector.shape_cast %20 : vector<1x256xi1> to vector<1x256xi1>
    %119 = vector.broadcast %118 : vector<1x256xi1> to vector<64x256xi1>
    %120 = arith.select %119, %112, %117 : vector<64x256xi1>, vector<64x256xbf16>
    %121 = tpu.concatenate %116, %111, %120 in 0 : vector<64x256xbf16>, vector<64x256xbf16>, vector<64x256xbf16> -> vector<192x256xbf16>
    %c1_71 = arith.constant 1 : index
    %c0_72 = arith.constant 0 : index
    %c0_73 = arith.constant 0 : index
    %122 = vector.load %arg5[%c1_71, %c0_72, %c0_73] : memref<3x64x192xbf16, #tpu.memory_space<vmem>>, vector<1x64x192xbf16>
    %123 = vector.shape_cast %122 : vector<1x64x192xbf16> to vector<64x192xbf16>
    %cst_74 = arith.constant dense<0.000000e+00> : vector<64x256xf32>
    %124 = tpu.matmul %123, %121, %cst_74 {dimension_numbers = #tpu.dot_dimension_numbers<[1], [0], [0], [1], [0, 0, 1, 1], [], []>} : vector<64x192xbf16>, vector<192x256xbf16>, vector<64x256xf32> -> vector<64x256xf32>
    %125 = arith.addf %109, %124 : vector<64x256xf32>
    %c0_75 = arith.constant 0 : index
    %c143_76 = arith.constant 143 : index
    %126 = vector.load %arg10[%c0_75, %c143_76] : memref<64x512xbf16, #tpu.memory_space<vmem>>, vector<64x256xbf16>
    %c0_77 = arith.constant 0 : index
    %c144_78 = arith.constant 144 : index
    %127 = vector.load %arg10[%c0_77, %c144_78] : memref<64x512xbf16, #tpu.memory_space<vmem>>, vector<64x256xbf16>
    %c0_79 = arith.constant 0 : index
    %c145_80 = arith.constant 145 : index
    %128 = vector.load %arg10[%c0_79, %c145_80] : memref<64x512xbf16, #tpu.memory_space<vmem>>, vector<64x256xbf16>
    %cst_81 = arith.constant 0.000000e+00 : bf16
    %129 = vector.broadcast %cst_81 : bf16 to vector<64x256xbf16>
    %130 = vector.shape_cast %18 : vector<1x256xi1> to vector<1x256xi1>
    %131 = vector.broadcast %130 : vector<1x256xi1> to vector<64x256xi1>
    %132 = arith.select %131, %126, %129 : vector<64x256xi1>, vector<64x256xbf16>
    %cst_82 = arith.constant 0.000000e+00 : bf16
    %133 = vector.broadcast %cst_82 : bf16 to vector<64x256xbf16>
    %134 = vector.shape_cast %20 : vector<1x256xi1> to vector<1x256xi1>
    %135 = vector.broadcast %134 : vector<1x256xi1> to vector<64x256xi1>
    %136 = arith.select %135, %128, %133 : vector<64x256xi1>, vector<64x256xbf16>
    %137 = tpu.concatenate %132, %127, %136 in 0 : vector<64x256xbf16>, vector<64x256xbf16>, vector<64x256xbf16> -> vector<192x256xbf16>
    %c2_83 = arith.constant 2 : index
    %c0_84 = arith.constant 0 : index
    %c0_85 = arith.constant 0 : index
    %138 = vector.load %arg5[%c2_83, %c0_84, %c0_85] : memref<3x64x192xbf16, #tpu.memory_space<vmem>>, vector<1x64x192xbf16>
    %139 = vector.shape_cast %138 : vector<1x64x192xbf16> to vector<64x192xbf16>
    %cst_86 = arith.constant dense<0.000000e+00> : vector<64x256xf32>
    %140 = tpu.matmul %139, %137, %cst_86 {dimension_numbers = #tpu.dot_dimension_numbers<[1], [0], [0], [1], [0, 0, 1, 1], [], []>} : vector<64x192xbf16>, vector<192x256xbf16>, vector<64x256xf32> -> vector<64x256xf32>
    %141 = arith.addf %125, %140 : vector<64x256xf32>
    %c0_87 = arith.constant 0 : index
    %c0_88 = arith.constant 0 : index
    %142 = vector.load %arg6[%c0_87, %c0_88] : memref<64x1xf32, #tpu.memory_space<vmem>>, vector<64x1xf32>
    %143 = vector.broadcast %142 : vector<64x1xf32> to vector<64x256xf32>
    %144 = arith.mulf %141, %143 : vector<64x256xf32>
    %c0_89 = arith.constant 0 : index
    %c0_90 = arith.constant 0 : index
    %145 = vector.load %arg7[%c0_89, %c0_90] : memref<64x1xf32, #tpu.memory_space<vmem>>, vector<64x1xf32>
    %146 = vector.broadcast %145 : vector<64x1xf32> to vector<64x256xf32>
    %147 = arith.addf %144, %146 : vector<64x256xf32>
    %148 = arith.addf %147, %28 : vector<64x256xf32>
    %c0_91 = arith.constant 0 : index
    %c0_92 = arith.constant 0 : index
    %c0_93 = arith.constant 0 : index
    %149 = vector.load %arg8[%c0_91, %c0_92, %c0_93] : memref<1x64x256xf32, #tpu.memory_space<vmem>>, vector<1x64x256xf32>
    %150 = vector.shape_cast %149 : vector<1x64x256xf32> to vector<64x256xf32>
    %151 = vector.shape_cast %148 : vector<64x256xf32> to vector<1x64x256xf32>
    tpu.vector_store %arg8[%c0_91, %c0_92, %c0_93], %151 {strides = array<i32>} : memref<1x64x256xf32, #tpu.memory_space<vmem>>, vector<1x64x256xf32>,
    return
  }
  func.func @transform_0(%arg0: i32) -> (i32, i32, i32) {
    %c0_i32 = arith.constant 0 : i32
    %c0_i32_0 = arith.constant 0 : i32
    %c0_i32_1 = arith.constant 0 : i32
    return %arg0, %c0_i32, %c0_i32_0 : i32, i32, i32
  }
  func.func @transform_1(%arg0: i32) -> (i32, i32, i32) {
    %c0_i32 = arith.constant 0 : i32
    %c0_i32_0 = arith.constant 0 : i32
    %c0_i32_1 = arith.constant 0 : i32
    %c0_i32_2 = arith.constant 0 : i32
    return %c0_i32, %c0_i32_0, %c0_i32_1 : i32, i32, i32
  }
  func.func @transform_2(%arg0: i32) -> (i32, i32) {
    %c0_i32 = arith.constant 0 : i32
    %c0_i32_0 = arith.constant 0 : i32
    %c0_i32_1 = arith.constant 0 : i32
    return %c0_i32, %c0_i32_0 : i32, i32
  }
  func.func @transform_3(%arg0: i32) -> (i32, i32) {
    %c0_i32 = arith.constant 0 : i32
    %c0_i32_0 = arith.constant 0 : i32
    %c0_i32_1 = arith.constant 0 : i32
    return %c0_i32, %c0_i32_0 : i32, i32
  }
  func.func @transform_4(%arg0: i32) -> (i32, i32, i32) {
    %c0_i32 = arith.constant 0 : i32
    %c0_i32_0 = arith.constant 0 : i32
    %c0_i32_1 = arith.constant 0 : i32
    %c0_i32_2 = arith.constant 0 : i32
    return %c0_i32, %c0_i32_0, %c0_i32_1 : i32, i32, i32
  }
  func.func @transform_5(%arg0: i32) -> (i32, i32) {
    %c0_i32 = arith.constant 0 : i32
    %c0_i32_0 = arith.constant 0 : i32
    %c0_i32_1 = arith.constant 0 : i32
    return %c0_i32, %c0_i32_0 : i32, i32
  }
  func.func @transform_6(%arg0: i32) -> (i32, i32) {
    %c0_i32 = arith.constant 0 : i32
    %c0_i32_0 = arith.constant 0 : i32
    %c0_i32_1 = arith.constant 0 : i32
    return %c0_i32, %c0_i32_0 : i32, i32
  }
  func.func @transform_7(%arg0: i32) -> (i32, i32, i32) {
    %c0_i32 = arith.constant 0 : i32
    %c0_i32_0 = arith.constant 0 : i32
    %c0_i32_1 = arith.constant 0 : i32
    return %arg0, %c0_i32, %c0_i32_0 : i32, i32, i32
  }
}

</mosaic_0001>

<llo_original>
// kernel: residual_block.1
$region0: #{residual_block.1}
  #allocation0 [shape = 'u32[]', space=smem, size = 0x4, offset = 0x4, fixed_abs, tag = 'smem constant byte address 0x4 - core index']
  #allocation1 [shape = 'u32[144,128]{1,0:T(1,128)}', space=vmem, size = 0x12000, scoped, tag = 'internal scratch']
  #allocation2 [shape = 'bf16[64,512]{1,0:T(8,128)(2,1)}', space=vmem, size = 0x10000, scoped, tag = 'scratch operand']
  #allocation3 [shape = 'bf16[64,512]{1,0:T(8,128)(2,1)}', space=vmem, size = 0x10000, scoped, tag = 'scratch operand']
  %s0 = inlined_call_operand.vmem [shape: f32[2,64,256], index: 0, kind: input, shape index: {}]
  %s1 = inlined_call_operand.vmem [shape: bf16[3,64,192], index: 1, kind: input, shape index: {}]
  %s2 = inlined_call_operand.vmem [shape: f32[64,1], index: 2, kind: input, shape index: {}]
  %s3 = inlined_call_operand.vmem [shape: f32[64,1], index: 3, kind: input, shape index: {}]
  %s4 = inlined_call_operand.vmem [shape: bf16[3,64,192], index: 4, kind: input, shape index: {}]
  %s5 = inlined_call_operand.vmem [shape: f32[64,1], index: 5, kind: input, shape index: {}]
  %s6 = inlined_call_operand.vmem [shape: f32[64,1], index: 6, kind: input, shape index: {}]
  %s7 = inlined_call_operand.vmem [shape: f32[2,64,256], index: 7, kind: output, shape index: {}]
  %s8 = sld [smem:[#allocation0]]
  $region61: #{residual_block.1} parent=0
    _
  %s10 = ssub.s32 1, %s8
  %s11 = scalar_select 0, %s10, %s8
  loop: start=0, step=1, limit=4
  $region2: #{residual_block.1} parent=0 // loop_pre_header
    _
  $region3: #{residual_block.1} parent=0 // loop_header
    %s13 = sphi 0, %s17
    %p14 = scmp.ge.s32.totalorder %s13, 4
    %s23 = sphi 0, %s25
    %s26 = sphi 0, %s23
    %s27 = sphi 0, %s26
    %s43 = sphi 0, %s27
    %s47 = sphi 0, %s47
    %s49 = sphi 0, %s47
    %s50 = sphi 0, %s49
    %s64 = sphi 0, %s50
    %s68 = sphi 0, %s68
    %s70 = sphi 0, %s68
    %s71 = sphi 0, %s70
    %s85 = sphi 0, %s71
    %s89 = sphi 0, %s89
    %s91 = sphi 0, %s89
    %s92 = sphi 0, %s91
    %s106 = sphi 0, %s92
    %s110 = sphi 0, %s110
    %s112 = sphi 0, %s110
    %s113 = sphi 0, %s112
    %s127 = sphi 0, %s113
    %s131 = sphi 0, %s131
    %s133 = sphi 0, %s131
    %s134 = sphi 0, %s133
    %s148 = sphi 0, %s134
    %s152 = sphi 0, %s152
    %s154 = sphi 0, %s152
    %s155 = sphi 0, %s154
    %s169 = sphi 0, %s155
    %s175 = sphi 0, %s177
    %s178 = sphi 0, %s175
    %s179 = sphi 0, %s178
    %s195 = sphi 0, %s179
  $region4: #{residual_block.1} parent=0 // loop_header_branch
    %16 = sbr.rel (%p14) target = $region8
  $region5: #{residual_block.1} parent=0 // loop_body
    %s18 = ssub.s32 %s13, 1
    %s19 = ssub.s32 %s13, 2
    %s20 = sadd.s32 %s13, 1
    %s21 = ssub.s32 %s13, %s20
    %p22 = scmp.eq.s32.totalorder %s21, 0
    %s24 = sadd.s32 %s23, 1
    %s25 = scalar_select %p22, %s23, %s24
    %p28 = pneg %p22
    %p29 = scmp.eq.s32.totalorder %s13, 1
    %p30 = por %p28, %p29
    %p31 = scmp.ne.s32.totalorder %s23, %s26
    %p32 = scmp.eq.s32.totalorder %s13, 0
    %p33 = por %p31, %p32
    %p34 = scmp.ne.s32.totalorder %s23, %s26
    %p35 = scmp.eq.s32.totalorder %s18, 1
    %p36 = por %p34, %p35
    %p37 = scmp.ne.s32.totalorder %s26, %s27
    %p38 = scmp.eq.s32.totalorder %s18, 0
    %p39 = por %p37, %p38
    %p40 = scmp.ne.s32.totalorder %s26, %s27
    %p41 = scmp.eq.s32.totalorder %s19, 1
    %p42 = por %p40, %p41
    %p44 = scmp.ne.s32.totalorder %s27, %s43
    %p45 = scmp.eq.s32.totalorder %s19, 0
    %p46 = por %p44, %p45
    %s48 = sadd.s32 %s47, 1
    %p51 = scmp.eq.s32.totalorder %s13, 1
    %p52 = scmp.ne.s32.totalorder %s47, %s49
    %p53 = scmp.eq.s32.totalorder %s13, 0
    %p54 = por %p52, %p53
    %p55 = scmp.ne.s32.totalorder %s47, %s49
    %p56 = scmp.eq.s32.totalorder %s18, 1
    %p57 = por %p55, %p56
    %p58 = scmp.ne.s32.totalorder %s49, %s50
    %p59 = scmp.eq.s32.totalorder %s18, 0
    %p60 = por %p58, %p59
    %p61 = scmp.ne.s32.totalorder %s49, %s50
    %p62 = scmp.eq.s32.totalorder %s19, 1
    %p63 = por %p61, %p62
    %p65 = scmp.ne.s32.totalorder %s50, %s64
    %p66 = scmp.eq.s32.totalorder %s19, 0
    %p67 = por %p65, %p66
    %s69 = sadd.s32 %s68, 1
    %p72 = scmp.eq.s32.totalorder %s13, 1
    %p73 = scmp.ne.s32.totalorder %s68, %s70
    %p74 = scmp.eq.s32.totalorder %s13, 0
    %p75 = por %p73, %p74
    %p76 = scmp.ne.s32.totalorder %s68, %s70
    %p77 = scmp.eq.s32.totalorder %s18, 1
    %p78 = por %p76, %p77
    %p79 = scmp.ne.s32.totalorder %s70, %s71
    %p80 = scmp.eq.s32.totalorder %s18, 0
    %p81 = por %p79, %p80
    %p82 = scmp.ne.s32.totalorder %s70, %s71
    %p83 = scmp.eq.s32.totalorder %s19, 1
    %p84 = por %p82, %p83
    %p86 = scmp.ne.s32.totalorder %s71, %s85
    %p87 = scmp.eq.s32.totalorder %s19, 0
    %p88 = por %p86, %p87
    %s90 = sadd.s32 %s89, 1
    %p93 = scmp.eq.s32.totalorder %s13, 1
    %p94 = scmp.ne.s32.totalorder %s89, %s91
    %p95 = scmp.eq.s32.totalorder %s13, 0
    %p96 = por %p94, %p95
    %p97 = scmp.ne.s32.totalorder %s89, %s91
    %p98 = scmp.eq.s32.totalorder %s18, 1
    %p99 = por %p97, %p98
    %p100 = scmp.ne.s32.totalorder %s91, %s92
    %p101 = scmp.eq.s32.totalorder %s18, 0
    %p102 = por %p100, %p101
    %p103 = scmp.ne.s32.totalorder %s91, %s92
    %p104 = scmp.eq.s32.totalorder %s19, 1
    %p105 = por %p103, %p104
    %p107 = scmp.ne.s32.totalorder %s92, %s106
    %p108 = scmp.eq.s32.totalorder %s19, 0
    %p109 = por %p107, %p108
    %s111 = sadd.s32 %s110, 1
    %p114 = scmp.eq.s32.totalorder %s13, 1
    %p115 = scmp.ne.s32.totalorder %s110, %s112
    %p116 = scmp.eq.s32.totalorder %s13, 0
    %p117 = por %p115, %p116
    %p118 = scmp.ne.s32.totalorder %s110, %s112
    %p119 = scmp.eq.s32.totalorder %s18, 1
    %p120 = por %p118, %p119
    %p121 = scmp.ne.s32.totalorder %s112, %s113
    %p122 = scmp.eq.s32.totalorder %s18, 0
    %p123 = por %p121, %p122
    %p124 = scmp.ne.s32.totalorder %s112, %s113
    %p125 = scmp.eq.s32.totalorder %s19, 1
    %p126 = por %p124, %p125
    %p128 = scmp.ne.s32.totalorder %s113, %s127
    %p129 = scmp.eq.s32.totalorder %s19, 0
    %p130 = por %p128, %p129
    %s132 = sadd.s32 %s131, 1
    %p135 = scmp.eq.s32.totalorder %s13, 1
    %p136 = scmp.ne.s32.totalorder %s131, %s133
    %p137 = scmp.eq.s32.totalorder %s13, 0
    %p138 = por %p136, %p137
    %p139 = scmp.ne.s32.totalorder %s131, %s133
    %p140 = scmp.eq.s32.totalorder %s18, 1
    %p141 = por %p139, %p140
    %p142 = scmp.ne.s32.totalorder %s133, %s134
    %p143 = scmp.eq.s32.totalorder %s18, 0
    %p144 = por %p142, %p143
    %p145 = scmp.ne.s32.totalorder %s133, %s134
    %p146 = scmp.eq.s32.totalorder %s19, 1
    %p147 = por %p145, %p146
    %p149 = scmp.ne.s32.totalorder %s134, %s148
    %p150 = scmp.eq.s32.totalorder %s19, 0
    %p151 = por %p149, %p150
    %s153 = sadd.s32 %s152, 1
    %p156 = scmp.eq.s32.totalorder %s13, 1
    %p157 = scmp.ne.s32.totalorder %s152, %s154
    %p158 = scmp.eq.s32.totalorder %s13, 0
    %p159 = por %p157, %p158
    %p160 = scmp.ne.s32.totalorder %s152, %s154
    %p161 = scmp.eq.s32.totalorder %s18, 1
    %p162 = por %p160, %p161
    %p163 = scmp.ne.s32.totalorder %s154, %s155
    %p164 = scmp.eq.s32.totalorder %s18, 0
    %p165 = por %p163, %p164
    %p166 = scmp.ne.s32.totalorder %s154, %s155
    %p167 = scmp.eq.s32.totalorder %s19, 1
    %p168 = por %p166, %p167
    %p170 = scmp.ne.s32.totalorder %s155, %s169
    %p171 = scmp.eq.s32.totalorder %s19, 0
    %p172 = por %p170, %p171
    %s173 = ssub.s32 %s13, %s20
    %p174 = scmp.eq.s32.totalorder %s173, 0
    %s176 = sadd.s32 %s175, 1
    %s177 = scalar_select %p174, %s175, %s176
    %p180 = pneg %p174
    %p181 = scmp.eq.s32.totalorder %s13, 1
    %p182 = por %p180, %p181
    %p183 = scmp.ne.s32.totalorder %s175, %s178
    %p184 = scmp.eq.s32.totalorder %s13, 0
    %p185 = por %p183, %p184
    %p186 = scmp.ne.s32.totalorder %s175, %s178
    %p187 = scmp.eq.s32.totalorder %s18, 1
    %p188 = por %p186, %p187
    %p189 = scmp.ne.s32.totalorder %s178, %s179
    %p190 = scmp.eq.s32.totalorder %s18, 0
    %p191 = por %p189, %p190
    %p192 = scmp.ne.s32.totalorder %s178, %s179
    %p193 = scmp.eq.s32.totalorder %s19, 1
    %p194 = por %p192, %p193
    %p196 = scmp.ne.s32.totalorder %s179, %s195
    %p197 = scmp.eq.s32.totalorder %s19, 0
    %p198 = por %p196, %p197
    %p199 = scmp.le.s32.totalorder 1, %s13
    %p200 = scmp.lt.s32.totalorder %s13, 3
    %p201 = pnand %p199, %p200
    %p202 = pneg %p201
    // Predicated region
    $region9: #{residual_block.1} parent=5 // pred_check
      _
    $region10: #{residual_block.1} parent=5 // pred_check_branch
      %204 = sbr.rel (%p201) target = $region12
    $region11: #{residual_block.1} parent=5 // pred_region
      %s205 = ssub.s32 %s13, 1
      // Predicated region
      $region13: #{residual_block.1} parent=11 // pred_check
        %p206 = pneg %p60
      $region14: #{residual_block.1} parent=11 // pred_check_branch
        %208 = sbr.rel (%p206) target = $region16
      $region15: #{residual_block.1} parent=11 // pred_region
        _
      $region16: #{residual_block.1} parent=11 // pred_fallthru
        _
      // Predicated region
      $region17: #{residual_block.1} parent=11 // pred_check
        %p209 = pneg %p81
      $region18: #{residual_block.1} parent=11 // pred_check_branch
        %211 = sbr.rel (%p209) target = $region20
      $region19: #{residual_block.1} parent=11 // pred_region
        _
      $region20: #{residual_block.1} parent=11 // pred_fallthru
        _
      // Predicated region
      $region21: #{residual_block.1} parent=11 // pred_check
        %p212 = pneg %p102
      $region22: #{residual_block.1} parent=11 // pred_check_branch
        %214 = sbr.rel (%p212) target = $region24
      $region23: #{residual_block.1} parent=11 // pred_region
        _
      $region24: #{residual_block.1} parent=11 // pred_fallthru
        _
      // Predicated region
      $region25: #{residual_block.1} parent=11 // pred_check
        %p215 = pneg %p123
      $region26: #{residual_block.1} parent=11 // pred_check_branch
        %217 = sbr.rel (%p215) target = $region28
      $region27: #{residual_block.1} parent=11 // pred_region
        _
      $region28: #{residual_block.1} parent=11 // pred_fallthru
        _
      // Predicated region
      $region29: #{residual_block.1} parent=11 // pred_check
        %p218 = pneg %p144
      $region30: #{residual_block.1} parent=11 // pred_check_branch
        %220 = sbr.rel (%p218) target = $region32
      $region31: #{residual_block.1} parent=11 // pred_region
        _
      $region32: #{residual_block.1} parent=11 // pred_fallthru
        _
      // Predicated region
      $region33: #{residual_block.1} parent=11 // pred_check
        %p221 = pneg %p165
      $region34: #{residual_block.1} parent=11 // pred_check_branch
        %223 = sbr.rel (%p221) target = $region36
      $region35: #{residual_block.1} parent=11 // pred_region
        _
      $region36: #{residual_block.1} parent=11 // pred_fallthru
        _
    $region12: #{residual_block.1} parent=5 // pred_fallthru
      _
    %p224 = scmp.lt.s32.totalorder %s13, 2
    // Predicated region
    $region37: #{residual_block.1} parent=5 // pred_check
      %p225 = pneg %p224
    $region38: #{residual_block.1} parent=5 // pred_check_branch
      %227 = sbr.rel (%p225) target = $region40
    $region39: #{residual_block.1} parent=5 // pred_region
      // Predicated region
      $region41: #{residual_block.1} parent=39 // pred_check
        %p228 = pneg %p33
      $region42: #{residual_block.1} parent=39 // pred_check_branch
        %230 = sbr.rel (%p228) target = $region44
      $region43: #{residual_block.1} parent=39 // pred_region
        %p231 = scmp.lt.s32.totalorder %s13, 1
        %s232 = scalar_select %p231, %s13, 1
        %s233 = smul.addr %s232, 16
        %s234 = smul.addr %s233, 8
        %s235 = scalar_lea.vmem %s0, %s234
      $region44: #{residual_block.1} parent=39 // pred_fallthru
        _
    $region40: #{residual_block.1} parent=5 // pred_fallthru
      _
    %p236 = scmp.le.s32.totalorder 1, %s13
    %p237 = scmp.lt.s32.totalorder %s13, 3
    %p238 = pnand %p236, %p237
    %p239 = pneg %p238
    // Predicated region
    $region45: #{residual_block.1} parent=5 // pred_check
      _
    $region46: #{residual_block.1} parent=5 // pred_check_branch
      %241 = sbr.rel (%p238) target = $region48
    $region47: #{residual_block.1} parent=5 // pred_region
      %s242 = ssub.s32 %s13, 1
      %p243 = scmp.lt.s32.totalorder %s18, 1
      %s244 = scalar_select %p243, %s18, 1
      %s245 = smul.addr %s244, 16
      %s246 = smul.addr %s245, 8
      %s247 = scalar_lea.vmem %s0, %s246
      %p248 = pneg %p39
      %p249 = pneg %p36
      %p250 = pneg %p60
      %p251 = pneg %p57
      %p252 = pneg %p81
      %p253 = pneg %p78
      %p254 = pneg %p102
      %p255 = pneg %p99
      %p256 = pneg %p123
      %p257 = pneg %p120
      %p258 = pneg %p144
      %p259 = pneg %p141
      %p260 = pneg %p165
      %p261 = pneg %p162
      %p262 = pneg %p191
      %p263 = pneg %p188
      %p264 = scmp.lt.s32.totalorder %s18, 1
      %s265 = scalar_select %p264, %s18, 1
      %s266 = smul.addr %s265, 16
      %s267 = smul.addr %s266, 8
      %s268 = scalar_lea.vmem %s7, %s267
      %p269 = scmp.lt.s32.totalorder %s18, 1
      %s270 = scalar_select %p269, %s18, 1
      %s271 = smul.addr %s270, 16
      %s272 = smul.addr %s271, 8
      %s273 = scalar_lea.vmem %s0, %s272
      %p274 = scmp.lt.s32.totalorder %s18, 1
      %s275 = scalar_select %p274, %s18, 1
      %s276 = smul.addr %s275, 16
      %s277 = smul.addr %s276, 8
      %s278 = scalar_lea.vmem %s7, %s277
      %v282 = vlaneseq
      %v283 = vand.u32 %v282, 127
      %v284 = vadd.s32 %v283, 128
      %vm285 = vcmp.lt.s32.totalorder %v283, 0
      %v286 = vsub.s32 0, %v283
      %v287 = vsel %vm285, %v286, %v283
      %v288 = vshrl.u32 %v287, 4
      %v289 = vand.u32 %v287, 15
      %v290 = vsub.s32 0, %v289
      %v291 = vsel %vm285, %v290, %v289
      %vm292 = vcmp.lt.s32.totalorder %v284, 0
      %v293 = vsub.s32 0, %v284
      %v294 = vsel %vm292, %v293, %v284
      %v295 = vshrl.u32 %v294, 4
      %v296 = vand.u32 %v294, 15
      %v297 = vsub.s32 0, %v296
      %v298 = vsel %vm292, %v297, %v296
      %vm299 = vcmp.ne.s32.totalorder %v291, 0
      %vm300 = vcmp.ne.s32.totalorder %v298, 0
      %vm301 = vcmp.lt.s32.totalorder %v291, 0
      %vm302 = vcmp.lt.s32.totalorder %v298, 0
      %vm303 = vmand %vm301, %vm299
      %vm304 = vmand %vm302, %vm300
      %v305 = vadd.s32 %v291, 16
      %v306 = vadd.s32 %v298, 16
      %v307 = vsel %vm303, %v305, %v291
      %v308 = vsel %vm304, %v306, %v298
      %vm309 = vcmp.ne.s32.totalorder %v307, 0
      %vm310 = vcmp.ne.s32.totalorder %v308, 0
      %vm311 = vcmp.ne.s32.totalorder %v307, 15
      %vm312 = vcmp.ne.s32.totalorder %v308, 15
      %313 = vst [vmem:[#allocation2] sm:$0xf] 0
      %314 = vst [vmem:[#allocation2 + $0x10] sm:$0xf] 0
      %315 = vst [vmem:[#allocation2 + $0x20] sm:$0xf] 0
      %316 = vst [vmem:[#allocation2 + $0x30] sm:$0xf] 0
      %317 = vst [vmem:[#allocation2 + $0x40] sm:$0xf] 0
      %318 = vst [vmem:[#allocation2 + $0x50] sm:$0xf] 0
      %319 = vst [vmem:[#allocation2 + $0x60] sm:$0xf] 0
      %320 = vst [vmem:[#allocation2 + $0x70] sm:$0xf] 0
      %321 = vst [vmem:[#allocation2 + $0xc] sm:$0xf] 0
      %322 = vst [vmem:[#allocation2 + $0x1c] sm:$0xf] 0
      %323 = vst [vmem:[#allocation2 + $0x2c] sm:$0xf] 0
      %324 = vst [vmem:[#allocation2 + $0x3c] sm:$0xf] 0
      %325 = vst [vmem:[#allocation2 + $0x4c] sm:$0xf] 0
      %326 = vst [vmem:[#allocation2 + $0x5c] sm:$0xf] 0
      %327 = vst [vmem:[#allocation2 + $0x6c] sm:$0xf] 0
      %328 = vst [vmem:[#allocation2 + $0x7c] sm:$0xf] 0
      %329 = vst [vmem:[#allocation3] sm:$0xf] 0
      %330 = vst [vmem:[#allocation3 + $0x10] sm:$0xf] 0
      %331 = vst [vmem:[#allocation3 + $0x20] sm:$0xf] 0
      %332 = vst [vmem:[#allocation3 + $0x30] sm:$0xf] 0
      %333 = vst [vmem:[#allocation3 + $0x40] sm:$0xf] 0
      %334 = vst [vmem:[#allocation3 + $0x50] sm:$0xf] 0
      %335 = vst [vmem:[#allocation3 + $0x60] sm:$0xf] 0
      %336 = vst [vmem:[#allocation3 + $0x70] sm:$0xf] 0
      %337 = vst [vmem:[#allocation3 + $0xc] sm:$0xf] 0
      %338 = vst [vmem:[#allocation3 + $0x1c] sm:$0xf] 0
      %339 = vst [vmem:[#allocation3 + $0x2c] sm:$0xf] 0
      %340 = vst [vmem:[#allocation3 + $0x3c] sm:$0xf] 0
      %341 = vst [vmem:[#allocation3 + $0x4c] sm:$0xf] 0
      %342 = vst [vmem:[#allocation3 + $0x5c] sm:$0xf] 0
      %343 = vst [vmem:[#allocation3 + $0x6c] sm:$0xf] 0
      %344 = vst [vmem:[#allocation3 + $0x7c] sm:$0xf] 0
      %v345 = vld [vmem:[%s273] sm:$0xff]
      %v346 = vld [vmem:[%s273 + $0x8] sm:$0xff]
      %v347 = vld [vmem:[%s273 + $0x10] sm:$0xff]
      %v348 = vld [vmem:[%s273 + $0x18] sm:$0xff]
      %v349 = vld [vmem:[%s273 + $0x20] sm:$0xff]
      %v350 = vld [vmem:[%s273 + $0x28] sm:$0xff]
      %v351 = vld [vmem:[%s273 + $0x30] sm:$0xff]
      %v352 = vld [vmem:[%s273 + $0x38] sm:$0xff]
      %v353 = vld [vmem:[%s273 + $0x40] sm:$0xff]
      %v354 = vld [vmem:[%s273 + $0x48] sm:$0xff]
      %v355 = vld [vmem:[%s273 + $0x50] sm:$0xff]
      %v356 = vld [vmem:[%s273 + $0x58] sm:$0xff]
      %v357 = vld [vmem:[%s273 + $0x60] sm:$0xff]
      %v358 = vld [vmem:[%s273 + $0x68] sm:$0xff]
      %v359 = vld [vmem:[%s273 + $0x70] sm:$0xff]
      %v360 = vld [vmem:[%s273 + $0x78] sm:$0xff]
      %v361 = vpack.c.bf16 %v347, %v345
      %v362 = vpack.c.bf16 %v348, %v346
      %v363 = vpack.c.bf16 %v351, %v349
      %v364 = vpack.c.bf16 %v352, %v350
      %v365 = vpack.c.bf16 %v355, %v353
      %v366 = vpack.c.bf16 %v356, %v354
      %v367 = vpack.c.bf16 %v359, %v357
      %v368 = vpack.c.bf16 %v360, %v358
      %v377 = vunpack.c.l.b16 %v361
      %v378 = vunpack.c.l.b16 %v362
      %v379 = vunpack.c.h.b16 %v361
      %v380 = vunpack.c.h.b16 %v362
      %v381 = vunpack.c.l.b16 %v363
      %v382 = vunpack.c.l.b16 %v364
      %v383 = vunpack.c.h.b16 %v363
      %v384 = vunpack.c.h.b16 %v364
      %v385 = vunpack.c.l.b16 %v365
      %v386 = vunpack.c.l.b16 %v366
      %v387 = vunpack.c.h.b16 %v365
      %v388 = vunpack.c.h.b16 %v366
      %v389 = vunpack.c.l.b16 %v367
      %v390 = vunpack.c.l.b16 %v368
      %v391 = vunpack.c.h.b16 %v367
      %v392 = vunpack.c.h.b16 %v368
      %v393 = vpack.c.b16 %v378, %v377
      %v394 = vpack.c.b16 %v380, %v379
      %v395 = vpack.c.b16 %v382, %v381
      %v396 = vpack.c.b16 %v384, %v383
      %v397 = vpack.c.b16 %v386, %v385
      %v398 = vpack.c.b16 %v388, %v387
      %v399 = vpack.c.b16 %v390, %v389
      %v400 = vpack.c.b16 %v392, %v391
      %409 = vst [vmem:[#allocation2 + $0x4] sm:$0xff] %v393
      %410 = vst [vmem:[#allocation2 + $0x14] sm:$0xff] %v394
      %411 = vst [vmem:[#allocation2 + $0x24] sm:$0xff] %v395
      %412 = vst [vmem:[#allocation2 + $0x34] sm:$0xff] %v396
      %413 = vst [vmem:[#allocation2 + $0x44] sm:$0xff] %v397
      %414 = vst [vmem:[#allocation2 + $0x54] sm:$0xff] %v398
      %415 = vst [vmem:[#allocation2 + $0x64] sm:$0xff] %v399
      %416 = vst [vmem:[#allocation2 + $0x74] sm:$0xff] %v400
      %v417 = vld [vmem:[#allocation2] sm:$0xff]
      %v418 = vld [vmem:[#allocation2 + $0x8] sm:$0xf]
      %v419 = vld [vmem:[#allocation2 + $0x10] sm:$0xff]
      %v420 = vld [vmem:[#allocation2 + $0x18] sm:$0xf]
      %v421 = vld [vmem:[#allocation2 + $0x20] sm:$0xff]
      %v422 = vld [vmem:[#allocation2 + $0x28] sm:$0xf]
      %v423 = vld [vmem:[#allocation2 + $0x30] sm:$0xff]
      %v424 = vld [vmem:[#allocation2 + $0x38] sm:$0xf]
      %v425 = vld [vmem:[#allocation2 + $0x40] sm:$0xff]
      %v426 = vld [vmem:[#allocation2 + $0x48] sm:$0xf]
      %v427 = vld [vmem:[#allocation2 + $0x50] sm:$0xff]
      %v428 = vld [vmem:[#allocation2 + $0x58] sm:$0xf]
      %v429 = vld [vmem:[#allocation2 + $0x60] sm:$0xff]
      %v430 = vld [vmem:[#allocation2 + $0x68] sm:$0xf]
      %v431 = vld [vmem:[#allocation2 + $0x70] sm:$0xff]
      %v432 = vld [vmem:[#allocation2 + $0x78] sm:$0xf]
      %v433 = vsel %vm309, 1, 0
      %v434 = vsel %vm310, 1, 0
      %vm435 = vcmp.eq.s32.totalorder %v433, 1
      %vm436 = vcmp.eq.s32.totalorder %v434, 1
      %vm437 = vmpackc.low %vm436, %vm435
      %v438 = vsel %vm437, 65537, 0
      %439 = vrot.lane.b32.xlu0 %v438, 111
      %v440 = vpop.permute.xlu0 %439
      %v441 = vrot.slane %v440, 4
      %vm442 = vcmask 908288
      %v443 = vsel %vm442, %v441, %v440
      %vm444 = vcmp.ne.s16.totalorder %v443, 0
      %vm445 = vcmp.ne.s16.totalorder %v441, 0
      %v446 = vsel %vm444, %v417, 0
      %v447 = vsel %vm445, %v418, 0
      %v448 = vsel %vm444, %v419, 0
      %v449 = vsel %vm445, %v420, 0
      %v450 = vsel %vm444, %v421, 0
      %v451 = vsel %vm445, %v422, 0
      %v452 = vsel %vm444, %v423, 0
      %v453 = vsel %vm445, %v424, 0
      %v454 = vsel %vm444, %v425, 0
      %v455 = vsel %vm445, %v426, 0
      %v456 = vsel %vm444, %v427, 0
      %v457 = vsel %vm445, %v428, 0
      %v458 = vsel %vm444, %v429, 0
      %v459 = vsel %vm445, %v430, 0
      %v460 = vsel %vm444, %v431, 0
      %v461 = vsel %vm445, %v432, 0
      %v462 = vsel %vm311, 1, 0
      %v463 = vsel %vm312, 1, 0
      %vm464 = vcmp.eq.s32.totalorder %v462, 1
      %vm465 = vcmp.eq.s32.totalorder %v463, 1
      %vm466 = vmpackc.low %vm465, %vm464
      %v467 = vsel %vm466, 65537, 0
      %468 = vrot.lane.b32.xlu0 %v467, 113
      %v469 = vpop.permute.xlu0 %468
      %v470 = vrot.slane %v469, 4
      %vm471 = vcmask 924672
      %v472 = vsel %vm471, %v470, %v469
      %vm473 = vcmp.ne.s16.totalorder %v472, 0
      %vm474 = vcmp.ne.s16.totalorder %v470, 0
      %v475 = vsel %vm473, %v417, 0
      %v476 = vsel %vm474, %v418, 0
      %v477 = vsel %vm473, %v419, 0
      %v478 = vsel %vm474, %v420, 0
      %v479 = vsel %vm473, %v421, 0
      %v480 = vsel %vm474, %v422, 0
      %v481 = vsel %vm473, %v423, 0
      %v482 = vsel %vm474, %v424, 0
      %v483 = vsel %vm473, %v425, 0
      %v484 = vsel %vm474, %v426, 0
      %v485 = vsel %vm473, %v427, 0
      %v486 = vsel %vm474, %v428, 0
      %v487 = vsel %vm473, %v429, 0
      %v488 = vsel %vm474, %v430, 0
      %v489 = vsel %vm473, %v431, 0
      %v490 = vsel %vm474, %v432, 0
      %v507 = vunpack.c.l.b16 %v446
      %v508 = vunpack.c.h.b16 %v446
      %v509 = vunpack.c.l.b16 %v447
      %v510 = vunpack.c.l.b16 %v448
      %v511 = vunpack.c.h.b16 %v448
      %v512 = vunpack.c.l.b16 %v449
      %v513 = vunpack.c.l.b16 %v450
      %v514 = vunpack.c.h.b16 %v450
      %v515 = vunpack.c.l.b16 %v451
      %v516 = vunpack.c.l.b16 %v452
      %v517 = vunpack.c.h.b16 %v452
      %v518 = vunpack.c.l.b16 %v453
      %v519 = vunpack.c.l.b16 %v454
      %v520 = vunpack.c.h.b16 %v454
      %v521 = vunpack.c.l.b16 %v455
      %v522 = vunpack.c.l.b16 %v456
      %v523 = vunpack.c.h.b16 %v456
      %v524 = vunpack.c.l.b16 %v457
      %v525 = vunpack.c.l.b16 %v458
      %v526 = vunpack.c.h.b16 %v458
      %v527 = vunpack.c.l.b16 %v459
      %v528 = vunpack.c.l.b16 %v460
      %v529 = vunpack.c.h.b16 %v460
      %v530 = vunpack.c.l.b16 %v461
      %v531 = vpack.c.b16 %v510, %v507
      %v532 = vpack.c.b16 %v511, %v508
      %v533 = vpack.c.b16 %v512, %v509
      %v534 = vpack.c.b16 %v516, %v513
      %v535 = vpack.c.b16 %v517, %v514
      %v536 = vpack.c.b16 %v518, %v515
      %v537 = vpack.c.b16 %v522, %v519
      %v538 = vpack.c.b16 %v523, %v520
      %v539 = vpack.c.b16 %v524, %v521
      %v540 = vpack.c.b16 %v528, %v525
      %v541 = vpack.c.b16 %v529, %v526
      %v542 = vpack.c.b16 %v530, %v527
      %v559 = vunpack.c.l.b16 %v417
      %v560 = vunpack.c.h.b16 %v417
      %v561 = vunpack.c.l.b16 %v418
      %v562 = vunpack.c.l.b16 %v419
      %v563 = vunpack.c.h.b16 %v419
      %v564 = vunpack.c.l.b16 %v420
      %v565 = vunpack.c.l.b16 %v421
      %v566 = vunpack.c.h.b16 %v421
      %v567 = vunpack.c.l.b16 %v422
      %v568 = vunpack.c.l.b16 %v423
      %v569 = vunpack.c.h.b16 %v423
      %v570 = vunpack.c.l.b16 %v424
      %v571 = vunpack.c.l.b16 %v425
      %v572 = vunpack.c.h.b16 %v425
      %v573 = vunpack.c.l.b16 %v426
      %v574 = vunpack.c.l.b16 %v427
      %v575 = vunpack.c.h.b16 %v427
      %v576 = vunpack.c.l.b16 %v428
      %v577 = vunpack.c.l.b16 %v429
      %v578 = vunpack.c.h.b16 %v429
      %v579 = vunpack.c.l.b16 %v430
      %v580 = vunpack.c.l.b16 %v431
      %v581 = vunpack.c.h.b16 %v431
      %v582 = vunpack.c.l.b16 %v432
      %v583 = vpack.c.b16 %v562, %v559
      %v584 = vpack.c.b16 %v563, %v560
      %v585 = vpack.c.b16 %v564, %v561
      %v586 = vpack.c.b16 %v568, %v565
      %v587 = vpack.c.b16 %v569, %v566
      %v588 = vpack.c.b16 %v570, %v567
      %v589 = vpack.c.b16 %v574, %v571
      %v590 = vpack.c.b16 %v575, %v572
      %v591 = vpack.c.b16 %v576, %v573
      %v592 = vpack.c.b16 %v580, %v577
      %v593 = vpack.c.b16 %v581, %v578
      %v594 = vpack.c.b16 %v582, %v579
      %595 = vrot.lane.b32.xlu0 %v583, 127
      %v596 = vpop.permute.xlu0 %595
      %597 = vrot.lane.b32.xlu0 %v584, 127
      %v598 = vpop.permute.xlu0 %597
      %599 = vrot.lane.b32.xlu0 %v585, 127
      %v600 = vpop.permute.xlu0 %599
      %601 = vrot.lane.b32.xlu0 %v586, 127
      %v602 = vpop.permute.xlu0 %601
      %603 = vrot.lane.b32.xlu0 %v587, 127
      %v604 = vpop.permute.xlu0 %603
      %605 = vrot.lane.b32.xlu0 %v588, 127
      %v606 = vpop.permute.xlu0 %605
      %607 = vrot.lane.b32.xlu0 %v589, 127
      %v608 = vpop.permute.xlu0 %607
      %609 = vrot.lane.b32.xlu0 %v590, 127
      %v610 = vpop.permute.xlu0 %609
      %611 = vrot.lane.b32.xlu0 %v591, 127
      %v612 = vpop.permute.xlu0 %611
      %613 = vrot.lane.b32.xlu0 %v592, 127
      %v614 = vpop.permute.xlu0 %613
      %615 = vrot.lane.b32.xlu0 %v593, 127
      %v616 = vpop.permute.xlu0 %615
      %617 = vrot.lane.b32.xlu0 %v594, 127
      %v618 = vpop.permute.xlu0 %617
      %vm619 = vcmask 1039360
      %v620 = vsel %vm619, %v596, %v598
      %v621 = vsel %vm619, %v598, %v600
      %v622 = vsel %vm619, %v602, %v604
      %v623 = vsel %vm619, %v604, %v606
      %v624 = vsel %vm619, %v608, %v610
      %v625 = vsel %vm619, %v610, %v612
      %v626 = vsel %vm619, %v614, %v616
      %v627 = vsel %vm619, %v616, %v618
      %v644 = vunpack.c.l.b16 %v475
      %v645 = vunpack.c.h.b16 %v475
      %v646 = vunpack.c.l.b16 %v476
      %v647 = vunpack.c.l.b16 %v477
      %v648 = vunpack.c.h.b16 %v477
      %v649 = vunpack.c.l.b16 %v478
      %v650 = vunpack.c.l.b16 %v479
      %v651 = vunpack.c.h.b16 %v479
      %v652 = vunpack.c.l.b16 %v480
      %v653 = vunpack.c.l.b16 %v481
      %v654 = vunpack.c.h.b16 %v481
      %v655 = vunpack.c.l.b16 %v482
      %v656 = vunpack.c.l.b16 %v483
      %v657 = vunpack.c.h.b16 %v483
      %v658 = vunpack.c.l.b16 %v484
      %v659 = vunpack.c.l.b16 %v485
      %v660 = vunpack.c.h.b16 %v485
      %v661 = vunpack.c.l.b16 %v486
      %v662 = vunpack.c.l.b16 %v487
      %v663 = vunpack.c.h.b16 %v487
      %v664 = vunpack.c.l.b16 %v488
      %v665 = vunpack.c.l.b16 %v489
      %v666 = vunpack.c.h.b16 %v489
      %v667 = vunpack.c.l.b16 %v490
      %v668 = vpack.c.b16 %v647, %v644
      %v669 = vpack.c.b16 %v648, %v645
      %v670 = vpack.c.b16 %v649, %v646
      %v671 = vpack.c.b16 %v653, %v650
      %v672 = vpack.c.b16 %v654, %v651
      %v673 = vpack.c.b16 %v655, %v652
      %v674 = vpack.c.b16 %v659, %v656
      %v675 = vpack.c.b16 %v660, %v657
      %v676 = vpack.c.b16 %v661, %v658
      %v677 = vpack.c.b16 %v665, %v662
      %v678 = vpack.c.b16 %v666, %v663
      %v679 = vpack.c.b16 %v667, %v664
      %680 = vrot.lane.b32.xlu0 %v668, 126
      %v681 = vpop.permute.xlu0 %680
      %682 = vrot.lane.b32.xlu0 %v669, 126
      %v683 = vpop.permute.xlu0 %682
      %684 = vrot.lane.b32.xlu0 %v670, 126
      %v685 = vpop.permute.xlu0 %684
      %686 = vrot.lane.b32.xlu0 %v671, 126
      %v687 = vpop.permute.xlu0 %686
      %688 = vrot.lane.b32.xlu0 %v672, 126
      %v689 = vpop.permute.xlu0 %688
      %690 = vrot.lane.b32.xlu0 %v673, 126
      %v691 = vpop.permute.xlu0 %690
      %692 = vrot.lane.b32.xlu0 %v674, 126
      %v693 = vpop.permute.xlu0 %692
      %694 = vrot.lane.b32.xlu0 %v675, 126
      %v695 = vpop.permute.xlu0 %694
      %696 = vrot.lane.b32.xlu0 %v676, 126
      %v697 = vpop.permute.xlu0 %696
      %698 = vrot.lane.b32.xlu0 %v677, 126
      %v699 = vpop.permute.xlu0 %698
      %700 = vrot.lane.b32.xlu0 %v678, 126
      %v701 = vpop.permute.xlu0 %700
      %702 = vrot.lane.b32.xlu0 %v679, 126
      %v703 = vpop.permute.xlu0 %702
      %vm704 = vcmask 1031168
      %v705 = vsel %vm704, %v681, %v683
      %v706 = vsel %vm704, %v683, %v685
      %v707 = vsel %vm704, %v687, %v689
      %v708 = vsel %vm704, %v689, %v691
      %v709 = vsel %vm704, %v693, %v695
      %v710 = vsel %vm704, %v695, %v697
      %v711 = vsel %vm704, %v699, %v701
      %v712 = vsel %vm704, %v701, %v703
      %v713 = vld [vmem:[%s1] sm:$0xff]
      %v714 = vld [vmem:[%s1 + $0x8] sm:$0xff]
      %v715 = vld [vmem:[%s1 + $0x10] sm:$0xff]
      %v716 = vld [vmem:[%s1 + $0x18] sm:$0xff]
      %v717 = vld [vmem:[%s1 + $0x20] sm:$0xff]
      %v718 = vld [vmem:[%s1 + $0x28] sm:$0xff]
      %v719 = vld [vmem:[%s1 + $0x30] sm:$0xff]
      %v720 = vld [vmem:[%s1 + $0x38] sm:$0xff]
      %v721 = vld [vmem:[#allocation2 + $0x4] sm:$0xff]
      %v722 = vld [vmem:[#allocation2 + $0x14] sm:$0xff]
      %v723 = vld [vmem:[#allocation2 + $0x24] sm:$0xff]
      %v724 = vld [vmem:[#allocation2 + $0x34] sm:$0xff]
      %v725 = vld [vmem:[#allocation2 + $0x44] sm:$0xff]
      %v726 = vld [vmem:[#allocation2 + $0x54] sm:$0xff]
      %v727 = vld [vmem:[#allocation2 + $0x64] sm:$0xff]
      %v728 = vld [vmem:[#allocation2 + $0x74] sm:$0xff]
      %v729 = vld [vmem:[#allocation2 + $0x4] sm:$0xff]
      %v730 = vld [vmem:[#allocation2 + $0xc] sm:$0xf]
      %v731 = vld [vmem:[#allocation2 + $0x14] sm:$0xff]
      %v732 = vld [vmem:[#allocation2 + $0x1c] sm:$0xf]
      %v733 = vld [vmem:[#allocation2 + $0x24] sm:$0xff]
      %v734 = vld [vmem:[#allocation2 + $0x2c] sm:$0xf]
      %v735 = vld [vmem:[#allocation2 + $0x34] sm:$0xff]
      %v736 = vld [vmem:[#allocation2 + $0x3c] sm:$0xf]
      %v737 = vld [vmem:[#allocation2 + $0x44] sm:$0xff]
      %v738 = vld [vmem:[#allocation2 + $0x4c] sm:$0xf]
      %v739 = vld [vmem:[#allocation2 + $0x54] sm:$0xff]
      %v740 = vld [vmem:[#allocation2 + $0x5c] sm:$0xf]
      %v741 = vld [vmem:[#allocation2 + $0x64] sm:$0xff]
      %v742 = vld [vmem:[#allocation2 + $0x6c] sm:$0xf]
      %v743 = vld [vmem:[#allocation2 + $0x74] sm:$0xff]
      %v744 = vld [vmem:[#allocation2 + $0x7c] sm:$0xf]
      %745 = vrot.lane.b32.xlu0 %v438, 127
      %v746 = vpop.permute.xlu0 %745
      %v747 = vrot.slane %v746, 4
      %v748 = vsel %vm619, %v747, %v746
      %vm749 = vcmp.ne.s16.totalorder %v748, 0
      %vm750 = vcmp.ne.s16.totalorder %v747, 0
      %v751 = vsel %vm749, %v417, 0
      %v752 = vsel %vm750, %v418, 0
      %v753 = vsel %vm749, %v419, 0
      %v754 = vsel %vm750, %v420, 0
      %v755 = vsel %vm749, %v421, 0
      %v756 = vsel %vm750, %v422, 0
      %v757 = vsel %vm749, %v423, 0
      %v758 = vsel %vm750, %v424, 0
      %v759 = vsel %vm749, %v425, 0
      %v760 = vsel %vm750, %v426, 0
      %v761 = vsel %vm749, %v427, 0
      %v762 = vsel %vm750, %v428, 0
      %v763 = vsel %vm749, %v429, 0
      %v764 = vsel %vm750, %v430, 0
      %v765 = vsel %vm749, %v431, 0
      %v766 = vsel %vm750, %v432, 0
      %767 = vrot.lane.b32.xlu0 %v467, 1
      %v768 = vpop.permute.xlu0 %767
      %v769 = vrot.slane %v768, 4
      %vm770 = vcmask 7168
      %v771 = vsel %vm770, %v769, %v768
      %vm772 = vcmp.ne.s16.totalorder %v771, 0
      %vm773 = vcmp.ne.s16.totalorder %v769, 0
      %v774 = vsel %vm772, %v729, 0
      %v775 = vsel %vm773, %v730, 0
      %v776 = vsel %vm772, %v731, 0
      %v777 = vsel %vm773, %v732, 0
      %v778 = vsel %vm772, %v733, 0
      %v779 = vsel %vm773, %v734, 0
      %v780 = vsel %vm772, %v735, 0
      %v781 = vsel %vm773, %v736, 0
      %v782 = vsel %vm772, %v737, 0
      %v783 = vsel %vm773, %v738, 0
      %v784 = vsel %vm772, %v739, 0
      %v785 = vsel %vm773, %v740, 0
      %v786 = vsel %vm772, %v741, 0
      %v787 = vsel %vm773, %v742, 0
      %v788 = vsel %vm772, %v743, 0
      %v789 = vsel %vm773, %v744, 0
      %v806 = vunpack.c.l.b16 %v751
      %v807 = vunpack.c.h.b16 %v751
      %v808 = vunpack.c.l.b16 %v752
      %v809 = vunpack.c.l.b16 %v753
      %v810 = vunpack.c.h.b16 %v753
      %v811 = vunpack.c.l.b16 %v754
      %v812 = vunpack.c.l.b16 %v755
      %v813 = vunpack.c.h.b16 %v755
      %v814 = vunpack.c.l.b16 %v756
      %v815 = vunpack.c.l.b16 %v757
      %v816 = vunpack.c.h.b16 %v757
      %v817 = vunpack.c.l.b16 %v758
      %v818 = vunpack.c.l.b16 %v759
      %v819 = vunpack.c.h.b16 %v759
      %v820 = vunpack.c.l.b16 %v760
      %v821 = vunpack.c.l.b16 %v761
      %v822 = vunpack.c.h.b16 %v761
      %v823 = vunpack.c.l.b16 %v762
      %v824 = vunpack.c.l.b16 %v763
      %v825 = vunpack.c.h.b16 %v763
      %v826 = vunpack.c.l.b16 %v764
      %v827 = vunpack.c.l.b16 %v765
      %v828 = vunpack.c.h.b16 %v765
      %v829 = vunpack.c.l.b16 %v766
      %v830 = vpack.c.b16 %v809, %v806
      %v831 = vpack.c.b16 %v810, %v807
      %v832 = vpack.c.b16 %v811, %v808
      %v833 = vpack.c.b16 %v815, %v812
      %v834 = vpack.c.b16 %v816, %v813
      %v835 = vpack.c.b16 %v817, %v814
      %v836 = vpack.c.b16 %v821, %v818
      %v837 = vpack.c.b16 %v822, %v819
      %v838 = vpack.c.b16 %v823, %v820
      %v839 = vpack.c.b16 %v827, %v824
      %v840 = vpack.c.b16 %v828, %v825
      %v841 = vpack.c.b16 %v829, %v826
      %v850 = vunpack.c.l.b16 %v721
      %v851 = vunpack.c.h.b16 %v721
      %v852 = vunpack.c.l.b16 %v722
      %v853 = vunpack.c.h.b16 %v722
      %v854 = vunpack.c.l.b16 %v723
      %v855 = vunpack.c.h.b16 %v723
      %v856 = vunpack.c.l.b16 %v724
      %v857 = vunpack.c.h.b16 %v724
      %v858 = vunpack.c.l.b16 %v725
      %v859 = vunpack.c.h.b16 %v725
      %v860 = vunpack.c.l.b16 %v726
      %v861 = vunpack.c.h.b16 %v726
      %v862 = vunpack.c.l.b16 %v727
      %v863 = vunpack.c.h.b16 %v727
      %v864 = vunpack.c.l.b16 %v728
      %v865 = vunpack.c.h.b16 %v728
      %v866 = vpack.c.b16 %v852, %v850
      %v867 = vpack.c.b16 %v853, %v851
      %v868 = vpack.c.b16 %v856, %v854
      %v869 = vpack.c.b16 %v857, %v855
      %v870 = vpack.c.b16 %v860, %v858
      %v871 = vpack.c.b16 %v861, %v859
      %v872 = vpack.c.b16 %v864, %v862
      %v873 = vpack.c.b16 %v865, %v863
      %874 = vrot.lane.b32.xlu0 %v866, 127
      %v875 = vpop.permute.xlu0 %874
      %876 = vrot.lane.b32.xlu0 %v867, 127
      %v877 = vpop.permute.xlu0 %876
      %878 = vrot.lane.b32.xlu0 %v868, 127
      %v879 = vpop.permute.xlu0 %878
      %880 = vrot.lane.b32.xlu0 %v869, 127
      %v881 = vpop.permute.xlu0 %880
      %882 = vrot.lane.b32.xlu0 %v870, 127
      %v883 = vpop.permute.xlu0 %882
      %884 = vrot.lane.b32.xlu0 %v871, 127
      %v885 = vpop.permute.xlu0 %884
      %886 = vrot.lane.b32.xlu0 %v872, 127
      %v887 = vpop.permute.xlu0 %886
      %888 = vrot.lane.b32.xlu0 %v873, 127
      %v889 = vpop.permute.xlu0 %888
      %v890 = vsel %vm619, %v875, %v877
      %v891 = vsel %vm619, %v879, %v881
      %v892 = vsel %vm619, %v883, %v885
      %v893 = vsel %vm619, %v887, %v889
      %v910 = vunpack.c.l.b16 %v774
      %v911 = vunpack.c.h.b16 %v774
      %v912 = vunpack.c.l.b16 %v775
      %v913 = vunpack.c.l.b16 %v776
      %v914 = vunpack.c.h.b16 %v776
      %v915 = vunpack.c.l.b16 %v777
      %v916 = vunpack.c.l.b16 %v778
      %v917 = vunpack.c.h.b16 %v778
      %v918 = vunpack.c.l.b16 %v779
      %v919 = vunpack.c.l.b16 %v780
      %v920 = vunpack.c.h.b16 %v780
      %v921 = vunpack.c.l.b16 %v781
      %v922 = vunpack.c.l.b16 %v782
      %v923 = vunpack.c.h.b16 %v782
      %v924 = vunpack.c.l.b16 %v783
      %v925 = vunpack.c.l.b16 %v784
      %v926 = vunpack.c.h.b16 %v784
      %v927 = vunpack.c.l.b16 %v785
      %v928 = vunpack.c.l.b16 %v786
      %v929 = vunpack.c.h.b16 %v786
      %v930 = vunpack.c.l.b16 %v787
      %v931 = vunpack.c.l.b16 %v788
      %v932 = vunpack.c.h.b16 %v788
      %v933 = vunpack.c.l.b16 %v789
      %v934 = vpack.c.b16 %v913, %v910
      %v935 = vpack.c.b16 %v914, %v911
      %v936 = vpack.c.b16 %v915, %v912
      %v937 = vpack.c.b16 %v919, %v916
      %v938 = vpack.c.b16 %v920, %v917
      %v939 = vpack.c.b16 %v921, %v918
      %v940 = vpack.c.b16 %v925, %v922
      %v941 = vpack.c.b16 %v926, %v923
      %v942 = vpack.c.b16 %v927, %v924
      %v943 = vpack.c.b16 %v931, %v928
      %v944 = vpack.c.b16 %v932, %v929
      %v945 = vpack.c.b16 %v933, %v930
      %946 = vrot.lane.b32.xlu0 %v934, 126
      %v947 = vpop.permute.xlu0 %946
      %948 = vrot.lane.b32.xlu0 %v935, 126
      %v949 = vpop.permute.xlu0 %948
      %950 = vrot.lane.b32.xlu0 %v936, 126
      %v951 = vpop.permute.xlu0 %950
      %952 = vrot.lane.b32.xlu0 %v937, 126
      %v953 = vpop.permute.xlu0 %952
      %954 = vrot.lane.b32.xlu0 %v938, 126
      %v955 = vpop.permute.xlu0 %954
      %956 = vrot.lane.b32.xlu0 %v939, 126
      %v957 = vpop.permute.xlu0 %956
      %958 = vrot.lane.b32.xlu0 %v940, 126
      %v959 = vpop.permute.xlu0 %958
      %960 = vrot.lane.b32.xlu0 %v941, 126
      %v961 = vpop.permute.xlu0 %960
      %962 = vrot.lane.b32.xlu0 %v942, 126
      %v963 = vpop.permute.xlu0 %962
      %964 = vrot.lane.b32.xlu0 %v943, 126
      %v965 = vpop.permute.xlu0 %964
      %966 = vrot.lane.b32.xlu0 %v944, 126
      %v967 = vpop.permute.xlu0 %966
      %968 = vrot.lane.b32.xlu0 %v945, 126
      %v969 = vpop.permute.xlu0 %968
      %v970 = vsel %vm704, %v947, %v949
      %v971 = vsel %vm704, %v949, %v951
      %v972 = vsel %vm704, %v953, %v955
      %v973 = vsel %vm704, %v955, %v957
      %v974 = vsel %vm704, %v959, %v961
      %v975 = vsel %vm704, %v961, %v963
      %v976 = vsel %vm704, %v965, %v967
      %v977 = vsel %vm704, %v967, %v969
      %s978 = scalar_lea.vmem %s1, 64
      %v979 = vld [vmem:[%s978] sm:$0xff]
      %v980 = vld [vmem:[%s978 + $0x8] sm:$0xff]
      %v981 = vld [vmem:[%s978 + $0x10] sm:$0xff]
      %v982 = vld [vmem:[%s978 + $0x18] sm:$0xff]
      %v983 = vld [vmem:[%s978 + $0x20] sm:$0xff]
      %v984 = vld [vmem:[%s978 + $0x28] sm:$0xff]
      %v985 = vld [vmem:[%s978 + $0x30] sm:$0xff]
      %v986 = vld [vmem:[%s978 + $0x38] sm:$0xff]
      %v995 = vunpack.c.l.b16 %v979
      %v996 = vunpack.c.h.b16 %v979
      %v997 = vunpack.c.l.b16 %v980
      %v998 = vunpack.c.h.b16 %v980
      %v999 = vunpack.c.l.b16 %v981
      %v1000 = vunpack.c.h.b16 %v981
      %v1001 = vunpack.c.l.b16 %v982
      %v1002 = vunpack.c.h.b16 %v982
      %v1003 = vunpack.c.l.b16 %v983
      %v1004 = vunpack.c.h.b16 %v983
      %v1005 = vunpack.c.l.b16 %v984
      %v1006 = vunpack.c.h.b16 %v984
      %v1007 = vunpack.c.l.b16 %v985
      %v1008 = vunpack.c.h.b16 %v985
      %v1009 = vunpack.c.l.b16 %v986
      %v1010 = vunpack.c.h.b16 %v986
      %v1011 = vpack.c.b16 %v997, %v995
      %v1012 = vpack.c.b16 %v998, %v996
      %v1013 = vpack.c.b16 %v1001, %v999
      %v1014 = vpack.c.b16 %v1002, %v1000
      %v1015 = vpack.c.b16 %v1005, %v1003
      %v1016 = vpack.c.b16 %v1006, %v1004
      %v1017 = vpack.c.b16 %v1009, %v1007
      %v1018 = vpack.c.b16 %v1010, %v1008
      %1023 = vrot.lane.b32.xlu0 %v830, 1
      %v1024 = vpop.permute.xlu0 %1023
      %1025 = vrot.lane.b32.xlu0 %v831, 1
      %v1026 = vpop.permute.xlu0 %1025
      %1027 = vrot.lane.b32.xlu0 %v832, 1
      %v1028 = vpop.permute.xlu0 %1027
      %1029 = vrot.lane.b32.xlu0 %v833, 1
      %v1030 = vpop.permute.xlu0 %1029
      %1031 = vrot.lane.b32.xlu0 %v834, 1
      %v1032 = vpop.permute.xlu0 %1031
      %1033 = vrot.lane.b32.xlu0 %v835, 1
      %v1034 = vpop.permute.xlu0 %1033
      %1035 = vrot.lane.b32.xlu0 %v836, 1
      %v1036 = vpop.permute.xlu0 %1035
      %1037 = vrot.lane.b32.xlu0 %v837, 1
      %v1038 = vpop.permute.xlu0 %1037
      %1039 = vrot.lane.b32.xlu0 %v838, 1
      %v1040 = vpop.permute.xlu0 %1039
      %1041 = vrot.lane.b32.xlu0 %v839, 1
      %v1042 = vpop.permute.xlu0 %1041
      %1043 = vrot.lane.b32.xlu0 %v840, 1
      %v1044 = vpop.permute.xlu0 %1043
      %1045 = vrot.lane.b32.xlu0 %v841, 1
      %v1046 = vpop.permute.xlu0 %1045
      %1047 = vrot.lane.b32.xlu0 %v875, 1
      %v1048 = vpop.permute.xlu0 %1047
      %1049 = vrot.lane.b32.xlu0 %v890, 1
      %v1050 = vpop.permute.xlu0 %1049
      %1051 = vrot.lane.b32.xlu0 %v877, 1
      %v1052 = vpop.permute.xlu0 %1051
      %1053 = vrot.lane.b32.xlu0 %v879, 1
      %v1054 = vpop.permute.xlu0 %1053
      %1055 = vrot.lane.b32.xlu0 %v891, 1
      %v1056 = vpop.permute.xlu0 %1055
      %1057 = vrot.lane.b32.xlu0 %v881, 1
      %v1058 = vpop.permute.xlu0 %1057
      %1059 = vrot.lane.b32.xlu0 %v883, 1
      %v1060 = vpop.permute.xlu0 %1059
      %1061 = vrot.lane.b32.xlu0 %v892, 1
      %v1062 = vpop.permute.xlu0 %1061
      %1063 = vrot.lane.b32.xlu0 %v885, 1
      %v1064 = vpop.permute.xlu0 %1063
      %1065 = vrot.lane.b32.xlu0 %v887, 1
      %v1066 = vpop.permute.xlu0 %1065
      %1067 = vrot.lane.b32.xlu0 %v893, 1
      %v1068 = vpop.permute.xlu0 %1067
      %1069 = vrot.lane.b32.xlu0 %v889, 1
      %v1070 = vpop.permute.xlu0 %1069
      %1071 = vrot.lane.b32.xlu0 %v947, 1
      %v1072 = vpop.permute.xlu0 %1071
      %1073 = vrot.lane.b32.xlu0 %v970, 1
      %v1074 = vpop.permute.xlu0 %1073
      %1075 = vrot.lane.b32.xlu0 %v971, 1
      %v1076 = vpop.permute.xlu0 %1075
      %1077 = vrot.lane.b32.xlu0 %v953, 1
      %v1078 = vpop.permute.xlu0 %1077
      %1079 = vrot.lane.b32.xlu0 %v972, 1
      %v1080 = vpop.permute.xlu0 %1079
      %1081 = vrot.lane.b32.xlu0 %v973, 1
      %v1082 = vpop.permute.xlu0 %1081
      %1083 = vrot.lane.b32.xlu0 %v959, 1
      %v1084 = vpop.permute.xlu0 %1083
      %1085 = vrot.lane.b32.xlu0 %v974, 1
      %v1086 = vpop.permute.xlu0 %1085
      %1087 = vrot.lane.b32.xlu0 %v975, 1
      %v1088 = vpop.permute.xlu0 %1087
      %1089 = vrot.lane.b32.xlu0 %v965, 1
      %v1090 = vpop.permute.xlu0 %1089
      %1091 = vrot.lane.b32.xlu0 %v976, 1
      %v1092 = vpop.permute.xlu0 %1091
      %1093 = vrot.lane.b32.xlu0 %v977, 1
      %v1094 = vpop.permute.xlu0 %1093
      %v1095 = vsel %vm770, %v1024, %v1026
      %v1096 = vsel %vm770, %v1026, %v1028
      %v1097 = vsel %vm770, %v1030, %v1032
      %v1098 = vsel %vm770, %v1032, %v1034
      %v1099 = vsel %vm770, %v1036, %v1038
      %v1100 = vsel %vm770, %v1038, %v1040
      %v1101 = vsel %vm770, %v1042, %v1044
      %v1102 = vsel %vm770, %v1044, %v1046
      %v1103 = vsel %vm770, %v1048, %v1050
      %v1104 = vsel %vm770, %v1050, %v1052
      %v1105 = vsel %vm770, %v1054, %v1056
      %v1106 = vsel %vm770, %v1056, %v1058
      %v1107 = vsel %vm770, %v1060, %v1062
      %v1108 = vsel %vm770, %v1062, %v1064
      %v1109 = vsel %vm770, %v1066, %v1068
      %v1110 = vsel %vm770, %v1068, %v1070
      %v1111 = vsel %vm770, %v1072, %v1074
      %v1112 = vsel %vm770, %v1074, %v1076
      %v1113 = vsel %vm770, %v1078, %v1080
      %v1114 = vsel %vm770, %v1080, %v1082
      %v1115 = vsel %vm770, %v1084, %v1086
      %v1116 = vsel %vm770, %v1086, %v1088
      %v1117 = vsel %vm770, %v1090, %v1092
      %v1118 = vsel %vm770, %v1092, %v1094
      %vm1143 = vcmask 523264
      %v1145 = vsel %vm1143, %v1012, 0
      %v1148 = vsel %vm1143, %v1014, 0
      %v1151 = vsel %vm1143, %v1016, 0
      %v1154 = vsel %vm1143, %v1018, 0
      %1156 = vmatprep.subr.bf16.mxu0 %v1110
      %1157 = vmatpush1.bf16.msra.mxu0 %v1109
      %1158 = vmatprep.subr.bf16.mxu0 %v1108
      %1159 = vmatpush1.bf16.msra.mxu0 %v1107
      %1160 = vmatprep.subr.bf16.mxu0 %v1106
      %1161 = vmatpush1.bf16.msra.mxu0 %v1105
      %1162 = vmatprep.subr.bf16.mxu0 %v1104
      %1163 = vmatpush1.bf16.msra.mxu0 %v1103
      %1164 = vmatprep.subr.bf16.mxu0 %v1102
      %1165 = vmatpush1.bf16.msra.mxu0 %v1101
      %1166 = vmatprep.subr.bf16.mxu0 %v1100
      %1167 = vmatpush1.bf16.msra.mxu0 %v1099
      %1168 = vmatprep.subr.bf16.mxu0 %v1098
      %1169 = vmatpush1.bf16.msra.mxu0 %v1097
      %1170 = vmatprep.subr.bf16.mxu0 %v1096
      %1171 = vmatpush1.bf16.msra.mxu0 %v1095
      %1172 = vmatprep.subr.bf16.mxu0 0
      %1173 = vmatpush2.bf16.msra.mxu0 0
      %1174 = vmatprep.subr.bf16.mxu0 0
      %1175 = vmatpush2.bf16.msra.mxu0 0
      %1176 = vmatprep.subr.bf16.mxu0 0
      %1177 = vmatpush2.bf16.msra.mxu0 0
      %1178 = vmatprep.subr.bf16.mxu0 0
      %1179 = vmatpush2.bf16.msra.mxu0 0
      %1180 = vmatprep.subr.bf16.mxu0 %v1118
      %1181 = vmatpush2.bf16.msra.mxu0 %v1117
      %1182 = vmatprep.subr.bf16.mxu0 %v1116
      %1183 = vmatpush2.bf16.msra.mxu0 %v1115
      %1184 = vmatprep.subr.bf16.mxu0 %v1114
      %1185 = vmatpush2.bf16.msra.mxu0 %v1113
      %1186 = vmatprep.subr.bf16.mxu0 %v1112
      %1187 = vmatpush2.bf16.msra.mxu0 %v1111
      %1188 = vmatprep.mubr.bf16.mxu0 %v1145
      %1189 = vmatmul.mubr.bf16.gmra.mxu0 %v1011
      %v1190 = vpop.f32.mrf.mxu0
      %v1191 = vadd.f32 0.0, %v1190
      %v1192 = vpop.f32.mrf.mxu0
      %v1193 = vadd.f32 0.0, %v1192
      %v1194 = vpop.f32.mrf.mxu0
      %v1195 = vadd.f32 0.0, %v1194
      %v1196 = vpop.f32.mrf.mxu0
      %v1197 = vadd.f32 0.0, %v1196
      %1198 = vmatprep.mubr.bf16.mxu0 %v1148
      %1199 = vmatmul.mubr.bf16.gmra.mxu0 %v1013
      %v1200 = vpop.f32.mrf.mxu0
      %v1201 = vadd.f32 0.0, %v1200
      %v1202 = vpop.f32.mrf.mxu0
      %v1203 = vadd.f32 0.0, %v1202
      %v1204 = vpop.f32.mrf.mxu0
      %v1205 = vadd.f32 0.0, %v1204
      %v1206 = vpop.f32.mrf.mxu0
      %v1207 = vadd.f32 0.0, %v1206
      %1208 = vmatprep.mubr.bf16.mxu0 %v1151
      %1209 = vmatmul.mubr.bf16.gmra.mxu0 %v1015
      %v1210 = vpop.f32.mrf.mxu0
      %v1211 = vadd.f32 0.0, %v1210
      %v1212 = vpop.f32.mrf.mxu0
      %v1213 = vadd.f32 0.0, %v1212
      %v1214 = vpop.f32.mrf.mxu0
      %v1215 = vadd.f32 0.0, %v1214
      %v1216 = vpop.f32.mrf.mxu0
      %v1217 = vadd.f32 0.0, %v1216
      %1218 = vmatprep.mubr.bf16.mxu0 %v1154
      %1219 = vmatmul.mubr.bf16.gmra.mxu0 %v1017
      %v1220 = vpop.f32.mrf.mxu0
      %v1221 = vadd.f32 0.0, %v1220
      %v1222 = vpop.f32.mrf.mxu0
      %v1223 = vadd.f32 0.0, %v1222
      %v1224 = vpop.f32.mrf.mxu0
      %v1225 = vadd.f32 0.0, %v1224
      %v1226 = vpop.f32.mrf.mxu0
      %v1227 = vadd.f32 0.0, %v1226
      %1228 = vdwg.mxu0
      %v1237 = vunpack.c.l.b16 %v713
      %v1238 = vunpack.c.h.b16 %v713
      %v1239 = vunpack.c.l.b16 %v714
      %v1240 = vunpack.c.h.b16 %v714
      %v1241 = vunpack.c.l.b16 %v715
      %v1242 = vunpack.c.h.b16 %v715
      %v1243 = vunpack.c.l.b16 %v716
      %v1244 = vunpack.c.h.b16 %v716
      %v1245 = vunpack.c.l.b16 %v717
      %v1246 = vunpack.c.h.b16 %v717
      %v1247 = vunpack.c.l.b16 %v718
      %v1248 = vunpack.c.h.b16 %v718
      %v1249 = vunpack.c.l.b16 %v719
      %v1250 = vunpack.c.h.b16 %v719
      %v1251 = vunpack.c.l.b16 %v720
      %v1252 = vunpack.c.h.b16 %v720
      %v1253 = vpack.c.b16 %v1239, %v1237
      %v1254 = vpack.c.b16 %v1240, %v1238
      %v1255 = vpack.c.b16 %v1243, %v1241
      %v1256 = vpack.c.b16 %v1244, %v1242
      %v1257 = vpack.c.b16 %v1247, %v1245
      %v1258 = vpack.c.b16 %v1248, %v1246
      %v1259 = vpack.c.b16 %v1251, %v1249
      %v1260 = vpack.c.b16 %v1252, %v1250
      %1265 = vrot.lane.b32.xlu0 %v531, 17
      %v1266 = vpop.permute.xlu0 %1265
      %1267 = vrot.lane.b32.xlu0 %v532, 17
      %v1268 = vpop.permute.xlu0 %1267
      %1269 = vrot.lane.b32.xlu0 %v533, 17
      %v1270 = vpop.permute.xlu0 %1269
      %1271 = vrot.lane.b32.xlu0 %v534, 17
      %v1272 = vpop.permute.xlu0 %1271
      %1273 = vrot.lane.b32.xlu0 %v535, 17
      %v1274 = vpop.permute.xlu0 %1273
      %1275 = vrot.lane.b32.xlu0 %v536, 17
      %v1276 = vpop.permute.xlu0 %1275
      %1277 = vrot.lane.b32.xlu0 %v537, 17
      %v1278 = vpop.permute.xlu0 %1277
      %1279 = vrot.lane.b32.xlu0 %v538, 17
      %v1280 = vpop.permute.xlu0 %1279
      %1281 = vrot.lane.b32.xlu0 %v539, 17
      %v1282 = vpop.permute.xlu0 %1281
      %1283 = vrot.lane.b32.xlu0 %v540, 17
      %v1284 = vpop.permute.xlu0 %1283
      %1285 = vrot.lane.b32.xlu0 %v541, 17
      %v1286 = vpop.permute.xlu0 %1285
      %1287 = vrot.lane.b32.xlu0 %v542, 17
      %v1288 = vpop.permute.xlu0 %1287
      %1289 = vrot.lane.b32.xlu0 %v620, 17
      %v1290 = vpop.permute.xlu0 %1289
      %1291 = vrot.lane.b32.xlu0 %v621, 17
      %v1292 = vpop.permute.xlu0 %1291
      %1293 = vrot.lane.b32.xlu0 %v600, 17
      %v1294 = vpop.permute.xlu0 %1293
      %1295 = vrot.lane.b32.xlu0 %v622, 17
      %v1296 = vpop.permute.xlu0 %1295
      %1297 = vrot.lane.b32.xlu0 %v623, 17
      %v1298 = vpop.permute.xlu0 %1297
      %1299 = vrot.lane.b32.xlu0 %v606, 17
      %v1300 = vpop.permute.xlu0 %1299
      %1301 = vrot.lane.b32.xlu0 %v624, 17
      %v1302 = vpop.permute.xlu0 %1301
      %1303 = vrot.lane.b32.xlu0 %v625, 17
      %v1304 = vpop.permute.xlu0 %1303
      %1305 = vrot.lane.b32.xlu0 %v612, 17
      %v1306 = vpop.permute.xlu0 %1305
      %1307 = vrot.lane.b32.xlu0 %v626, 17
      %v1308 = vpop.permute.xlu0 %1307
      %1309 = vrot.lane.b32.xlu0 %v627, 17
      %v1310 = vpop.permute.xlu0 %1309
      %1311 = vrot.lane.b32.xlu0 %v618, 17
      %v1312 = vpop.permute.xlu0 %1311
      %1313 = vrot.lane.b32.xlu0 %v705, 17
      %v1314 = vpop.permute.xlu0 %1313
      %1315 = vrot.lane.b32.xlu0 %v706, 17
      %v1316 = vpop.permute.xlu0 %1315
      %1317 = vrot.lane.b32.xlu0 %v685, 17
      %v1318 = vpop.permute.xlu0 %1317
      %1319 = vrot.lane.b32.xlu0 %v707, 17
      %v1320 = vpop.permute.xlu0 %1319
      %1321 = vrot.lane.b32.xlu0 %v708, 17
      %v1322 = vpop.permute.xlu0 %1321
      %1323 = vrot.lane.b32.xlu0 %v691, 17
      %v1324 = vpop.permute.xlu0 %1323
      %1325 = vrot.lane.b32.xlu0 %v709, 17
      %v1326 = vpop.permute.xlu0 %1325
      %1327 = vrot.lane.b32.xlu0 %v710, 17
      %v1328 = vpop.permute.xlu0 %1327
      %1329 = vrot.lane.b32.xlu0 %v697, 17
      %v1330 = vpop.permute.xlu0 %1329
      %1331 = vrot.lane.b32.xlu0 %v711, 17
      %v1332 = vpop.permute.xlu0 %1331
      %1333 = vrot.lane.b32.xlu0 %v712, 17
      %v1334 = vpop.permute.xlu0 %1333
      %1335 = vrot.lane.b32.xlu0 %v703, 17
      %v1336 = vpop.permute.xlu0 %1335
      %vm1337 = vcmask 138240
      %v1338 = vsel %vm1337, %v1266, %v1268
      %v1339 = vsel %vm1337, %v1268, %v1270
      %v1340 = vsel %vm1337, %v1272, %v1274
      %v1341 = vsel %vm1337, %v1274, %v1276
      %v1342 = vsel %vm1337, %v1278, %v1280
      %v1343 = vsel %vm1337, %v1280, %v1282
      %v1344 = vsel %vm1337, %v1284, %v1286
      %v1345 = vsel %vm1337, %v1286, %v1288
      %v1346 = vsel %vm1337, %v1290, %v1292
      %v1347 = vsel %vm1337, %v1292, %v1294
      %v1348 = vsel %vm1337, %v1296, %v1298
      %v1349 = vsel %vm1337, %v1298, %v1300
      %v1350 = vsel %vm1337, %v1302, %v1304
      %v1351 = vsel %vm1337, %v1304, %v1306
      %v1352 = vsel %vm1337, %v1308, %v1310
      %v1353 = vsel %vm1337, %v1310, %v1312
      %v1354 = vsel %vm1337, %v1314, %v1316
      %v1355 = vsel %vm1337, %v1316, %v1318
      %v1356 = vsel %vm1337, %v1320, %v1322
      %v1357 = vsel %vm1337, %v1322, %v1324
      %v1358 = vsel %vm1337, %v1326, %v1328
      %v1359 = vsel %vm1337, %v1328, %v1330
      %v1360 = vsel %vm1337, %v1332, %v1334
      %v1361 = vsel %vm1337, %v1334, %v1336
      %v1387 = vsel %vm1143, %v1254, 0
      %v1390 = vsel %vm1143, %v1256, 0
      %v1393 = vsel %vm1143, %v1258, 0
      %v1396 = vsel %vm1143, %v1260, 0
      %1398 = vmatprep.subr.bf16.mxu0 %v1353
      %1399 = vmatpush1.bf16.msra.mxu0 %v1352
      %1400 = vmatprep.subr.bf16.mxu0 %v1351
      %1401 = vmatpush1.bf16.msra.mxu0 %v1350
      %1402 = vmatprep.subr.bf16.mxu0 %v1349
      %1403 = vmatpush1.bf16.msra.mxu0 %v1348
      %1404 = vmatprep.subr.bf16.mxu0 %v1347
      %1405 = vmatpush1.bf16.msra.mxu0 %v1346
      %1406 = vmatprep.subr.bf16.mxu0 %v1345
      %1407 = vmatpush1.bf16.msra.mxu0 %v1344
      %1408 = vmatprep.subr.bf16.mxu0 %v1343
      %1409 = vmatpush1.bf16.msra.mxu0 %v1342
      %1410 = vmatprep.subr.bf16.mxu0 %v1341
      %1411 = vmatpush1.bf16.msra.mxu0 %v1340
      %1412 = vmatprep.subr.bf16.mxu0 %v1339
      %1413 = vmatpush1.bf16.msra.mxu0 %v1338
      %1414 = vmatprep.subr.bf16.mxu0 0
      %1415 = vmatpush2.bf16.msra.mxu0 0
      %1416 = vmatprep.subr.bf16.mxu0 0
      %1417 = vmatpush2.bf16.msra.mxu0 0
      %1418 = vmatprep.subr.bf16.mxu0 0
      %1419 = vmatpush2.bf16.msra.mxu0 0
      %1420 = vmatprep.subr.bf16.mxu0 0
      %1421 = vmatpush2.bf16.msra.mxu0 0
      %1422 = vmatprep.subr.bf16.mxu0 %v1361
      %1423 = vmatpush2.bf16.msra.mxu0 %v1360
      %1424 = vmatprep.subr.bf16.mxu0 %v1359
      %1425 = vmatpush2.bf16.msra.mxu0 %v1358
      %1426 = vmatprep.subr.bf16.mxu0 %v1357
      %1427 = vmatpush2.bf16.msra.mxu0 %v1356
      %1428 = vmatprep.subr.bf16.mxu0 %v1355
      %1429 = vmatpush2.bf16.msra.mxu0 %v1354
      %1430 = vmatprep.mubr.bf16.mxu0 %v1387
      %1431 = vmatmul.mubr.bf16.gmra.mxu0 %v1253
      %v1432 = vpop.f32.mrf.mxu0
      %v1433 = vadd.f32 %v1191, %v1432
      %v1434 = vpop.f32.mrf.mxu0
      %v1435 = vadd.f32 %v1193, %v1434
      %v1436 = vpop.f32.mrf.mxu0
      %v1437 = vadd.f32 %v1195, %v1436
      %v1438 = vpop.f32.mrf.mxu0
      %v1439 = vadd.f32 %v1197, %v1438
      %1440 = vmatprep.mubr.bf16.mxu0 %v1390
      %1441 = vmatmul.mubr.bf16.gmra.mxu0 %v1255
      %v1442 = vpop.f32.mrf.mxu0
      %v1443 = vadd.f32 %v1201, %v1442
      %v1444 = vpop.f32.mrf.mxu0
      %v1445 = vadd.f32 %v1203, %v1444
      %v1446 = vpop.f32.mrf.mxu0
      %v1447 = vadd.f32 %v1205, %v1446
      %v1448 = vpop.f32.mrf.mxu0
      %v1449 = vadd.f32 %v1207, %v1448
      %1450 = vmatprep.mubr.bf16.mxu0 %v1393
      %1451 = vmatmul.mubr.bf16.gmra.mxu0 %v1257
      %v1452 = vpop.f32.mrf.mxu0
      %v1453 = vadd.f32 %v1211, %v1452
      %v1454 = vpop.f32.mrf.mxu0
      %v1455 = vadd.f32 %v1213, %v1454
      %v1456 = vpop.f32.mrf.mxu0
      %v1457 = vadd.f32 %v1215, %v1456
      %v1458 = vpop.f32.mrf.mxu0
      %v1459 = vadd.f32 %v1217, %v1458
      %1460 = vmatprep.mubr.bf16.mxu0 %v1396
      %1461 = vmatmul.mubr.bf16.gmra.mxu0 %v1259
      %v1462 = vpop.f32.mrf.mxu0
      %v1463 = vadd.f32 %v1221, %v1462
      %v1464 = vpop.f32.mrf.mxu0
      %v1465 = vadd.f32 %v1223, %v1464
      %v1466 = vpop.f32.mrf.mxu0
      %v1467 = vadd.f32 %v1225, %v1466
      %v1468 = vpop.f32.mrf.mxu0
      %v1469 = vadd.f32 %v1227, %v1468
      %1470 = vdwg.mxu0
      %1471 = vrot.lane.b32.xlu0 %v438, 15
      %v1472 = vpop.permute.xlu0 %1471
      %v1473 = vrot.slane %v1472, 4
      %vm1474 = vcmask 121856
      %v1475 = vsel %vm1474, %v1473, %v1472
      %vm1476 = vcmp.ne.s16.totalorder %v1475, 0
      %vm1477 = vcmp.ne.s16.totalorder %v1473, 0
      %v1478 = vsel %vm1476, %v729, 0
      %v1479 = vsel %vm1477, %v730, 0
      %v1480 = vsel %vm1476, %v731, 0
      %v1481 = vsel %vm1477, %v732, 0
      %v1482 = vsel %vm1476, %v733, 0
      %v1483 = vsel %vm1477, %v734, 0
      %v1484 = vsel %vm1476, %v735, 0
      %v1485 = vsel %vm1477, %v736, 0
      %v1486 = vsel %vm1476, %v737, 0
      %v1487 = vsel %vm1477, %v738, 0
      %v1488 = vsel %vm1476, %v739, 0
      %v1489 = vsel %vm1477, %v740, 0
      %v1490 = vsel %vm1476, %v741, 0
      %v1491 = vsel %vm1477, %v742, 0
      %v1492 = vsel %vm1476, %v743, 0
      %v1493 = vsel %vm1477, %v744, 0
      %1494 = vrot.lane.b32.xlu0 %v467, 17
      %v1495 = vpop.permute.xlu0 %1494
      %v1496 = vrot.slane %v1495, 4
      %v1497 = vsel %vm1337, %v1496, %v1495
      %vm1498 = vcmp.ne.s16.totalorder %v1497, 0
      %vm1499 = vcmp.ne.s16.totalorder %v1496, 0
      %v1500 = vsel %vm1498, %v729, 0
      %v1501 = vsel %vm1499, %v730, 0
      %v1502 = vsel %vm1498, %v731, 0
      %v1503 = vsel %vm1499, %v732, 0
      %v1504 = vsel %vm1498, %v733, 0
      %v1505 = vsel %vm1499, %v734, 0
      %v1506 = vsel %vm1498, %v735, 0
      %v1507 = vsel %vm1499, %v736, 0
      %v1508 = vsel %vm1498, %v737, 0
      %v1509 = vsel %vm1499, %v738, 0
      %v1510 = vsel %vm1498, %v739, 0
      %v1511 = vsel %vm1499, %v740, 0
      %v1512 = vsel %vm1498, %v741, 0
      %v1513 = vsel %vm1499, %v742, 0
      %v1514 = vsel %vm1498, %v743, 0
      %v1515 = vsel %vm1499, %v744, 0
      %v1532 = vunpack.c.l.b16 %v1478
      %v1533 = vunpack.c.h.b16 %v1478
      %v1534 = vunpack.c.l.b16 %v1479
      %v1535 = vunpack.c.l.b16 %v1480
      %v1536 = vunpack.c.h.b16 %v1480
      %v1537 = vunpack.c.l.b16 %v1481
      %v1538 = vunpack.c.l.b16 %v1482
      %v1539 = vunpack.c.h.b16 %v1482
      %v1540 = vunpack.c.l.b16 %v1483
      %v1541 = vunpack.c.l.b16 %v1484
      %v1542 = vunpack.c.h.b16 %v1484
      %v1543 = vunpack.c.l.b16 %v1485
      %v1544 = vunpack.c.l.b16 %v1486
      %v1545 = vunpack.c.h.b16 %v1486
      %v1546 = vunpack.c.l.b16 %v1487
      %v1547 = vunpack.c.l.b16 %v1488
      %v1548 = vunpack.c.h.b16 %v1488
      %v1549 = vunpack.c.l.b16 %v1489
      %v1550 = vunpack.c.l.b16 %v1490
      %v1551 = vunpack.c.h.b16 %v1490
      %v1552 = vunpack.c.l.b16 %v1491
      %v1553 = vunpack.c.l.b16 %v1492
      %v1554 = vunpack.c.h.b16 %v1492
      %v1555 = vunpack.c.l.b16 %v1493
      %v1556 = vpack.c.b16 %v1535, %v1532
      %v1557 = vpack.c.b16 %v1536, %v1533
      %v1558 = vpack.c.b16 %v1537, %v1534
      %v1559 = vpack.c.b16 %v1541, %v1538
      %v1560 = vpack.c.b16 %v1542, %v1539
      %v1561 = vpack.c.b16 %v1543, %v1540
      %v1562 = vpack.c.b16 %v1547, %v1544
      %v1563 = vpack.c.b16 %v1548, %v1545
      %v1564 = vpack.c.b16 %v1549, %v1546
      %v1565 = vpack.c.b16 %v1553, %v1550
      %v1566 = vpack.c.b16 %v1554, %v1551
      %v1567 = vpack.c.b16 %v1555, %v1552
      %v1584 = vunpack.c.l.b16 %v729
      %v1585 = vunpack.c.h.b16 %v729
      %v1586 = vunpack.c.l.b16 %v730
      %v1587 = vunpack.c.l.b16 %v731
      %v1588 = vunpack.c.h.b16 %v731
      %v1589 = vunpack.c.l.b16 %v732
      %v1590 = vunpack.c.l.b16 %v733
      %v1591 = vunpack.c.h.b16 %v733
      %v1592 = vunpack.c.l.b16 %v734
      %v1593 = vunpack.c.l.b16 %v735
      %v1594 = vunpack.c.h.b16 %v735
      %v1595 = vunpack.c.l.b16 %v736
      %v1596 = vunpack.c.l.b16 %v737
      %v1597 = vunpack.c.h.b16 %v737
      %v1598 = vunpack.c.l.b16 %v738
      %v1599 = vunpack.c.l.b16 %v739
      %v1600 = vunpack.c.h.b16 %v739
      %v1601 = vunpack.c.l.b16 %v740
      %v1602 = vunpack.c.l.b16 %v741
      %v1603 = vunpack.c.h.b16 %v741
      %v1604 = vunpack.c.l.b16 %v742
      %v1605 = vunpack.c.l.b16 %v743
      %v1606 = vunpack.c.h.b16 %v743
      %v1607 = vunpack.c.l.b16 %v744
      %v1608 = vpack.c.b16 %v1587, %v1584
      %v1609 = vpack.c.b16 %v1588, %v1585
      %v1610 = vpack.c.b16 %v1589, %v1586
      %v1611 = vpack.c.b16 %v1593, %v1590
      %v1612 = vpack.c.b16 %v1594, %v1591
      %v1613 = vpack.c.b16 %v1595, %v1592
      %v1614 = vpack.c.b16 %v1599, %v1596
      %v1615 = vpack.c.b16 %v1600, %v1597
      %v1616 = vpack.c.b16 %v1601, %v1598
      %v1617 = vpack.c.b16 %v1605, %v1602
      %v1618 = vpack.c.b16 %v1606, %v1603
      %v1619 = vpack.c.b16 %v1607, %v1604
      %1620 = vrot.lane.b32.xlu0 %v1608, 127
      %v1621 = vpop.permute.xlu0 %1620
      %1622 = vrot.lane.b32.xlu0 %v1609, 127
      %v1623 = vpop.permute.xlu0 %1622
      %1624 = vrot.lane.b32.xlu0 %v1610, 127
      %v1625 = vpop.permute.xlu0 %1624
      %1626 = vrot.lane.b32.xlu0 %v1611, 127
      %v1627 = vpop.permute.xlu0 %1626
      %1628 = vrot.lane.b32.xlu0 %v1612, 127
      %v1629 = vpop.permute.xlu0 %1628
      %1630 = vrot.lane.b32.xlu0 %v1613, 127
      %v1631 = vpop.permute.xlu0 %1630
      %1632 = vrot.lane.b32.xlu0 %v1614, 127
      %v1633 = vpop.permute.xlu0 %1632
      %1634 = vrot.lane.b32.xlu0 %v1615, 127
      %v1635 = vpop.permute.xlu0 %1634
      %1636 = vrot.lane.b32.xlu0 %v1616, 127
      %v1637 = vpop.permute.xlu0 %1636
      %1638 = vrot.lane.b32.xlu0 %v1617, 127
      %v1639 = vpop.permute.xlu0 %1638
      %1640 = vrot.lane.b32.xlu0 %v1618, 127
      %v1641 = vpop.permute.xlu0 %1640
      %1642 = vrot.lane.b32.xlu0 %v1619, 127
      %v1643 = vpop.permute.xlu0 %1642
      %v1644 = vsel %vm619, %v1621, %v1623
      %v1645 = vsel %vm619, %v1623, %v1625
      %v1646 = vsel %vm619, %v1627, %v1629
      %v1647 = vsel %vm619, %v1629, %v1631
      %v1648 = vsel %vm619, %v1633, %v1635
      %v1649 = vsel %vm619, %v1635, %v1637
      %v1650 = vsel %vm619, %v1639, %v1641
      %v1651 = vsel %vm619, %v1641, %v1643
      %v1668 = vunpack.c.l.b16 %v1500
      %v1669 = vunpack.c.h.b16 %v1500
      %v1670 = vunpack.c.l.b16 %v1501
      %v1671 = vunpack.c.l.b16 %v1502
      %v1672 = vunpack.c.h.b16 %v1502
      %v1673 = vunpack.c.l.b16 %v1503
      %v1674 = vunpack.c.l.b16 %v1504
      %v1675 = vunpack.c.h.b16 %v1504
      %v1676 = vunpack.c.l.b16 %v1505
      %v1677 = vunpack.c.l.b16 %v1506
      %v1678 = vunpack.c.h.b16 %v1506
      %v1679 = vunpack.c.l.b16 %v1507
      %v1680 = vunpack.c.l.b16 %v1508
      %v1681 = vunpack.c.h.b16 %v1508
      %v1682 = vunpack.c.l.b16 %v1509
      %v1683 = vunpack.c.l.b16 %v1510
      %v1684 = vunpack.c.h.b16 %v1510
      %v1685 = vunpack.c.l.b16 %v1511
      %v1686 = vunpack.c.l.b16 %v1512
      %v1687 = vunpack.c.h.b16 %v1512
      %v1688 = vunpack.c.l.b16 %v1513
      %v1689 = vunpack.c.l.b16 %v1514
      %v1690 = vunpack.c.h.b16 %v1514
      %v1691 = vunpack.c.l.b16 %v1515
      %v1692 = vpack.c.b16 %v1671, %v1668
      %v1693 = vpack.c.b16 %v1672, %v1669
      %v1694 = vpack.c.b16 %v1673, %v1670
      %v1695 = vpack.c.b16 %v1677, %v1674
      %v1696 = vpack.c.b16 %v1678, %v1675
      %v1697 = vpack.c.b16 %v1679, %v1676
      %v1698 = vpack.c.b16 %v1683, %v1680
      %v1699 = vpack.c.b16 %v1684, %v1681
      %v1700 = vpack.c.b16 %v1685, %v1682
      %v1701 = vpack.c.b16 %v1689, %v1686
      %v1702 = vpack.c.b16 %v1690, %v1687
      %v1703 = vpack.c.b16 %v1691, %v1688
      %1704 = vrot.lane.b32.xlu0 %v1692, 126
      %v1705 = vpop.permute.xlu0 %1704
      %1706 = vrot.lane.b32.xlu0 %v1693, 126
      %v1707 = vpop.permute.xlu0 %1706
      %1708 = vrot.lane.b32.xlu0 %v1694, 126
      %v1709 = vpop.permute.xlu0 %1708
      %1710 = vrot.lane.b32.xlu0 %v1695, 126
      %v1711 = vpop.permute.xlu0 %1710
      %1712 = vrot.lane.b32.xlu0 %v1696, 126
      %v1713 = vpop.permute.xlu0 %1712
      %1714 = vrot.lane.b32.xlu0 %v1697, 126
      %v1715 = vpop.permute.xlu0 %1714
      %1716 = vrot.lane.b32.xlu0 %v1698, 126
      %v1717 = vpop.permute.xlu0 %1716
      %1718 = vrot.lane.b32.xlu0 %v1699, 126
      %v1719 = vpop.permute.xlu0 %1718
      %1720 = vrot.lane.b32.xlu0 %v1700, 126
      %v1721 = vpop.permute.xlu0 %1720
      %1722 = vrot.lane.b32.xlu0 %v1701, 126
      %v1723 = vpop.permute.xlu0 %1722
      %1724 = vrot.lane.b32.xlu0 %v1702, 126
      %v1725 = vpop.permute.xlu0 %1724
      %1726 = vrot.lane.b32.xlu0 %v1703, 126
      %v1727 = vpop.permute.xlu0 %1726
      %v1728 = vsel %vm704, %v1705, %v1707
      %v1729 = vsel %vm704, %v1707, %v1709
      %v1730 = vsel %vm704, %v1711, %v1713
      %v1731 = vsel %vm704, %v1713, %v1715
      %v1732 = vsel %vm704, %v1717, %v1719
      %v1733 = vsel %vm704, %v1719, %v1721
      %v1734 = vsel %vm704, %v1723, %v1725
      %v1735 = vsel %vm704, %v1725, %v1727
      %s1736 = scalar_lea.vmem %s1, 128
      %v1737 = vld [vmem:[%s1736] sm:$0xff]
      %v1738 = vld [vmem:[%s1736 + $0x8] sm:$0xff]
      %v1739 = vld [vmem:[%s1736 + $0x10] sm:$0xff]
      %v1740 = vld [vmem:[%s1736 + $0x18] sm:$0xff]
      %v1741 = vld [vmem:[%s1736 + $0x20] sm:$0xff]
      %v1742 = vld [vmem:[%s1736 + $0x28] sm:$0xff]
      %v1743 = vld [vmem:[%s1736 + $0x30] sm:$0xff]
      %v1744 = vld [vmem:[%s1736 + $0x38] sm:$0xff]
      %v1753 = vunpack.c.l.b16 %v1737
      %v1754 = vunpack.c.h.b16 %v1737
      %v1755 = vunpack.c.l.b16 %v1738
      %v1756 = vunpack.c.h.b16 %v1738
      %v1757 = vunpack.c.l.b16 %v1739
      %v1758 = vunpack.c.h.b16 %v1739
      %v1759 = vunpack.c.l.b16 %v1740
      %v1760 = vunpack.c.h.b16 %v1740
      %v1761 = vunpack.c.l.b16 %v1741
      %v1762 = vunpack.c.h.b16 %v1741
      %v1763 = vunpack.c.l.b16 %v1742
      %v1764 = vunpack.c.h.b16 %v1742
      %v1765 = vunpack.c.l.b16 %v1743
      %v1766 = vunpack.c.h.b16 %v1743
      %v1767 = vunpack.c.l.b16 %v1744
      %v1768 = vunpack.c.h.b16 %v1744
      %v1769 = vpack.c.b16 %v1755, %v1753
      %v1770 = vpack.c.b16 %v1756, %v1754
      %v1771 = vpack.c.b16 %v1759, %v1757
      %v1772 = vpack.c.b16 %v1760, %v1758
      %v1773 = vpack.c.b16 %v1763, %v1761
      %v1774 = vpack.c.b16 %v1764, %v1762
      %v1775 = vpack.c.b16 %v1767, %v1765
      %v1776 = vpack.c.b16 %v1768, %v1766
      %1781 = vrot.lane.b32.xlu0 %v1556, 113
      %v1782 = vpop.permute.xlu0 %1781
      %1783 = vrot.lane.b32.xlu0 %v1557, 113
      %v1784 = vpop.permute.xlu0 %1783
      %1785 = vrot.lane.b32.xlu0 %v1558, 113
      %v1786 = vpop.permute.xlu0 %1785
      %1787 = vrot.lane.b32.xlu0 %v1559, 113
      %v1788 = vpop.permute.xlu0 %1787
      %1789 = vrot.lane.b32.xlu0 %v1560, 113
      %v1790 = vpop.permute.xlu0 %1789
      %1791 = vrot.lane.b32.xlu0 %v1561, 113
      %v1792 = vpop.permute.xlu0 %1791
      %1793 = vrot.lane.b32.xlu0 %v1562, 113
      %v1794 = vpop.permute.xlu0 %1793
      %1795 = vrot.lane.b32.xlu0 %v1563, 113
      %v1796 = vpop.permute.xlu0 %1795
      %1797 = vrot.lane.b32.xlu0 %v1564, 113
      %v1798 = vpop.permute.xlu0 %1797
      %1799 = vrot.lane.b32.xlu0 %v1565, 113
      %v1800 = vpop.permute.xlu0 %1799
      %1801 = vrot.lane.b32.xlu0 %v1566, 113
      %v1802 = vpop.permute.xlu0 %1801
      %1803 = vrot.lane.b32.xlu0 %v1567, 113
      %v1804 = vpop.permute.xlu0 %1803
      %1805 = vrot.lane.b32.xlu0 %v1644, 113
      %v1806 = vpop.permute.xlu0 %1805
      %1807 = vrot.lane.b32.xlu0 %v1645, 113
      %v1808 = vpop.permute.xlu0 %1807
      %1809 = vrot.lane.b32.xlu0 %v1625, 113
      %v1810 = vpop.permute.xlu0 %1809
      %1811 = vrot.lane.b32.xlu0 %v1646, 113
      %v1812 = vpop.permute.xlu0 %1811
      %1813 = vrot.lane.b32.xlu0 %v1647, 113
      %v1814 = vpop.permute.xlu0 %1813
      %1815 = vrot.lane.b32.xlu0 %v1631, 113
      %v1816 = vpop.permute.xlu0 %1815
      %1817 = vrot.lane.b32.xlu0 %v1648, 113
      %v1818 = vpop.permute.xlu0 %1817
      %1819 = vrot.lane.b32.xlu0 %v1649, 113
      %v1820 = vpop.permute.xlu0 %1819
      %1821 = vrot.lane.b32.xlu0 %v1637, 113
      %v1822 = vpop.permute.xlu0 %1821
      %1823 = vrot.lane.b32.xlu0 %v1650, 113
      %v1824 = vpop.permute.xlu0 %1823
      %1825 = vrot.lane.b32.xlu0 %v1651, 113
      %v1826 = vpop.permute.xlu0 %1825
      %1827 = vrot.lane.b32.xlu0 %v1643, 113
      %v1828 = vpop.permute.xlu0 %1827
      %1829 = vrot.lane.b32.xlu0 %v1728, 113
      %v1830 = vpop.permute.xlu0 %1829
      %1831 = vrot.lane.b32.xlu0 %v1729, 113
      %v1832 = vpop.permute.xlu0 %1831
      %1833 = vrot.lane.b32.xlu0 %v1709, 113
      %v1834 = vpop.permute.xlu0 %1833
      %1835 = vrot.lane.b32.xlu0 %v1730, 113
      %v1836 = vpop.permute.xlu0 %1835
      %1837 = vrot.lane.b32.xlu0 %v1731, 113
      %v1838 = vpop.permute.xlu0 %1837
      %1839 = vrot.lane.b32.xlu0 %v1715, 113
      %v1840 = vpop.permute.xlu0 %1839
      %1841 = vrot.lane.b32.xlu0 %v1732, 113
      %v1842 = vpop.permute.xlu0 %1841
      %1843 = vrot.lane.b32.xlu0 %v1733, 113
      %v1844 = vpop.permute.xlu0 %1843
      %1845 = vrot.lane.b32.xlu0 %v1721, 113
      %v1846 = vpop.permute.xlu0 %1845
      %1847 = vrot.lane.b32.xlu0 %v1734, 113
      %v1848 = vpop.permute.xlu0 %1847
      %1849 = vrot.lane.b32.xlu0 %v1735, 113
      %v1850 = vpop.permute.xlu0 %1849
      %1851 = vrot.lane.b32.xlu0 %v1727, 113
      %v1852 = vpop.permute.xlu0 %1851
      %v1853 = vsel %vm471, %v1782, %v1784
      %v1854 = vsel %vm471, %v1784, %v1786
      %v1855 = vsel %vm471, %v1788, %v1790
      %v1856 = vsel %vm471, %v1790, %v1792
      %v1857 = vsel %vm471, %v1794, %v1796
      %v1858 = vsel %vm471, %v1796, %v1798
      %v1859 = vsel %vm471, %v1800, %v1802
      %v1860 = vsel %vm471, %v1802, %v1804
      %v1861 = vsel %vm471, %v1806, %v1808
      %v1862 = vsel %vm471, %v1808, %v1810
      %v1863 = vsel %vm471, %v1812, %v1814
      %v1864 = vsel %vm471, %v1814, %v1816
      %v1865 = vsel %vm471, %v1818, %v1820
      %v1866 = vsel %vm471, %v1820, %v1822
      %v1867 = vsel %vm471, %v1824, %v1826
      %v1868 = vsel %vm471, %v1826, %v1828
      %v1869 = vsel %vm471, %v1830, %v1832
      %v1870 = vsel %vm471, %v1832, %v1834
      %v1871 = vsel %vm471, %v1836, %v1838
      %v1872 = vsel %vm471, %v1838, %v1840
      %v1873 = vsel %vm471, %v1842, %v1844
      %v1874 = vsel %vm471, %v1844, %v1846
      %v1875 = vsel %vm471, %v1848, %v1850
      %v1876 = vsel %vm471, %v1850, %v1852
      %v1902 = vsel %vm1143, %v1770, 0
      %v1905 = vsel %vm1143, %v1772, 0
      %v1908 = vsel %vm1143, %v1774, 0
      %v1911 = vsel %vm1143, %v1776, 0
      %1913 = vmatprep.subr.bf16.mxu0 %v1868
      %1914 = vmatpush1.bf16.msra.mxu0 %v1867
      %1915 = vmatprep.subr.bf16.mxu0 %v1866
      %1916 = vmatpush1.bf16.msra.mxu0 %v1865
      %1917 = vmatprep.subr.bf16.mxu0 %v1864
      %1918 = vmatpush1.bf16.msra.mxu0 %v1863
      %1919 = vmatprep.subr.bf16.mxu0 %v1862
      %1920 = vmatpush1.bf16.msra.mxu0 %v1861
      %1921 = vmatprep.subr.bf16.mxu0 %v1860
      %1922 = vmatpush1.bf16.msra.mxu0 %v1859
      %1923 = vmatprep.subr.bf16.mxu0 %v1858
      %1924 = vmatpush1.bf16.msra.mxu0 %v1857
      %1925 = vmatprep.subr.bf16.mxu0 %v1856
      %1926 = vmatpush1.bf16.msra.mxu0 %v1855
      %1927 = vmatprep.subr.bf16.mxu0 %v1854
      %1928 = vmatpush1.bf16.msra.mxu0 %v1853
      %1929 = vmatprep.subr.bf16.mxu0 0
      %1930 = vmatpush2.bf16.msra.mxu0 0
      %1931 = vmatprep.subr.bf16.mxu0 0
      %1932 = vmatpush2.bf16.msra.mxu0 0
      %1933 = vmatprep.subr.bf16.mxu0 0
      %1934 = vmatpush2.bf16.msra.mxu0 0
      %1935 = vmatprep.subr.bf16.mxu0 0
      %1936 = vmatpush2.bf16.msra.mxu0 0
      %1937 = vmatprep.subr.bf16.mxu0 %v1876
      %1938 = vmatpush2.bf16.msra.mxu0 %v1875
      %1939 = vmatprep.subr.bf16.mxu0 %v1874
      %1940 = vmatpush2.bf16.msra.mxu0 %v1873
      %1941 = vmatprep.subr.bf16.mxu0 %v1872
      %1942 = vmatpush2.bf16.msra.mxu0 %v1871
      %1943 = vmatprep.subr.bf16.mxu0 %v1870
      %1944 = vmatpush2.bf16.msra.mxu0 %v1869
      %1945 = vmatprep.mubr.bf16.mxu0 %v1902
      %1946 = vmatmul.mubr.bf16.gmra.mxu0 %v1769
      %v1947 = vpop.f32.mrf.mxu0
      %v1948 = vadd.f32 0.0, %v1947
      %v1949 = vpop.f32.mrf.mxu0
      %v1950 = vadd.f32 0.0, %v1949
      %v1951 = vpop.f32.mrf.mxu0
      %v1952 = vadd.f32 0.0, %v1951
      %v1953 = vpop.f32.mrf.mxu0
      %v1954 = vadd.f32 0.0, %v1953
      %1955 = vmatprep.mubr.bf16.mxu0 %v1905
      %1956 = vmatmul.mubr.bf16.gmra.mxu0 %v1771
      %v1957 = vpop.f32.mrf.mxu0
      %v1958 = vadd.f32 0.0, %v1957
      %v1959 = vpop.f32.mrf.mxu0
      %v1960 = vadd.f32 0.0, %v1959
      %v1961 = vpop.f32.mrf.mxu0
      %v1962 = vadd.f32 0.0, %v1961
      %v1963 = vpop.f32.mrf.mxu0
      %v1964 = vadd.f32 0.0, %v1963
      %1965 = vmatprep.mubr.bf16.mxu0 %v1908
      %1966 = vmatmul.mubr.bf16.gmra.mxu0 %v1773
      %v1967 = vpop.f32.mrf.mxu0
      %v1968 = vadd.f32 0.0, %v1967
      %v1969 = vpop.f32.mrf.mxu0
      %v1970 = vadd.f32 0.0, %v1969
      %v1971 = vpop.f32.mrf.mxu0
      %v1972 = vadd.f32 0.0, %v1971
      %v1973 = vpop.f32.mrf.mxu0
      %v1974 = vadd.f32 0.0, %v1973
      %1975 = vmatprep.mubr.bf16.mxu0 %v1911
      %1976 = vmatmul.mubr.bf16.gmra.mxu0 %v1775
      %v1977 = vpop.f32.mrf.mxu0
      %v1978 = vadd.f32 0.0, %v1977
      %v1979 = vpop.f32.mrf.mxu0
      %v1980 = vadd.f32 0.0, %v1979
      %v1981 = vpop.f32.mrf.mxu0
      %v1982 = vadd.f32 0.0, %v1981
      %v1983 = vpop.f32.mrf.mxu0
      %v1984 = vadd.f32 0.0, %v1983
      %1985 = vdwg.mxu0
      %v1986 = vadd.f32 %v1433, %v1948
      %v1987 = vadd.f32 %v1435, %v1950
      %v1988 = vadd.f32 %v1437, %v1952
      %v1989 = vadd.f32 %v1439, %v1954
      %v1990 = vadd.f32 %v1443, %v1958
      %v1991 = vadd.f32 %v1445, %v1960
      %v1992 = vadd.f32 %v1447, %v1962
      %v1993 = vadd.f32 %v1449, %v1964
      %v1994 = vadd.f32 %v1453, %v1968
      %v1995 = vadd.f32 %v1455, %v1970
      %v1996 = vadd.f32 %v1457, %v1972
      %v1997 = vadd.f32 %v1459, %v1974
      %v1998 = vadd.f32 %v1463, %v1978
      %v1999 = vadd.f32 %v1465, %v1980
      %v2000 = vadd.f32 %v1467, %v1982
      %v2001 = vadd.f32 %v1469, %v1984
      %v2002 = vld [vmem:[%s2] sm:$0xff]
      %v2003 = vld [vmem:[%s2 + $0x8] sm:$0xff]
      %v2004 = vld [vmem:[%s2 + $0x10] sm:$0xff]
      %v2005 = vld [vmem:[%s2 + $0x18] sm:$0xff]
      %v2006 = vld [vmem:[%s2 + $0x20] sm:$0xff]
      %v2007 = vld [vmem:[%s2 + $0x28] sm:$0xff]
      %v2008 = vld [vmem:[%s2 + $0x30] sm:$0xff]
      %v2009 = vld [vmem:[%s2 + $0x38] sm:$0xff]
      %2011 = vset.pattern.permute.xlu0 0
      %2012 = vperm.xlu0 %2011, %v2002
      %v2013 = vpop.permute.xlu0 %2012
      %2016 = vset.pattern.permute.xlu0 0
      %2017 = vperm.xlu0 %2016, %v2003
      %v2018 = vpop.permute.xlu0 %2017
      %2021 = vset.pattern.permute.xlu0 0
      %2022 = vperm.xlu0 %2021, %v2004
      %v2023 = vpop.permute.xlu0 %2022
      %2026 = vset.pattern.permute.xlu0 0
      %2027 = vperm.xlu0 %2026, %v2005
      %v2028 = vpop.permute.xlu0 %2027
      %2031 = vset.pattern.permute.xlu0 0
      %2032 = vperm.xlu0 %2031, %v2006
      %v2033 = vpop.permute.xlu0 %2032
      %2036 = vset.pattern.permute.xlu0 0
      %2037 = vperm.xlu0 %2036, %v2007
      %v2038 = vpop.permute.xlu0 %2037
      %2041 = vset.pattern.permute.xlu0 0
      %2042 = vperm.xlu0 %2041, %v2008
      %v2043 = vpop.permute.xlu0 %2042
      %2046 = vset.pattern.permute.xlu0 0
      %2047 = vperm.xlu0 %2046, %v2009
      %v2048 = vpop.permute.xlu0 %2047
      %v2050 = vmul.f32 %v1986, %v2013
      %v2051 = vmul.f32 %v1987, %v2013
      %v2052 = vmul.f32 %v1988, %v2018
      %v2053 = vmul.f32 %v1989, %v2018
      %v2054 = vmul.f32 %v1990, %v2023
      %v2055 = vmul.f32 %v1991, %v2023
      %v2056 = vmul.f32 %v1992, %v2028
      %v2057 = vmul.f32 %v1993, %v2028
      %v2058 = vmul.f32 %v1994, %v2033
      %v2059 = vmul.f32 %v1995, %v2033
      %v2060 = vmul.f32 %v1996, %v2038
      %v2061 = vmul.f32 %v1997, %v2038
      %v2062 = vmul.f32 %v1998, %v2043
      %v2063 = vmul.f32 %v1999, %v2043
      %v2064 = vmul.f32 %v2000, %v2048
      %v2065 = vmul.f32 %v2001, %v2048
      %v2066 = vld [vmem:[%s3] sm:$0xff]
      %v2067 = vld [vmem:[%s3 + $0x8] sm:$0xff]
      %v2068 = vld [vmem:[%s3 + $0x10] sm:$0xff]
      %v2069 = vld [vmem:[%s3 + $0x18] sm:$0xff]
      %v2070 = vld [vmem:[%s3 + $0x20] sm:$0xff]
      %v2071 = vld [vmem:[%s3 + $0x28] sm:$0xff]
      %v2072 = vld [vmem:[%s3 + $0x30] sm:$0xff]
      %v2073 = vld [vmem:[%s3 + $0x38] sm:$0xff]
      %2075 = vset.pattern.permute.xlu0 0
      %2076 = vperm.xlu0 %2075, %v2066
      %v2077 = vpop.permute.xlu0 %2076
      %2080 = vset.pattern.permute.xlu0 0
      %2081 = vperm.xlu0 %2080, %v2067
      %v2082 = vpop.permute.xlu0 %2081
      %2085 = vset.pattern.permute.xlu0 0
      %2086 = vperm.xlu0 %2085, %v2068
      %v2087 = vpop.permute.xlu0 %2086
      %2090 = vset.pattern.permute.xlu0 0
      %2091 = vperm.xlu0 %2090, %v2069
      %v2092 = vpop.permute.xlu0 %2091
      %2095 = vset.pattern.permute.xlu0 0
      %2096 = vperm.xlu0 %2095, %v2070
      %v2097 = vpop.permute.xlu0 %2096
      %2100 = vset.pattern.permute.xlu0 0
      %2101 = vperm.xlu0 %2100, %v2071
      %v2102 = vpop.permute.xlu0 %2101
      %2105 = vset.pattern.permute.xlu0 0
      %2106 = vperm.xlu0 %2105, %v2072
      %v2107 = vpop.permute.xlu0 %2106
      %2110 = vset.pattern.permute.xlu0 0
      %2111 = vperm.xlu0 %2110, %v2073
      %v2112 = vpop.permute.xlu0 %2111
      %v2114 = vadd.f32 %v2050, %v2077
      %v2115 = vadd.f32 %v2051, %v2077
      %v2116 = vadd.f32 %v2052, %v2082
      %v2117 = vadd.f32 %v2053, %v2082
      %v2118 = vadd.f32 %v2054, %v2087
      %v2119 = vadd.f32 %v2055, %v2087
      %v2120 = vadd.f32 %v2056, %v2092
      %v2121 = vadd.f32 %v2057, %v2092
      %v2122 = vadd.f32 %v2058, %v2097
      %v2123 = vadd.f32 %v2059, %v2097
      %v2124 = vadd.f32 %v2060, %v2102
      %v2125 = vadd.f32 %v2061, %v2102
      %v2126 = vadd.f32 %v2062, %v2107
      %v2127 = vadd.f32 %v2063, %v2107
      %v2128 = vadd.f32 %v2064, %v2112
      %v2129 = vadd.f32 %v2065, %v2112
      %vm2130 = vcmp.ge.f32.partialorder %v2114, 0.0
      %vm2131 = vcmp.ge.f32.partialorder %v2115, 0.0
      %vm2132 = vcmp.ge.f32.partialorder %v2116, 0.0
      %vm2133 = vcmp.ge.f32.partialorder %v2117, 0.0
      %vm2134 = vcmp.ge.f32.partialorder %v2118, 0.0
      %vm2135 = vcmp.ge.f32.partialorder %v2119, 0.0
      %vm2136 = vcmp.ge.f32.partialorder %v2120, 0.0
      %vm2137 = vcmp.ge.f32.partialorder %v2121, 0.0
      %vm2138 = vcmp.ge.f32.partialorder %v2122, 0.0
      %vm2139 = vcmp.ge.f32.partialorder %v2123, 0.0
      %vm2140 = vcmp.ge.f32.partialorder %v2124, 0.0
      %vm2141 = vcmp.ge.f32.partialorder %v2125, 0.0
      %vm2142 = vcmp.ge.f32.partialorder %v2126, 0.0
      %vm2143 = vcmp.ge.f32.partialorder %v2127, 0.0
      %vm2144 = vcmp.ge.f32.partialorder %v2128, 0.0
      %vm2145 = vcmp.ge.f32.partialorder %v2129, 0.0
      %v2146 = vmul.f32 %v2114, 0.2
      %v2147 = vmul.f32 %v2115, 0.2
      %v2148 = vmul.f32 %v2116, 0.2
      %v2149 = vmul.f32 %v2117, 0.2
      %v2150 = vmul.f32 %v2118, 0.2
      %v2151 = vmul.f32 %v2119, 0.2
      %v2152 = vmul.f32 %v2120, 0.2
      %v2153 = vmul.f32 %v2121, 0.2
      %v2154 = vmul.f32 %v2122, 0.2
      %v2155 = vmul.f32 %v2123, 0.2
      %v2156 = vmul.f32 %v2124, 0.2
      %v2157 = vmul.f32 %v2125, 0.2
      %v2158 = vmul.f32 %v2126, 0.2
      %v2159 = vmul.f32 %v2127, 0.2
      %v2160 = vmul.f32 %v2128, 0.2
      %v2161 = vmul.f32 %v2129, 0.2
      %v2162 = vsel %vm2130, %v2114, %v2146
      %v2163 = vsel %vm2131, %v2115, %v2147
      %v2164 = vsel %vm2132, %v2116, %v2148
      %v2165 = vsel %vm2133, %v2117, %v2149
      %v2166 = vsel %vm2134, %v2118, %v2150
      %v2167 = vsel %vm2135, %v2119, %v2151
      %v2168 = vsel %vm2136, %v2120, %v2152
      %v2169 = vsel %vm2137, %v2121, %v2153
      %v2170 = vsel %vm2138, %v2122, %v2154
      %v2171 = vsel %vm2139, %v2123, %v2155
      %v2172 = vsel %vm2140, %v2124, %v2156
      %v2173 = vsel %vm2141, %v2125, %v2157
      %v2174 = vsel %vm2142, %v2126, %v2158
      %v2175 = vsel %vm2143, %v2127, %v2159
      %v2176 = vsel %vm2144, %v2128, %v2160
      %v2177 = vsel %vm2145, %v2129, %v2161
      %v2178 = vpack.c.bf16 %v2164, %v2162
      %v2179 = vpack.c.bf16 %v2165, %v2163
      %v2180 = vpack.c.bf16 %v2168, %v2166
      %v2181 = vpack.c.bf16 %v2169, %v2167
      %v2182 = vpack.c.bf16 %v2172, %v2170
      %v2183 = vpack.c.bf16 %v2173, %v2171
      %v2184 = vpack.c.bf16 %v2176, %v2174
      %v2185 = vpack.c.bf16 %v2177, %v2175
      %v2194 = vunpack.c.l.b16 %v2178
      %v2195 = vunpack.c.l.b16 %v2179
      %v2196 = vunpack.c.h.b16 %v2178
      %v2197 = vunpack.c.h.b16 %v2179
      %v2198 = vunpack.c.l.b16 %v2180
      %v2199 = vunpack.c.l.b16 %v2181
      %v2200 = vunpack.c.h.b16 %v2180
      %v2201 = vunpack.c.h.b16 %v2181
      %v2202 = vunpack.c.l.b16 %v2182
      %v2203 = vunpack.c.l.b16 %v2183
      %v2204 = vunpack.c.h.b16 %v2182
      %v2205 = vunpack.c.h.b16 %v2183
      %v2206 = vunpack.c.l.b16 %v2184
      %v2207 = vunpack.c.l.b16 %v2185
      %v2208 = vunpack.c.h.b16 %v2184
      %v2209 = vunpack.c.h.b16 %v2185
      %v2210 = vpack.c.b16 %v2195, %v2194
      %v2211 = vpack.c.b16 %v2197, %v2196
      %v2212 = vpack.c.b16 %v2199, %v2198
      %v2213 = vpack.c.b16 %v2201, %v2200
      %v2214 = vpack.c.b16 %v2203, %v2202
      %v2215 = vpack.c.b16 %v2205, %v2204
      %v2216 = vpack.c.b16 %v2207, %v2206
      %v2217 = vpack.c.b16 %v2209, %v2208
      %2226 = vst [vmem:[#allocation3 + $0x4] sm:$0xff] %v2210
      %2227 = vst [vmem:[#allocation3 + $0x14] sm:$0xff] %v2211
      %2228 = vst [vmem:[#allocation3 + $0x24] sm:$0xff] %v2212
      %2229 = vst [vmem:[#allocation3 + $0x34] sm:$0xff] %v2213
      %2230 = vst [vmem:[#allocation3 + $0x44] sm:$0xff] %v2214
      %2231 = vst [vmem:[#allocation3 + $0x54] sm:$0xff] %v2215
      %2232 = vst [vmem:[#allocation3 + $0x64] sm:$0xff] %v2216
      %2233 = vst [vmem:[#allocation3 + $0x74] sm:$0xff] %v2217
      %v2234 = vld [vmem:[#allocation3] sm:$0xff]
      %v2235 = vld [vmem:[#allocation3 + $0x8] sm:$0xf]
      %v2236 = vld [vmem:[#allocation3 + $0x10] sm:$0xff]
      %v2237 = vld [vmem:[#allocation3 + $0x18] sm:$0xf]
      %v2238 = vld [vmem:[#allocation3 + $0x20] sm:$0xff]
      %v2239 = vld [vmem:[#allocation3 + $0x28] sm:$0xf]
      %v2240 = vld [vmem:[#allocation3 + $0x30] sm:$0xff]
      %v2241 = vld [vmem:[#allocation3 + $0x38] sm:$0xf]
      %v2242 = vld [vmem:[#allocation3 + $0x40] sm:$0xff]
      %v2243 = vld [vmem:[#allocation3 + $0x48] sm:$0xf]
      %v2244 = vld [vmem:[#allocation3 + $0x50] sm:$0xff]
      %v2245 = vld [vmem:[#allocation3 + $0x58] sm:$0xf]
      %v2246 = vld [vmem:[#allocation3 + $0x60] sm:$0xff]
      %v2247 = vld [vmem:[#allocation3 + $0x68] sm:$0xf]
      %v2248 = vld [vmem:[#allocation3 + $0x70] sm:$0xff]
      %v2249 = vld [vmem:[#allocation3 + $0x78] sm:$0xf]
      %v2250 = vsel %vm444, %v2234, 0
      %v2251 = vsel %vm445, %v2235, 0
      %v2252 = vsel %vm444, %v2236, 0
      %v2253 = vsel %vm445, %v2237, 0
      %v2254 = vsel %vm444, %v2238, 0
      %v2255 = vsel %vm445, %v2239, 0
      %v2256 = vsel %vm444, %v2240, 0
      %v2257 = vsel %vm445, %v2241, 0
      %v2258 = vsel %vm444, %v2242, 0
      %v2259 = vsel %vm445, %v2243, 0
      %v2260 = vsel %vm444, %v2244, 0
      %v2261 = vsel %vm445, %v2245, 0
      %v2262 = vsel %vm444, %v2246, 0
      %v2263 = vsel %vm445, %v2247, 0
      %v2264 = vsel %vm444, %v2248, 0
      %v2265 = vsel %vm445, %v2249, 0
      %v2266 = vsel %vm473, %v2234, 0
      %v2267 = vsel %vm474, %v2235, 0
      %v2268 = vsel %vm473, %v2236, 0
      %v2269 = vsel %vm474, %v2237, 0
      %v2270 = vsel %vm473, %v2238, 0
      %v2271 = vsel %vm474, %v2239, 0
      %v2272 = vsel %vm473, %v2240, 0
      %v2273 = vsel %vm474, %v2241, 0
      %v2274 = vsel %vm473, %v2242, 0
      %v2275 = vsel %vm474, %v2243, 0
      %v2276 = vsel %vm473, %v2244, 0
      %v2277 = vsel %vm474, %v2245, 0
      %v2278 = vsel %vm473, %v2246, 0
      %v2279 = vsel %vm474, %v2247, 0
      %v2280 = vsel %vm473, %v2248, 0
      %v2281 = vsel %vm474, %v2249, 0
      %v2298 = vunpack.c.l.b16 %v2250
      %v2299 = vunpack.c.h.b16 %v2250
      %v2300 = vunpack.c.l.b16 %v2251
      %v2301 = vunpack.c.l.b16 %v2252
      %v2302 = vunpack.c.h.b16 %v2252
      %v2303 = vunpack.c.l.b16 %v2253
      %v2304 = vunpack.c.l.b16 %v2254
      %v2305 = vunpack.c.h.b16 %v2254
      %v2306 = vunpack.c.l.b16 %v2255
      %v2307 = vunpack.c.l.b16 %v2256
      %v2308 = vunpack.c.h.b16 %v2256
      %v2309 = vunpack.c.l.b16 %v2257
      %v2310 = vunpack.c.l.b16 %v2258
      %v2311 = vunpack.c.h.b16 %v2258
      %v2312 = vunpack.c.l.b16 %v2259
      %v2313 = vunpack.c.l.b16 %v2260
      %v2314 = vunpack.c.h.b16 %v2260
      %v2315 = vunpack.c.l.b16 %v2261
      %v2316 = vunpack.c.l.b16 %v2262
      %v2317 = vunpack.c.h.b16 %v2262
      %v2318 = vunpack.c.l.b16 %v2263
      %v2319 = vunpack.c.l.b16 %v2264
      %v2320 = vunpack.c.h.b16 %v2264
      %v2321 = vunpack.c.l.b16 %v2265
      %v2322 = vpack.c.b16 %v2301, %v2298
      %v2323 = vpack.c.b16 %v2302, %v2299
      %v2324 = vpack.c.b16 %v2303, %v2300
      %v2325 = vpack.c.b16 %v2307, %v2304
      %v2326 = vpack.c.b16 %v2308, %v2305
      %v2327 = vpack.c.b16 %v2309, %v2306
      %v2328 = vpack.c.b16 %v2313, %v2310
      %v2329 = vpack.c.b16 %v2314, %v2311
      %v2330 = vpack.c.b16 %v2315, %v2312
      %v2331 = vpack.c.b16 %v2319, %v2316
      %v2332 = vpack.c.b16 %v2320, %v2317
      %v2333 = vpack.c.b16 %v2321, %v2318
      %v2350 = vunpack.c.l.b16 %v2234
      %v2351 = vunpack.c.h.b16 %v2234
      %v2352 = vunpack.c.l.b16 %v2235
      %v2353 = vunpack.c.l.b16 %v2236
      %v2354 = vunpack.c.h.b16 %v2236
      %v2355 = vunpack.c.l.b16 %v2237
      %v2356 = vunpack.c.l.b16 %v2238
      %v2357 = vunpack.c.h.b16 %v2238
      %v2358 = vunpack.c.l.b16 %v2239
      %v2359 = vunpack.c.l.b16 %v2240
      %v2360 = vunpack.c.h.b16 %v2240
      %v2361 = vunpack.c.l.b16 %v2241
      %v2362 = vunpack.c.l.b16 %v2242
      %v2363 = vunpack.c.h.b16 %v2242
      %v2364 = vunpack.c.l.b16 %v2243
      %v2365 = vunpack.c.l.b16 %v2244
      %v2366 = vunpack.c.h.b16 %v2244
      %v2367 = vunpack.c.l.b16 %v2245
      %v2368 = vunpack.c.l.b16 %v2246
      %v2369 = vunpack.c.h.b16 %v2246
      %v2370 = vunpack.c.l.b16 %v2247
      %v2371 = vunpack.c.l.b16 %v2248
      %v2372 = vunpack.c.h.b16 %v2248
      %v2373 = vunpack.c.l.b16 %v2249
      %v2374 = vpack.c.b16 %v2353, %v2350
      %v2375 = vpack.c.b16 %v2354, %v2351
      %v2376 = vpack.c.b16 %v2355, %v2352
      %v2377 = vpack.c.b16 %v2359, %v2356
      %v2378 = vpack.c.b16 %v2360, %v2357
      %v2379 = vpack.c.b16 %v2361, %v2358
      %v2380 = vpack.c.b16 %v2365, %v2362
      %v2381 = vpack.c.b16 %v2366, %v2363
      %v2382 = vpack.c.b16 %v2367, %v2364
      %v2383 = vpack.c.b16 %v2371, %v2368
      %v2384 = vpack.c.b16 %v2372, %v2369
      %v2385 = vpack.c.b16 %v2373, %v2370
      %2386 = vrot.lane.b32.xlu0 %v2374, 127
      %v2387 = vpop.permute.xlu0 %2386
      %2388 = vrot.lane.b32.xlu0 %v2375, 127
      %v2389 = vpop.permute.xlu0 %2388
      %2390 = vrot.lane.b32.xlu0 %v2376, 127
      %v2391 = vpop.permute.xlu0 %2390
      %2392 = vrot.lane.b32.xlu0 %v2377, 127
      %v2393 = vpop.permute.xlu0 %2392
      %2394 = vrot.lane.b32.xlu0 %v2378, 127
      %v2395 = vpop.permute.xlu0 %2394
      %2396 = vrot.lane.b32.xlu0 %v2379, 127
      %v2397 = vpop.permute.xlu0 %2396
      %2398 = vrot.lane.b32.xlu0 %v2380, 127
      %v2399 = vpop.permute.xlu0 %2398
      %2400 = vrot.lane.b32.xlu0 %v2381, 127
      %v2401 = vpop.permute.xlu0 %2400
      %2402 = vrot.lane.b32.xlu0 %v2382, 127
      %v2403 = vpop.permute.xlu0 %2402
      %2404 = vrot.lane.b32.xlu0 %v2383, 127
      %v2405 = vpop.permute.xlu0 %2404
      %2406 = vrot.lane.b32.xlu0 %v2384, 127
      %v2407 = vpop.permute.xlu0 %2406
      %2408 = vrot.lane.b32.xlu0 %v2385, 127
      %v2409 = vpop.permute.xlu0 %2408
      %v2410 = vsel %vm619, %v2387, %v2389
      %v2411 = vsel %vm619, %v2389, %v2391
      %v2412 = vsel %vm619, %v2393, %v2395
      %v2413 = vsel %vm619, %v2395, %v2397
      %v2414 = vsel %vm619, %v2399, %v2401
      %v2415 = vsel %vm619, %v2401, %v2403
      %v2416 = vsel %vm619, %v2405, %v2407
      %v2417 = vsel %vm619, %v2407, %v2409
      %v2434 = vunpack.c.l.b16 %v2266
      %v2435 = vunpack.c.h.b16 %v2266
      %v2436 = vunpack.c.l.b16 %v2267
      %v2437 = vunpack.c.l.b16 %v2268
      %v2438 = vunpack.c.h.b16 %v2268
      %v2439 = vunpack.c.l.b16 %v2269
      %v2440 = vunpack.c.l.b16 %v2270
      %v2441 = vunpack.c.h.b16 %v2270
      %v2442 = vunpack.c.l.b16 %v2271
      %v2443 = vunpack.c.l.b16 %v2272
      %v2444 = vunpack.c.h.b16 %v2272
      %v2445 = vunpack.c.l.b16 %v2273
      %v2446 = vunpack.c.l.b16 %v2274
      %v2447 = vunpack.c.h.b16 %v2274
      %v2448 = vunpack.c.l.b16 %v2275
      %v2449 = vunpack.c.l.b16 %v2276
      %v2450 = vunpack.c.h.b16 %v2276
      %v2451 = vunpack.c.l.b16 %v2277
      %v2452 = vunpack.c.l.b16 %v2278
      %v2453 = vunpack.c.h.b16 %v2278
      %v2454 = vunpack.c.l.b16 %v2279
      %v2455 = vunpack.c.l.b16 %v2280
      %v2456 = vunpack.c.h.b16 %v2280
      %v2457 = vunpack.c.l.b16 %v2281
      %v2458 = vpack.c.b16 %v2437, %v2434
      %v2459 = vpack.c.b16 %v2438, %v2435
      %v2460 = vpack.c.b16 %v2439, %v2436
      %v2461 = vpack.c.b16 %v2443, %v2440
      %v2462 = vpack.c.b16 %v2444, %v2441
      %v2463 = vpack.c.b16 %v2445, %v2442
      %v2464 = vpack.c.b16 %v2449, %v2446
      %v2465 = vpack.c.b16 %v2450, %v2447
      %v2466 = vpack.c.b16 %v2451, %v2448
      %v2467 = vpack.c.b16 %v2455, %v2452
      %v2468 = vpack.c.b16 %v2456, %v2453
      %v2469 = vpack.c.b16 %v2457, %v2454
      %2470 = vrot.lane.b32.xlu0 %v2458, 126
      %v2471 = vpop.permute.xlu0 %2470
      %2472 = vrot.lane.b32.xlu0 %v2459, 126
      %v2473 = vpop.permute.xlu0 %2472
      %2474 = vrot.lane.b32.xlu0 %v2460, 126
      %v2475 = vpop.permute.xlu0 %2474
      %2476 = vrot.lane.b32.xlu0 %v2461, 126
      %v2477 = vpop.permute.xlu0 %2476
      %2478 = vrot.lane.b32.xlu0 %v2462, 126
      %v2479 = vpop.permute.xlu0 %2478
      %2480 = vrot.lane.b32.xlu0 %v2463, 126
      %v2481 = vpop.permute.xlu0 %2480
      %2482 = vrot.lane.b32.xlu0 %v2464, 126
      %v2483 = vpop.permute.xlu0 %2482
      %2484 = vrot.lane.b32.xlu0 %v2465, 126
      %v2485 = vpop.permute.xlu0 %2484
      %2486 = vrot.lane.b32.xlu0 %v2466, 126
      %v2487 = vpop.permute.xlu0 %2486
      %2488 = vrot.lane.b32.xlu0 %v2467, 126
      %v2489 = vpop.permute.xlu0 %2488
      %2490 = vrot.lane.b32.xlu0 %v2468, 126
      %v2491 = vpop.permute.xlu0 %2490
      %2492 = vrot.lane.b32.xlu0 %v2469, 126
      %v2493 = vpop.permute.xlu0 %2492
      %v2494 = vsel %vm704, %v2471, %v2473
      %v2495 = vsel %vm704, %v2473, %v2475
      %v2496 = vsel %vm704, %v2477, %v2479
      %v2497 = vsel %vm704, %v2479, %v2481
      %v2498 = vsel %vm704, %v2483, %v2485
      %v2499 = vsel %vm704, %v2485, %v2487
      %v2500 = vsel %vm704, %v2489, %v2491
      %v2501 = vsel %vm704, %v2491, %v2493
      %v2502 = vld [vmem:[%s4] sm:$0xff]
      %v2503 = vld [vmem:[%s4 + $0x8] sm:$0xff]
      %v2504 = vld [vmem:[%s4 + $0x10] sm:$0xff]
      %v2505 = vld [vmem:[%s4 + $0x18] sm:$0xff]
      %v2506 = vld [vmem:[%s4 + $0x20] sm:$0xff]
      %v2507 = vld [vmem:[%s4 + $0x28] sm:$0xff]
      %v2508 = vld [vmem:[%s4 + $0x30] sm:$0xff]
      %v2509 = vld [vmem:[%s4 + $0x38] sm:$0xff]
      %v2510 = vld [vmem:[#allocation3 + $0x4] sm:$0xff]
      %v2511 = vld [vmem:[#allocation3 + $0x14] sm:$0xff]
      %v2512 = vld [vmem:[#allocation3 + $0x24] sm:$0xff]
      %v2513 = vld [vmem:[#allocation3 + $0x34] sm:$0xff]
      %v2514 = vld [vmem:[#allocation3 + $0x44] sm:$0xff]
      %v2515 = vld [vmem:[#allocation3 + $0x54] sm:$0xff]
      %v2516 = vld [vmem:[#allocation3 + $0x64] sm:$0xff]
      %v2517 = vld [vmem:[#allocation3 + $0x74] sm:$0xff]
      %v2518 = vld [vmem:[#allocation3 + $0x4] sm:$0xff]
      %v2519 = vld [vmem:[#allocation3 + $0xc] sm:$0xf]
      %v2520 = vld [vmem:[#allocation3 + $0x14] sm:$0xff]
      %v2521 = vld [vmem:[#allocation3 + $0x1c] sm:$0xf]
      %v2522 = vld [vmem:[#allocation3 + $0x24] sm:$0xff]
      %v2523 = vld [vmem:[#allocation3 + $0x2c] sm:$0xf]
      %v2524 = vld [vmem:[#allocation3 + $0x34] sm:$0xff]
      %v2525 = vld [vmem:[#allocation3 + $0x3c] sm:$0xf]
      %v2526 = vld [vmem:[#allocation3 + $0x44] sm:$0xff]
      %v2527 = vld [vmem:[#allocation3 + $0x4c] sm:$0xf]
      %v2528 = vld [vmem:[#allocation3 + $0x54] sm:$0xff]
      %v2529 = vld [vmem:[#allocation3 + $0x5c] sm:$0xf]
      %v2530 = vld [vmem:[#allocation3 + $0x64] sm:$0xff]
      %v2531 = vld [vmem:[#allocation3 + $0x6c] sm:$0xf]
      %v2532 = vld [vmem:[#allocation3 + $0x74] sm:$0xff]
      %v2533 = vld [vmem:[#allocation3 + $0x7c] sm:$0xf]
      %v2534 = vsel %vm749, %v2234, 0
      %v2535 = vsel %vm750, %v2235, 0
      %v2536 = vsel %vm749, %v2236, 0
      %v2537 = vsel %vm750, %v2237, 0
      %v2538 = vsel %vm749, %v2238, 0
      %v2539 = vsel %vm750, %v2239, 0
      %v2540 = vsel %vm749, %v2240, 0
      %v2541 = vsel %vm750, %v2241, 0
      %v2542 = vsel %vm749, %v2242, 0
      %v2543 = vsel %vm750, %v2243, 0
      %v2544 = vsel %vm749, %v2244, 0
      %v2545 = vsel %vm750, %v2245, 0
      %v2546 = vsel %vm749, %v2246, 0
      %v2547 = vsel %vm750, %v2247, 0
      %v2548 = vsel %vm749, %v2248, 0
      %v2549 = vsel %vm750, %v2249, 0
      %v2550 = vsel %vm772, %v2518, 0
      %v2551 = vsel %vm773, %v2519, 0
      %v2552 = vsel %vm772, %v2520, 0
      %v2553 = vsel %vm773, %v2521, 0
      %v2554 = vsel %vm772, %v2522, 0
      %v2555 = vsel %vm773, %v2523, 0
      %v2556 = vsel %vm772, %v2524, 0
      %v2557 = vsel %vm773, %v2525, 0
      %v2558 = vsel %vm772, %v2526, 0
      %v2559 = vsel %vm773, %v2527, 0
      %v2560 = vsel %vm772, %v2528, 0
      %v2561 = vsel %vm773, %v2529, 0
      %v2562 = vsel %vm772, %v2530, 0
      %v2563 = vsel %vm773, %v2531, 0
      %v2564 = vsel %vm772, %v2532, 0
      %v2565 = vsel %vm773, %v2533, 0
      %v2582 = vunpack.c.l.b16 %v2534
      %v2583 = vunpack.c.h.b16 %v2534
      %v2584 = vunpack.c.l.b16 %v2535
      %v2585 = vunpack.c.l.b16 %v2536
      %v2586 = vunpack.c.h.b16 %v2536
      %v2587 = vunpack.c.l.b16 %v2537
      %v2588 = vunpack.c.l.b16 %v2538
      %v2589 = vunpack.c.h.b16 %v2538
      %v2590 = vunpack.c.l.b16 %v2539
      %v2591 = vunpack.c.l.b16 %v2540
      %v2592 = vunpack.c.h.b16 %v2540
      %v2593 = vunpack.c.l.b16 %v2541
      %v2594 = vunpack.c.l.b16 %v2542
      %v2595 = vunpack.c.h.b16 %v2542
      %v2596 = vunpack.c.l.b16 %v2543
      %v2597 = vunpack.c.l.b16 %v2544
      %v2598 = vunpack.c.h.b16 %v2544
      %v2599 = vunpack.c.l.b16 %v2545
      %v2600 = vunpack.c.l.b16 %v2546
      %v2601 = vunpack.c.h.b16 %v2546
      %v2602 = vunpack.c.l.b16 %v2547
      %v2603 = vunpack.c.l.b16 %v2548
      %v2604 = vunpack.c.h.b16 %v2548
      %v2605 = vunpack.c.l.b16 %v2549
      %v2606 = vpack.c.b16 %v2585, %v2582
      %v2607 = vpack.c.b16 %v2586, %v2583
      %v2608 = vpack.c.b16 %v2587, %v2584
      %v2609 = vpack.c.b16 %v2591, %v2588
      %v2610 = vpack.c.b16 %v2592, %v2589
      %v2611 = vpack.c.b16 %v2593, %v2590
      %v2612 = vpack.c.b16 %v2597, %v2594
      %v2613 = vpack.c.b16 %v2598, %v2595
      %v2614 = vpack.c.b16 %v2599, %v2596
      %v2615 = vpack.c.b16 %v2603, %v2600
      %v2616 = vpack.c.b16 %v2604, %v2601
      %v2617 = vpack.c.b16 %v2605, %v2602
      %v2626 = vunpack.c.l.b16 %v2510
      %v2627 = vunpack.c.h.b16 %v2510
      %v2628 = vunpack.c.l.b16 %v2511
      %v2629 = vunpack.c.h.b16 %v2511
      %v2630 = vunpack.c.l.b16 %v2512
      %v2631 = vunpack.c.h.b16 %v2512
      %v2632 = vunpack.c.l.b16 %v2513
      %v2633 = vunpack.c.h.b16 %v2513
      %v2634 = vunpack.c.l.b16 %v2514
      %v2635 = vunpack.c.h.b16 %v2514
      %v2636 = vunpack.c.l.b16 %v2515
      %v2637 = vunpack.c.h.b16 %v2515
      %v2638 = vunpack.c.l.b16 %v2516
      %v2639 = vunpack.c.h.b16 %v2516
      %v2640 = vunpack.c.l.b16 %v2517
      %v2641 = vunpack.c.h.b16 %v2517
      %v2642 = vpack.c.b16 %v2628, %v2626
      %v2643 = vpack.c.b16 %v2629, %v2627
      %v2644 = vpack.c.b16 %v2632, %v2630
      %v2645 = vpack.c.b16 %v2633, %v2631
      %v2646 = vpack.c.b16 %v2636, %v2634
      %v2647 = vpack.c.b16 %v2637, %v2635
      %v2648 = vpack.c.b16 %v2640, %v2638
      %v2649 = vpack.c.b16 %v2641, %v2639
      %2650 = vrot.lane.b32.xlu0 %v2642, 127
      %v2651 = vpop.permute.xlu0 %2650
      %2652 = vrot.lane.b32.xlu0 %v2643, 127
      %v2653 = vpop.permute.xlu0 %2652
      %2654 = vrot.lane.b32.xlu0 %v2644, 127
      %v2655 = vpop.permute.xlu0 %2654
      %2656 = vrot.lane.b32.xlu0 %v2645, 127
      %v2657 = vpop.permute.xlu0 %2656
      %2658 = vrot.lane.b32.xlu0 %v2646, 127
      %v2659 = vpop.permute.xlu0 %2658
      %2660 = vrot.lane.b32.xlu0 %v2647, 127
      %v2661 = vpop.permute.xlu0 %2660
      %2662 = vrot.lane.b32.xlu0 %v2648, 127
      %v2663 = vpop.permute.xlu0 %2662
      %2664 = vrot.lane.b32.xlu0 %v2649, 127
      %v2665 = vpop.permute.xlu0 %2664
      %v2666 = vsel %vm619, %v2651, %v2653
      %v2667 = vsel %vm619, %v2655, %v2657
      %v2668 = vsel %vm619, %v2659, %v2661
      %v2669 = vsel %vm619, %v2663, %v2665
      %v2686 = vunpack.c.l.b16 %v2550
      %v2687 = vunpack.c.h.b16 %v2550
      %v2688 = vunpack.c.l.b16 %v2551
      %v2689 = vunpack.c.l.b16 %v2552
      %v2690 = vunpack.c.h.b16 %v2552
      %v2691 = vunpack.c.l.b16 %v2553
      %v2692 = vunpack.c.l.b16 %v2554
      %v2693 = vunpack.c.h.b16 %v2554
      %v2694 = vunpack.c.l.b16 %v2555
      %v2695 = vunpack.c.l.b16 %v2556
      %v2696 = vunpack.c.h.b16 %v2556
      %v2697 = vunpack.c.l.b16 %v2557
      %v2698 = vunpack.c.l.b16 %v2558
      %v2699 = vunpack.c.h.b16 %v2558
      %v2700 = vunpack.c.l.b16 %v2559
      %v2701 = vunpack.c.l.b16 %v2560
      %v2702 = vunpack.c.h.b16 %v2560
      %v2703 = vunpack.c.l.b16 %v2561
      %v2704 = vunpack.c.l.b16 %v2562
      %v2705 = vunpack.c.h.b16 %v2562
      %v2706 = vunpack.c.l.b16 %v2563
      %v2707 = vunpack.c.l.b16 %v2564
      %v2708 = vunpack.c.h.b16 %v2564
      %v2709 = vunpack.c.l.b16 %v2565
      %v2710 = vpack.c.b16 %v2689, %v2686
      %v2711 = vpack.c.b16 %v2690, %v2687
      %v2712 = vpack.c.b16 %v2691, %v2688
      %v2713 = vpack.c.b16 %v2695, %v2692
      %v2714 = vpack.c.b16 %v2696, %v2693
      %v2715 = vpack.c.b16 %v2697, %v2694
      %v2716 = vpack.c.b16 %v2701, %v2698
      %v2717 = vpack.c.b16 %v2702, %v2699
      %v2718 = vpack.c.b16 %v2703, %v2700
      %v2719 = vpack.c.b16 %v2707, %v2704
      %v2720 = vpack.c.b16 %v2708, %v2705
      %v2721 = vpack.c.b16 %v2709, %v2706
      %2722 = vrot.lane.b32.xlu0 %v2710, 126
      %v2723 = vpop.permute.xlu0 %2722
      %2724 = vrot.lane.b32.xlu0 %v2711, 126
      %v2725 = vpop.permute.xlu0 %2724
      %2726 = vrot.lane.b32.xlu0 %v2712, 126
      %v2727 = vpop.permute.xlu0 %2726
      %2728 = vrot.lane.b32.xlu0 %v2713, 126
      %v2729 = vpop.permute.xlu0 %2728
      %2730 = vrot.lane.b32.xlu0 %v2714, 126
      %v2731 = vpop.permute.xlu0 %2730
      %2732 = vrot.lane.b32.xlu0 %v2715, 126
      %v2733 = vpop.permute.xlu0 %2732
      %2734 = vrot.lane.b32.xlu0 %v2716, 126
      %v2735 = vpop.permute.xlu0 %2734
      %2736 = vrot.lane.b32.xlu0 %v2717, 126
      %v2737 = vpop.permute.xlu0 %2736
      %2738 = vrot.lane.b32.xlu0 %v2718, 126
      %v2739 = vpop.permute.xlu0 %2738
      %2740 = vrot.lane.b32.xlu0 %v2719, 126
      %v2741 = vpop.permute.xlu0 %2740
      %2742 = vrot.lane.b32.xlu0 %v2720, 126
      %v2743 = vpop.permute.xlu0 %2742
      %2744 = vrot.lane.b32.xlu0 %v2721, 126
      %v2745 = vpop.permute.xlu0 %2744
      %v2746 = vsel %vm704, %v2723, %v2725
      %v2747 = vsel %vm704, %v2725, %v2727
      %v2748 = vsel %vm704, %v2729, %v2731
      %v2749 = vsel %vm704, %v2731, %v2733
      %v2750 = vsel %vm704, %v2735, %v2737
      %v2751 = vsel %vm704, %v2737, %v2739
      %v2752 = vsel %vm704, %v2741, %v2743
      %v2753 = vsel %vm704, %v2743, %v2745
      %s2754 = scalar_lea.vmem %s4, 64
      %v2755 = vld [vmem:[%s2754] sm:$0xff]
      %v2756 = vld [vmem:[%s2754 + $0x8] sm:$0xff]
      %v2757 = vld [vmem:[%s2754 + $0x10] sm:$0xff]
      %v2758 = vld [vmem:[%s2754 + $0x18] sm:$0xff]
      %v2759 = vld [vmem:[%s2754 + $0x20] sm:$0xff]
      %v2760 = vld [vmem:[%s2754 + $0x28] sm:$0xff]
      %v2761 = vld [vmem:[%s2754 + $0x30] sm:$0xff]
      %v2762 = vld [vmem:[%s2754 + $0x38] sm:$0xff]
      %v2771 = vunpack.c.l.b16 %v2755
      %v2772 = vunpack.c.h.b16 %v2755
      %v2773 = vunpack.c.l.b16 %v2756
      %v2774 = vunpack.c.h.b16 %v2756
      %v2775 = vunpack.c.l.b16 %v2757
      %v2776 = vunpack.c.h.b16 %v2757
      %v2777 = vunpack.c.l.b16 %v2758
      %v2778 = vunpack.c.h.b16 %v2758
      %v2779 = vunpack.c.l.b16 %v2759
      %v2780 = vunpack.c.h.b16 %v2759
      %v2781 = vunpack.c.l.b16 %v2760
      %v2782 = vunpack.c.h.b16 %v2760
      %v2783 = vunpack.c.l.b16 %v2761
      %v2784 = vunpack.c.h.b16 %v2761
      %v2785 = vunpack.c.l.b16 %v2762
      %v2786 = vunpack.c.h.b16 %v2762
      %v2787 = vpack.c.b16 %v2773, %v2771
      %v2788 = vpack.c.b16 %v2774, %v2772
      %v2789 = vpack.c.b16 %v2777, %v2775
      %v2790 = vpack.c.b16 %v2778, %v2776
      %v2791 = vpack.c.b16 %v2781, %v2779
      %v2792 = vpack.c.b16 %v2782, %v2780
      %v2793 = vpack.c.b16 %v2785, %v2783
      %v2794 = vpack.c.b16 %v2786, %v2784
      %2799 = vrot.lane.b32.xlu0 %v2606, 1
      %v2800 = vpop.permute.xlu0 %2799
      %2801 = vrot.lane.b32.xlu0 %v2607, 1
      %v2802 = vpop.permute.xlu0 %2801
      %2803 = vrot.lane.b32.xlu0 %v2608, 1
      %v2804 = vpop.permute.xlu0 %2803
      %2805 = vrot.lane.b32.xlu0 %v2609, 1
      %v2806 = vpop.permute.xlu0 %2805
      %2807 = vrot.lane.b32.xlu0 %v2610, 1
      %v2808 = vpop.permute.xlu0 %2807
      %2809 = vrot.lane.b32.xlu0 %v2611, 1
      %v2810 = vpop.permute.xlu0 %2809
      %2811 = vrot.lane.b32.xlu0 %v2612, 1
      %v2812 = vpop.permute.xlu0 %2811
      %2813 = vrot.lane.b32.xlu0 %v2613, 1
      %v2814 = vpop.permute.xlu0 %2813
      %2815 = vrot.lane.b32.xlu0 %v2614, 1
      %v2816 = vpop.permute.xlu0 %2815
      %2817 = vrot.lane.b32.xlu0 %v2615, 1
      %v2818 = vpop.permute.xlu0 %2817
      %2819 = vrot.lane.b32.xlu0 %v2616, 1
      %v2820 = vpop.permute.xlu0 %2819
      %2821 = vrot.lane.b32.xlu0 %v2617, 1
      %v2822 = vpop.permute.xlu0 %2821
      %2823 = vrot.lane.b32.xlu0 %v2651, 1
      %v2824 = vpop.permute.xlu0 %2823
      %2825 = vrot.lane.b32.xlu0 %v2666, 1
      %v2826 = vpop.permute.xlu0 %2825
      %2827 = vrot.lane.b32.xlu0 %v2653, 1
      %v2828 = vpop.permute.xlu0 %2827
      %2829 = vrot.lane.b32.xlu0 %v2655, 1
      %v2830 = vpop.permute.xlu0 %2829
      %2831 = vrot.lane.b32.xlu0 %v2667, 1
      %v2832 = vpop.permute.xlu0 %2831
      %2833 = vrot.lane.b32.xlu0 %v2657, 1
      %v2834 = vpop.permute.xlu0 %2833
      %2835 = vrot.lane.b32.xlu0 %v2659, 1
      %v2836 = vpop.permute.xlu0 %2835
      %2837 = vrot.lane.b32.xlu0 %v2668, 1
      %v2838 = vpop.permute.xlu0 %2837
      %2839 = vrot.lane.b32.xlu0 %v2661, 1
      %v2840 = vpop.permute.xlu0 %2839
      %2841 = vrot.lane.b32.xlu0 %v2663, 1
      %v2842 = vpop.permute.xlu0 %2841
      %2843 = vrot.lane.b32.xlu0 %v2669, 1
      %v2844 = vpop.permute.xlu0 %2843
      %2845 = vrot.lane.b32.xlu0 %v2665, 1
      %v2846 = vpop.permute.xlu0 %2845
      %2847 = vrot.lane.b32.xlu0 %v2723, 1
      %v2848 = vpop.permute.xlu0 %2847
      %2849 = vrot.lane.b32.xlu0 %v2746, 1
      %v2850 = vpop.permute.xlu0 %2849
      %2851 = vrot.lane.b32.xlu0 %v2747, 1
      %v2852 = vpop.permute.xlu0 %2851
      %2853 = vrot.lane.b32.xlu0 %v2729, 1
      %v2854 = vpop.permute.xlu0 %2853
      %2855 = vrot.lane.b32.xlu0 %v2748, 1
      %v2856 = vpop.permute.xlu0 %2855
      %2857 = vrot.lane.b32.xlu0 %v2749, 1
      %v2858 = vpop.permute.xlu0 %2857
      %2859 = vrot.lane.b32.xlu0 %v2735, 1
      %v2860 = vpop.permute.xlu0 %2859
      %2861 = vrot.lane.b32.xlu0 %v2750, 1
      %v2862 = vpop.permute.xlu0 %2861
      %2863 = vrot.lane.b32.xlu0 %v2751, 1
      %v2864 = vpop.permute.xlu0 %2863
      %2865 = vrot.lane.b32.xlu0 %v2741, 1
      %v2866 = vpop.permute.xlu0 %2865
      %2867 = vrot.lane.b32.xlu0 %v2752, 1
      %v2868 = vpop.permute.xlu0 %2867
      %2869 = vrot.lane.b32.xlu0 %v2753, 1
      %v2870 = vpop.permute.xlu0 %2869
      %v2871 = vsel %vm770, %v2800, %v2802
      %v2872 = vsel %vm770, %v2802, %v2804
      %v2873 = vsel %vm770, %v2806, %v2808
      %v2874 = vsel %vm770, %v2808, %v2810
      %v2875 = vsel %vm770, %v2812, %v2814
      %v2876 = vsel %vm770, %v2814, %v2816
      %v2877 = vsel %vm770, %v2818, %v2820
      %v2878 = vsel %vm770, %v2820, %v2822
      %v2879 = vsel %vm770, %v2824, %v2826
      %v2880 = vsel %vm770, %v2826, %v2828
      %v2881 = vsel %vm770, %v2830, %v2832
      %v2882 = vsel %vm770, %v2832, %v2834
      %v2883 = vsel %vm770, %v2836, %v2838
      %v2884 = vsel %vm770, %v2838, %v2840
      %v2885 = vsel %vm770, %v2842, %v2844
      %v2886 = vsel %vm770, %v2844, %v2846
      %v2887 = vsel %vm770, %v2848, %v2850
      %v2888 = vsel %vm770, %v2850, %v2852
      %v2889 = vsel %vm770, %v2854, %v2856
      %v2890 = vsel %vm770, %v2856, %v2858
      %v2891 = vsel %vm770, %v2860, %v2862
      %v2892 = vsel %vm770, %v2862, %v2864
      %v2893 = vsel %vm770, %v2866, %v2868
      %v2894 = vsel %vm770, %v2868, %v2870
      %v2920 = vsel %vm1143, %v2788, 0
      %v2923 = vsel %vm1143, %v2790, 0
      %v2926 = vsel %vm1143, %v2792, 0
      %v2929 = vsel %vm1143, %v2794, 0
      %2931 = vmatprep.subr.bf16.mxu0 %v2886
      %2932 = vmatpush1.bf16.msra.mxu0 %v2885
      %2933 = vmatprep.subr.bf16.mxu0 %v2884
      %2934 = vmatpush1.bf16.msra.mxu0 %v2883
      %2935 = vmatprep.subr.bf16.mxu0 %v2882
      %2936 = vmatpush1.bf16.msra.mxu0 %v2881
      %2937 = vmatprep.subr.bf16.mxu0 %v2880
      %2938 = vmatpush1.bf16.msra.mxu0 %v2879
      %2939 = vmatprep.subr.bf16.mxu0 %v2878
      %2940 = vmatpush1.bf16.msra.mxu0 %v2877
      %2941 = vmatprep.subr.bf16.mxu0 %v2876
      %2942 = vmatpush1.bf16.msra.mxu0 %v2875
      %2943 = vmatprep.subr.bf16.mxu0 %v2874
      %2944 = vmatpush1.bf16.msra.mxu0 %v2873
      %2945 = vmatprep.subr.bf16.mxu0 %v2872
      %2946 = vmatpush1.bf16.msra.mxu0 %v2871
      %2947 = vmatprep.subr.bf16.mxu0 0
      %2948 = vmatpush2.bf16.msra.mxu0 0
      %2949 = vmatprep.subr.bf16.mxu0 0
      %2950 = vmatpush2.bf16.msra.mxu0 0
      %2951 = vmatprep.subr.bf16.mxu0 0
      %2952 = vmatpush2.bf16.msra.mxu0 0
      %2953 = vmatprep.subr.bf16.mxu0 0
      %2954 = vmatpush2.bf16.msra.mxu0 0
      %2955 = vmatprep.subr.bf16.mxu0 %v2894
      %2956 = vmatpush2.bf16.msra.mxu0 %v2893
      %2957 = vmatprep.subr.bf16.mxu0 %v2892
      %2958 = vmatpush2.bf16.msra.mxu0 %v2891
      %2959 = vmatprep.subr.bf16.mxu0 %v2890
      %2960 = vmatpush2.bf16.msra.mxu0 %v2889
      %2961 = vmatprep.subr.bf16.mxu0 %v2888
      %2962 = vmatpush2.bf16.msra.mxu0 %v2887
      %2963 = vmatprep.mubr.bf16.mxu0 %v2920
      %2964 = vmatmul.mubr.bf16.gmra.mxu0 %v2787
      %v2965 = vpop.f32.mrf.mxu0
      %v2966 = vadd.f32 0.0, %v2965
      %v2967 = vpop.f32.mrf.mxu0
      %v2968 = vadd.f32 0.0, %v2967
      %v2969 = vpop.f32.mrf.mxu0
      %v2970 = vadd.f32 0.0, %v2969
      %v2971 = vpop.f32.mrf.mxu0
      %v2972 = vadd.f32 0.0, %v2971
      %2973 = vmatprep.mubr.bf16.mxu0 %v2923
      %2974 = vmatmul.mubr.bf16.gmra.mxu0 %v2789
      %v2975 = vpop.f32.mrf.mxu0
      %v2976 = vadd.f32 0.0, %v2975
      %v2977 = vpop.f32.mrf.mxu0
      %v2978 = vadd.f32 0.0, %v2977
      %v2979 = vpop.f32.mrf.mxu0
      %v2980 = vadd.f32 0.0, %v2979
      %v2981 = vpop.f32.mrf.mxu0
      %v2982 = vadd.f32 0.0, %v2981
      %2983 = vmatprep.mubr.bf16.mxu0 %v2926
      %2984 = vmatmul.mubr.bf16.gmra.mxu0 %v2791
      %v2985 = vpop.f32.mrf.mxu0
      %v2986 = vadd.f32 0.0, %v2985
      %v2987 = vpop.f32.mrf.mxu0
      %v2988 = vadd.f32 0.0, %v2987
      %v2989 = vpop.f32.mrf.mxu0
      %v2990 = vadd.f32 0.0, %v2989
      %v2991 = vpop.f32.mrf.mxu0
      %v2992 = vadd.f32 0.0, %v2991
      %2993 = vmatprep.mubr.bf16.mxu0 %v2929
      %2994 = vmatmul.mubr.bf16.gmra.mxu0 %v2793
      %v2995 = vpop.f32.mrf.mxu0
      %v2996 = vadd.f32 0.0, %v2995
      %v2997 = vpop.f32.mrf.mxu0
      %v2998 = vadd.f32 0.0, %v2997
      %v2999 = vpop.f32.mrf.mxu0
      %v3000 = vadd.f32 0.0, %v2999
      %v3001 = vpop.f32.mrf.mxu0
      %v3002 = vadd.f32 0.0, %v3001
      %3003 = vdwg.mxu0
      %v3012 = vunpack.c.l.b16 %v2502
      %v3013 = vunpack.c.h.b16 %v2502
      %v3014 = vunpack.c.l.b16 %v2503
      %v3015 = vunpack.c.h.b16 %v2503
      %v3016 = vunpack.c.l.b16 %v2504
      %v3017 = vunpack.c.h.b16 %v2504
      %v3018 = vunpack.c.l.b16 %v2505
      %v3019 = vunpack.c.h.b16 %v2505
      %v3020 = vunpack.c.l.b16 %v2506
      %v3021 = vunpack.c.h.b16 %v2506
      %v3022 = vunpack.c.l.b16 %v2507
      %v3023 = vunpack.c.h.b16 %v2507
      %v3024 = vunpack.c.l.b16 %v2508
      %v3025 = vunpack.c.h.b16 %v2508
      %v3026 = vunpack.c.l.b16 %v2509
      %v3027 = vunpack.c.h.b16 %v2509
      %v3028 = vpack.c.b16 %v3014, %v3012
      %v3029 = vpack.c.b16 %v3015, %v3013
      %v3030 = vpack.c.b16 %v3018, %v3016
      %v3031 = vpack.c.b16 %v3019, %v3017
      %v3032 = vpack.c.b16 %v3022, %v3020
      %v3033 = vpack.c.b16 %v3023, %v3021
      %v3034 = vpack.c.b16 %v3026, %v3024
      %v3035 = vpack.c.b16 %v3027, %v3025
      %3040 = vrot.lane.b32.xlu0 %v2322, 17
      %v3041 = vpop.permute.xlu0 %3040
      %3042 = vrot.lane.b32.xlu0 %v2323, 17
      %v3043 = vpop.permute.xlu0 %3042
      %3044 = vrot.lane.b32.xlu0 %v2324, 17
      %v3045 = vpop.permute.xlu0 %3044
      %3046 = vrot.lane.b32.xlu0 %v2325, 17
      %v3047 = vpop.permute.xlu0 %3046
      %3048 = vrot.lane.b32.xlu0 %v2326, 17
      %v3049 = vpop.permute.xlu0 %3048
      %3050 = vrot.lane.b32.xlu0 %v2327, 17
      %v3051 = vpop.permute.xlu0 %3050
      %3052 = vrot.lane.b32.xlu0 %v2328, 17
      %v3053 = vpop.permute.xlu0 %3052
      %3054 = vrot.lane.b32.xlu0 %v2329, 17
      %v3055 = vpop.permute.xlu0 %3054
      %3056 = vrot.lane.b32.xlu0 %v2330, 17
      %v3057 = vpop.permute.xlu0 %3056
      %3058 = vrot.lane.b32.xlu0 %v2331, 17
      %v3059 = vpop.permute.xlu0 %3058
      %3060 = vrot.lane.b32.xlu0 %v2332, 17
      %v3061 = vpop.permute.xlu0 %3060
      %3062 = vrot.lane.b32.xlu0 %v2333, 17
      %v3063 = vpop.permute.xlu0 %3062
      %3064 = vrot.lane.b32.xlu0 %v2410, 17
      %v3065 = vpop.permute.xlu0 %3064
      %3066 = vrot.lane.b32.xlu0 %v2411, 17
      %v3067 = vpop.permute.xlu0 %3066
      %3068 = vrot.lane.b32.xlu0 %v2391, 17
      %v3069 = vpop.permute.xlu0 %3068
      %3070 = vrot.lane.b32.xlu0 %v2412, 17
      %v3071 = vpop.permute.xlu0 %3070
      %3072 = vrot.lane.b32.xlu0 %v2413, 17
      %v3073 = vpop.permute.xlu0 %3072
      %3074 = vrot.lane.b32.xlu0 %v2397, 17
      %v3075 = vpop.permute.xlu0 %3074
      %3076 = vrot.lane.b32.xlu0 %v2414, 17
      %v3077 = vpop.permute.xlu0 %3076
      %3078 = vrot.lane.b32.xlu0 %v2415, 17
      %v3079 = vpop.permute.xlu0 %3078
      %3080 = vrot.lane.b32.xlu0 %v2403, 17
      %v3081 = vpop.permute.xlu0 %3080
      %3082 = vrot.lane.b32.xlu0 %v2416, 17
      %v3083 = vpop.permute.xlu0 %3082
      %3084 = vrot.lane.b32.xlu0 %v2417, 17
      %v3085 = vpop.permute.xlu0 %3084
      %3086 = vrot.lane.b32.xlu0 %v2409, 17
      %v3087 = vpop.permute.xlu0 %3086
      %3088 = vrot.lane.b32.xlu0 %v2494, 17
      %v3089 = vpop.permute.xlu0 %3088
      %3090 = vrot.lane.b32.xlu0 %v2495, 17
      %v3091 = vpop.permute.xlu0 %3090
      %3092 = vrot.lane.b32.xlu0 %v2475, 17
      %v3093 = vpop.permute.xlu0 %3092
      %3094 = vrot.lane.b32.xlu0 %v2496, 17
      %v3095 = vpop.permute.xlu0 %3094
      %3096 = vrot.lane.b32.xlu0 %v2497, 17
      %v3097 = vpop.permute.xlu0 %3096
      %3098 = vrot.lane.b32.xlu0 %v2481, 17
      %v3099 = vpop.permute.xlu0 %3098
      %3100 = vrot.lane.b32.xlu0 %v2498, 17
      %v3101 = vpop.permute.xlu0 %3100
      %3102 = vrot.lane.b32.xlu0 %v2499, 17
      %v3103 = vpop.permute.xlu0 %3102
      %3104 = vrot.lane.b32.xlu0 %v2487, 17
      %v3105 = vpop.permute.xlu0 %3104
      %3106 = vrot.lane.b32.xlu0 %v2500, 17
      %v3107 = vpop.permute.xlu0 %3106
      %3108 = vrot.lane.b32.xlu0 %v2501, 17
      %v3109 = vpop.permute.xlu0 %3108
      %3110 = vrot.lane.b32.xlu0 %v2493, 17
      %v3111 = vpop.permute.xlu0 %3110
      %v3112 = vsel %vm1337, %v3041, %v3043
      %v3113 = vsel %vm1337, %v3043, %v3045
      %v3114 = vsel %vm1337, %v3047, %v3049
      %v3115 = vsel %vm1337, %v3049, %v3051
      %v3116 = vsel %vm1337, %v3053, %v3055
      %v3117 = vsel %vm1337, %v3055, %v3057
      %v3118 = vsel %vm1337, %v3059, %v3061
      %v3119 = vsel %vm1337, %v3061, %v3063
      %v3120 = vsel %vm1337, %v3065, %v3067
      %v3121 = vsel %vm1337, %v3067, %v3069
      %v3122 = vsel %vm1337, %v3071, %v3073
      %v3123 = vsel %vm1337, %v3073, %v3075
      %v3124 = vsel %vm1337, %v3077, %v3079
      %v3125 = vsel %vm1337, %v3079, %v3081
      %v3126 = vsel %vm1337, %v3083, %v3085
      %v3127 = vsel %vm1337, %v3085, %v3087
      %v3128 = vsel %vm1337, %v3089, %v3091
      %v3129 = vsel %vm1337, %v3091, %v3093
      %v3130 = vsel %vm1337, %v3095, %v3097
      %v3131 = vsel %vm1337, %v3097, %v3099
      %v3132 = vsel %vm1337, %v3101, %v3103
      %v3133 = vsel %vm1337, %v3103, %v3105
      %v3134 = vsel %vm1337, %v3107, %v3109
      %v3135 = vsel %vm1337, %v3109, %v3111
      %v3161 = vsel %vm1143, %v3029, 0
      %v3164 = vsel %vm1143, %v3031, 0
      %v3167 = vsel %vm1143, %v3033, 0
      %v3170 = vsel %vm1143, %v3035, 0
      %3172 = vmatprep.subr.bf16.mxu0 %v3127
      %3173 = vmatpush1.bf16.msra.mxu0 %v3126
      %3174 = vmatprep.subr.bf16.mxu0 %v3125
      %3175 = vmatpush1.bf16.msra.mxu0 %v3124
      %3176 = vmatprep.subr.bf16.mxu0 %v3123
      %3177 = vmatpush1.bf16.msra.mxu0 %v3122
      %3178 = vmatprep.subr.bf16.mxu0 %v3121
      %3179 = vmatpush1.bf16.msra.mxu0 %v3120
      %3180 = vmatprep.subr.bf16.mxu0 %v3119
      %3181 = vmatpush1.bf16.msra.mxu0 %v3118
      %3182 = vmatprep.subr.bf16.mxu0 %v3117
      %3183 = vmatpush1.bf16.msra.mxu0 %v3116
      %3184 = vmatprep.subr.bf16.mxu0 %v3115
      %3185 = vmatpush1.bf16.msra.mxu0 %v3114
      %3186 = vmatprep.subr.bf16.mxu0 %v3113
      %3187 = vmatpush1.bf16.msra.mxu0 %v3112
      %3188 = vmatprep.subr.bf16.mxu0 0
      %3189 = vmatpush2.bf16.msra.mxu0 0
      %3190 = vmatprep.subr.bf16.mxu0 0
      %3191 = vmatpush2.bf16.msra.mxu0 0
      %3192 = vmatprep.subr.bf16.mxu0 0
      %3193 = vmatpush2.bf16.msra.mxu0 0
      %3194 = vmatprep.subr.bf16.mxu0 0
      %3195 = vmatpush2.bf16.msra.mxu0 0
      %3196 = vmatprep.subr.bf16.mxu0 %v3135
      %3197 = vmatpush2.bf16.msra.mxu0 %v3134
      %3198 = vmatprep.subr.bf16.mxu0 %v3133
      %3199 = vmatpush2.bf16.msra.mxu0 %v3132
      %3200 = vmatprep.subr.bf16.mxu0 %v3131
      %3201 = vmatpush2.bf16.msra.mxu0 %v3130
      %3202 = vmatprep.subr.bf16.mxu0 %v3129
      %3203 = vmatpush2.bf16.msra.mxu0 %v3128
      %3204 = vmatprep.mubr.bf16.mxu0 %v3161
      %3205 = vmatmul.mubr.bf16.gmra.mxu0 %v3028
      %v3206 = vpop.f32.mrf.mxu0
      %v3207 = vadd.f32 %v2966, %v3206
      %v3208 = vpop.f32.mrf.mxu0
      %v3209 = vadd.f32 %v2968, %v3208
      %v3210 = vpop.f32.mrf.mxu0
      %v3211 = vadd.f32 %v2970, %v3210
      %v3212 = vpop.f32.mrf.mxu0
      %v3213 = vadd.f32 %v2972, %v3212
      %3214 = vmatprep.mubr.bf16.mxu0 %v3164
      %3215 = vmatmul.mubr.bf16.gmra.mxu0 %v3030
      %v3216 = vpop.f32.mrf.mxu0
      %v3217 = vadd.f32 %v2976, %v3216
      %v3218 = vpop.f32.mrf.mxu0
      %v3219 = vadd.f32 %v2978, %v3218
      %v3220 = vpop.f32.mrf.mxu0
      %v3221 = vadd.f32 %v2980, %v3220
      %v3222 = vpop.f32.mrf.mxu0
      %v3223 = vadd.f32 %v2982, %v3222
      %3224 = vmatprep.mubr.bf16.mxu0 %v3167
      %3225 = vmatmul.mubr.bf16.gmra.mxu0 %v3032
      %v3226 = vpop.f32.mrf.mxu0
      %v3227 = vadd.f32 %v2986, %v3226
      %v3228 = vpop.f32.mrf.mxu0
      %v3229 = vadd.f32 %v2988, %v3228
      %v3230 = vpop.f32.mrf.mxu0
      %v3231 = vadd.f32 %v2990, %v3230
      %v3232 = vpop.f32.mrf.mxu0
      %v3233 = vadd.f32 %v2992, %v3232
      %3234 = vmatprep.mubr.bf16.mxu0 %v3170
      %3235 = vmatmul.mubr.bf16.gmra.mxu0 %v3034
      %v3236 = vpop.f32.mrf.mxu0
      %v3237 = vadd.f32 %v2996, %v3236
      %v3238 = vpop.f32.mrf.mxu0
      %v3239 = vadd.f32 %v2998, %v3238
      %v3240 = vpop.f32.mrf.mxu0
      %v3241 = vadd.f32 %v3000, %v3240
      %v3242 = vpop.f32.mrf.mxu0
      %v3243 = vadd.f32 %v3002, %v3242
      %3244 = vdwg.mxu0
      %v3245 = vsel %vm1476, %v2518, 0
      %v3246 = vsel %vm1477, %v2519, 0
      %v3247 = vsel %vm1476, %v2520, 0
      %v3248 = vsel %vm1477, %v2521, 0
      %v3249 = vsel %vm1476, %v2522, 0
      %v3250 = vsel %vm1477, %v2523, 0
      %v3251 = vsel %vm1476, %v2524, 0
      %v3252 = vsel %vm1477, %v2525, 0
      %v3253 = vsel %vm1476, %v2526, 0
      %v3254 = vsel %vm1477, %v2527, 0
      %v3255 = vsel %vm1476, %v2528, 0
      %v3256 = vsel %vm1477, %v2529, 0
      %v3257 = vsel %vm1476, %v2530, 0
      %v3258 = vsel %vm1477, %v2531, 0
      %v3259 = vsel %vm1476, %v2532, 0
      %v3260 = vsel %vm1477, %v2533, 0
      %v3261 = vsel %vm1498, %v2518, 0
      %v3262 = vsel %vm1499, %v2519, 0
      %v3263 = vsel %vm1498, %v2520, 0
      %v3264 = vsel %vm1499, %v2521, 0
      %v3265 = vsel %vm1498, %v2522, 0
      %v3266 = vsel %vm1499, %v2523, 0
      %v3267 = vsel %vm1498, %v2524, 0
      %v3268 = vsel %vm1499, %v2525, 0
      %v3269 = vsel %vm1498, %v2526, 0
      %v3270 = vsel %vm1499, %v2527, 0
      %v3271 = vsel %vm1498, %v2528, 0
      %v3272 = vsel %vm1499, %v2529, 0
      %v3273 = vsel %vm1498, %v2530, 0
      %v3274 = vsel %vm1499, %v2531, 0
      %v3275 = vsel %vm1498, %v2532, 0
      %v3276 = vsel %vm1499, %v2533, 0
      %v3293 = vunpack.c.l.b16 %v3245
      %v3294 = vunpack.c.h.b16 %v3245
      %v3295 = vunpack.c.l.b16 %v3246
      %v3296 = vunpack.c.l.b16 %v3247
      %v3297 = vunpack.c.h.b16 %v3247
      %v3298 = vunpack.c.l.b16 %v3248
      %v3299 = vunpack.c.l.b16 %v3249
      %v3300 = vunpack.c.h.b16 %v3249
      %v3301 = vunpack.c.l.b16 %v3250
      %v3302 = vunpack.c.l.b16 %v3251
      %v3303 = vunpack.c.h.b16 %v3251
      %v3304 = vunpack.c.l.b16 %v3252
      %v3305 = vunpack.c.l.b16 %v3253
      %v3306 = vunpack.c.h.b16 %v3253
      %v3307 = vunpack.c.l.b16 %v3254
      %v3308 = vunpack.c.l.b16 %v3255
      %v3309 = vunpack.c.h.b16 %v3255
      %v3310 = vunpack.c.l.b16 %v3256
      %v3311 = vunpack.c.l.b16 %v3257
      %v3312 = vunpack.c.h.b16 %v3257
      %v3313 = vunpack.c.l.b16 %v3258
      %v3314 = vunpack.c.l.b16 %v3259
      %v3315 = vunpack.c.h.b16 %v3259
      %v3316 = vunpack.c.l.b16 %v3260
      %v3317 = vpack.c.b16 %v3296, %v3293
      %v3318 = vpack.c.b16 %v3297, %v3294
      %v3319 = vpack.c.b16 %v3298, %v3295
      %v3320 = vpack.c.b16 %v3302, %v3299
      %v3321 = vpack.c.b16 %v3303, %v3300
      %v3322 = vpack.c.b16 %v3304, %v3301
      %v3323 = vpack.c.b16 %v3308, %v3305
      %v3324 = vpack.c.b16 %v3309, %v3306
      %v3325 = vpack.c.b16 %v3310, %v3307
      %v3326 = vpack.c.b16 %v3314, %v3311
      %v3327 = vpack.c.b16 %v3315, %v3312
      %v3328 = vpack.c.b16 %v3316, %v3313
      %v3345 = vunpack.c.l.b16 %v2518
      %v3346 = vunpack.c.h.b16 %v2518
      %v3347 = vunpack.c.l.b16 %v2519
      %v3348 = vunpack.c.l.b16 %v2520
      %v3349 = vunpack.c.h.b16 %v2520
      %v3350 = vunpack.c.l.b16 %v2521
      %v3351 = vunpack.c.l.b16 %v2522
      %v3352 = vunpack.c.h.b16 %v2522
      %v3353 = vunpack.c.l.b16 %v2523
      %v3354 = vunpack.c.l.b16 %v2524
      %v3355 = vunpack.c.h.b16 %v2524
      %v3356 = vunpack.c.l.b16 %v2525
      %v3357 = vunpack.c.l.b16 %v2526
      %v3358 = vunpack.c.h.b16 %v2526
      %v3359 = vunpack.c.l.b16 %v2527
      %v3360 = vunpack.c.l.b16 %v2528
      %v3361 = vunpack.c.h.b16 %v2528
      %v3362 = vunpack.c.l.b16 %v2529
      %v3363 = vunpack.c.l.b16 %v2530
      %v3364 = vunpack.c.h.b16 %v2530
      %v3365 = vunpack.c.l.b16 %v2531
      %v3366 = vunpack.c.l.b16 %v2532
      %v3367 = vunpack.c.h.b16 %v2532
      %v3368 = vunpack.c.l.b16 %v2533
      %v3369 = vpack.c.b16 %v3348, %v3345
      %v3370 = vpack.c.b16 %v3349, %v3346
      %v3371 = vpack.c.b16 %v3350, %v3347
      %v3372 = vpack.c.b16 %v3354, %v3351
      %v3373 = vpack.c.b16 %v3355, %v3352
      %v3374 = vpack.c.b16 %v3356, %v3353
      %v3375 = vpack.c.b16 %v3360, %v3357
      %v3376 = vpack.c.b16 %v3361, %v3358
      %v3377 = vpack.c.b16 %v3362, %v3359
      %v3378 = vpack.c.b16 %v3366, %v3363
      %v3379 = vpack.c.b16 %v3367, %v3364
      %v3380 = vpack.c.b16 %v3368, %v3365
      %3381 = vrot.lane.b32.xlu0 %v3369, 127
      %v3382 = vpop.permute.xlu0 %3381
      %3383 = vrot.lane.b32.xlu0 %v3370, 127
      %v3384 = vpop.permute.xlu0 %3383
      %3385 = vrot.lane.b32.xlu0 %v3371, 127
      %v3386 = vpop.permute.xlu0 %3385
      %3387 = vrot.lane.b32.xlu0 %v3372, 127
      %v3388 = vpop.permute.xlu0 %3387
      %3389 = vrot.lane.b32.xlu0 %v3373, 127
      %v3390 = vpop.permute.xlu0 %3389
      %3391 = vrot.lane.b32.xlu0 %v3374, 127
      %v3392 = vpop.permute.xlu0 %3391
      %3393 = vrot.lane.b32.xlu0 %v3375, 127
      %v3394 = vpop.permute.xlu0 %3393
      %3395 = vrot.lane.b32.xlu0 %v3376, 127
      %v3396 = vpop.permute.xlu0 %3395
      %3397 = vrot.lane.b32.xlu0 %v3377, 127
      %v3398 = vpop.permute.xlu0 %3397
      %3399 = vrot.lane.b32.xlu0 %v3378, 127
      %v3400 = vpop.permute.xlu0 %3399
      %3401 = vrot.lane.b32.xlu0 %v3379, 127
      %v3402 = vpop.permute.xlu0 %3401
      %3403 = vrot.lane.b32.xlu0 %v3380, 127
      %v3404 = vpop.permute.xlu0 %3403
      %v3405 = vsel %vm619, %v3382, %v3384
      %v3406 = vsel %vm619, %v3384, %v3386
      %v3407 = vsel %vm619, %v3388, %v3390
      %v3408 = vsel %vm619, %v3390, %v3392
      %v3409 = vsel %vm619, %v3394, %v3396
      %v3410 = vsel %vm619, %v3396, %v3398
      %v3411 = vsel %vm619, %v3400, %v3402
      %v3412 = vsel %vm619, %v3402, %v3404
      %v3429 = vunpack.c.l.b16 %v3261
      %v3430 = vunpack.c.h.b16 %v3261
      %v3431 = vunpack.c.l.b16 %v3262
      %v3432 = vunpack.c.l.b16 %v3263
      %v3433 = vunpack.c.h.b16 %v3263
      %v3434 = vunpack.c.l.b16 %v3264
      %v3435 = vunpack.c.l.b16 %v3265
      %v3436 = vunpack.c.h.b16 %v3265
      %v3437 = vunpack.c.l.b16 %v3266
      %v3438 = vunpack.c.l.b16 %v3267
      %v3439 = vunpack.c.h.b16 %v3267
      %v3440 = vunpack.c.l.b16 %v3268
      %v3441 = vunpack.c.l.b16 %v3269
      %v3442 = vunpack.c.h.b16 %v3269
      %v3443 = vunpack.c.l.b16 %v3270
      %v3444 = vunpack.c.l.b16 %v3271
      %v3445 = vunpack.c.h.b16 %v3271
      %v3446 = vunpack.c.l.b16 %v3272
      %v3447 = vunpack.c.l.b16 %v3273
      %v3448 = vunpack.c.h.b16 %v3273
      %v3449 = vunpack.c.l.b16 %v3274
      %v3450 = vunpack.c.l.b16 %v3275
      %v3451 = vunpack.c.h.b16 %v3275
      %v3452 = vunpack.c.l.b16 %v3276
      %v3453 = vpack.c.b16 %v3432, %v3429
      %v3454 = vpack.c.b16 %v3433, %v3430
      %v3455 = vpack.c.b16 %v3434, %v3431
      %v3456 = vpack.c.b16 %v3438, %v3435
      %v3457 = vpack.c.b16 %v3439, %v3436
      %v3458 = vpack.c.b16 %v3440, %v3437
      %v3459 = vpack.c.b16 %v3444, %v3441
      %v3460 = vpack.c.b16 %v3445, %v3442
      %v3461 = vpack.c.b16 %v3446, %v3443
      %v3462 = vpack.c.b16 %v3450, %v3447
      %v3463 = vpack.c.b16 %v3451, %v3448
      %v3464 = vpack.c.b16 %v3452, %v3449
      %3465 = vrot.lane.b32.xlu0 %v3453, 126
      %v3466 = vpop.permute.xlu0 %3465
      %3467 = vrot.lane.b32.xlu0 %v3454, 126
      %v3468 = vpop.permute.xlu0 %3467
      %3469 = vrot.lane.b32.xlu0 %v3455, 126
      %v3470 = vpop.permute.xlu0 %3469
      %3471 = vrot.lane.b32.xlu0 %v3456, 126
      %v3472 = vpop.permute.xlu0 %3471
      %3473 = vrot.lane.b32.xlu0 %v3457, 126
      %v3474 = vpop.permute.xlu0 %3473
      %3475 = vrot.lane.b32.xlu0 %v3458, 126
      %v3476 = vpop.permute.xlu0 %3475
      %3477 = vrot.lane.b32.xlu0 %v3459, 126
      %v3478 = vpop.permute.xlu0 %3477
      %3479 = vrot.lane.b32.xlu0 %v3460, 126
      %v3480 = vpop.permute.xlu0 %3479
      %3481 = vrot.lane.b32.xlu0 %v3461, 126
      %v3482 = vpop.permute.xlu0 %3481
      %3483 = vrot.lane.b32.xlu0 %v3462, 126
      %v3484 = vpop.permute.xlu0 %3483
      %3485 = vrot.lane.b32.xlu0 %v3463, 126
      %v3486 = vpop.permute.xlu0 %3485
      %3487 = vrot.lane.b32.xlu0 %v3464, 126
      %v3488 = vpop.permute.xlu0 %3487
      %v3489 = vsel %vm704, %v3466, %v3468
      %v3490 = vsel %vm704, %v3468, %v3470
      %v3491 = vsel %vm704, %v3472, %v3474
      %v3492 = vsel %vm704, %v3474, %v3476
      %v3493 = vsel %vm704, %v3478, %v3480
      %v3494 = vsel %vm704, %v3480, %v3482
      %v3495 = vsel %vm704, %v3484, %v3486
      %v3496 = vsel %vm704, %v3486, %v3488
      %s3497 = scalar_lea.vmem %s4, 128
      %v3498 = vld [vmem:[%s3497] sm:$0xff]
      %v3499 = vld [vmem:[%s3497 + $0x8] sm:$0xff]
      %v3500 = vld [vmem:[%s3497 + $0x10] sm:$0xff]
      %v3501 = vld [vmem:[%s3497 + $0x18] sm:$0xff]
      %v3502 = vld [vmem:[%s3497 + $0x20] sm:$0xff]
      %v3503 = vld [vmem:[%s3497 + $0x28] sm:$0xff]
      %v3504 = vld [vmem:[%s3497 + $0x30] sm:$0xff]
      %v3505 = vld [vmem:[%s3497 + $0x38] sm:$0xff]
      %v3514 = vunpack.c.l.b16 %v3498
      %v3515 = vunpack.c.h.b16 %v3498
      %v3516 = vunpack.c.l.b16 %v3499
      %v3517 = vunpack.c.h.b16 %v3499
      %v3518 = vunpack.c.l.b16 %v3500
      %v3519 = vunpack.c.h.b16 %v3500
      %v3520 = vunpack.c.l.b16 %v3501
      %v3521 = vunpack.c.h.b16 %v3501
      %v3522 = vunpack.c.l.b16 %v3502
      %v3523 = vunpack.c.h.b16 %v3502
      %v3524 = vunpack.c.l.b16 %v3503
      %v3525 = vunpack.c.h.b16 %v3503
      %v3526 = vunpack.c.l.b16 %v3504
      %v3527 = vunpack.c.h.b16 %v3504
      %v3528 = vunpack.c.l.b16 %v3505
      %v3529 = vunpack.c.h.b16 %v3505
      %v3530 = vpack.c.b16 %v3516, %v3514
      %v3531 = vpack.c.b16 %v3517, %v3515
      %v3532 = vpack.c.b16 %v3520, %v3518
      %v3533 = vpack.c.b16 %v3521, %v3519
      %v3534 = vpack.c.b16 %v3524, %v3522
      %v3535 = vpack.c.b16 %v3525, %v3523
      %v3536 = vpack.c.b16 %v3528, %v3526
      %v3537 = vpack.c.b16 %v3529, %v3527
      %3542 = vrot.lane.b32.xlu0 %v3317, 113
      %v3543 = vpop.permute.xlu0 %3542
      %3544 = vrot.lane.b32.xlu0 %v3318, 113
      %v3545 = vpop.permute.xlu0 %3544
      %3546 = vrot.lane.b32.xlu0 %v3319, 113
      %v3547 = vpop.permute.xlu0 %3546
      %3548 = vrot.lane.b32.xlu0 %v3320, 113
      %v3549 = vpop.permute.xlu0 %3548
      %3550 = vrot.lane.b32.xlu0 %v3321, 113
      %v3551 = vpop.permute.xlu0 %3550
      %3552 = vrot.lane.b32.xlu0 %v3322, 113
      %v3553 = vpop.permute.xlu0 %3552
      %3554 = vrot.lane.b32.xlu0 %v3323, 113
      %v3555 = vpop.permute.xlu0 %3554
      %3556 = vrot.lane.b32.xlu0 %v3324, 113
      %v3557 = vpop.permute.xlu0 %3556
      %3558 = vrot.lane.b32.xlu0 %v3325, 113
      %v3559 = vpop.permute.xlu0 %3558
      %3560 = vrot.lane.b32.xlu0 %v3326, 113
      %v3561 = vpop.permute.xlu0 %3560
      %3562 = vrot.lane.b32.xlu0 %v3327, 113
      %v3563 = vpop.permute.xlu0 %3562
      %3564 = vrot.lane.b32.xlu0 %v3328, 113
      %v3565 = vpop.permute.xlu0 %3564
      %3566 = vrot.lane.b32.xlu0 %v3405, 113
      %v3567 = vpop.permute.xlu0 %3566
      %3568 = vrot.lane.b32.xlu0 %v3406, 113
      %v3569 = vpop.permute.xlu0 %3568
      %3570 = vrot.lane.b32.xlu0 %v3386, 113
      %v3571 = vpop.permute.xlu0 %3570
      %3572 = vrot.lane.b32.xlu0 %v3407, 113
      %v3573 = vpop.permute.xlu0 %3572
      %3574 = vrot.lane.b32.xlu0 %v3408, 113
      %v3575 = vpop.permute.xlu0 %3574
      %3576 = vrot.lane.b32.xlu0 %v3392, 113
      %v3577 = vpop.permute.xlu0 %3576
      %3578 = vrot.lane.b32.xlu0 %v3409, 113
      %v3579 = vpop.permute.xlu0 %3578
      %3580 = vrot.lane.b32.xlu0 %v3410, 113
      %v3581 = vpop.permute.xlu0 %3580
      %3582 = vrot.lane.b32.xlu0 %v3398, 113
      %v3583 = vpop.permute.xlu0 %3582
      %3584 = vrot.lane.b32.xlu0 %v3411, 113
      %v3585 = vpop.permute.xlu0 %3584
      %3586 = vrot.lane.b32.xlu0 %v3412, 113
      %v3587 = vpop.permute.xlu0 %3586
      %3588 = vrot.lane.b32.xlu0 %v3404, 113
      %v3589 = vpop.permute.xlu0 %3588
      %3590 = vrot.lane.b32.xlu0 %v3489, 113
      %v3591 = vpop.permute.xlu0 %3590
      %3592 = vrot.lane.b32.xlu0 %v3490, 113
      %v3593 = vpop.permute.xlu0 %3592
      %3594 = vrot.lane.b32.xlu0 %v3470, 113
      %v3595 = vpop.permute.xlu0 %3594
      %3596 = vrot.lane.b32.xlu0 %v3491, 113
      %v3597 = vpop.permute.xlu0 %3596
      %3598 = vrot.lane.b32.xlu0 %v3492, 113
      %v3599 = vpop.permute.xlu0 %3598
      %3600 = vrot.lane.b32.xlu0 %v3476, 113
      %v3601 = vpop.permute.xlu0 %3600
      %3602 = vrot.lane.b32.xlu0 %v3493, 113
      %v3603 = vpop.permute.xlu0 %3602
      %3604 = vrot.lane.b32.xlu0 %v3494, 113
      %v3605 = vpop.permute.xlu0 %3604
      %3606 = vrot.lane.b32.xlu0 %v3482, 113
      %v3607 = vpop.permute.xlu0 %3606
      %3608 = vrot.lane.b32.xlu0 %v3495, 113
      %v3609 = vpop.permute.xlu0 %3608
      %3610 = vrot.lane.b32.xlu0 %v3496, 113
      %v3611 = vpop.permute.xlu0 %3610
      %3612 = vrot.lane.b32.xlu0 %v3488, 113
      %v3613 = vpop.permute.xlu0 %3612
      %v3614 = vsel %vm471, %v3543, %v3545
      %v3615 = vsel %vm471, %v3545, %v3547
      %v3616 = vsel %vm471, %v3549, %v3551
      %v3617 = vsel %vm471, %v3551, %v3553
      %v3618 = vsel %vm471, %v3555, %v3557
      %v3619 = vsel %vm471, %v3557, %v3559
      %v3620 = vsel %vm471, %v3561, %v3563
      %v3621 = vsel %vm471, %v3563, %v3565
      %v3622 = vsel %vm471, %v3567, %v3569
      %v3623 = vsel %vm471, %v3569, %v3571
      %v3624 = vsel %vm471, %v3573, %v3575
      %v3625 = vsel %vm471, %v3575, %v3577
      %v3626 = vsel %vm471, %v3579, %v3581
      %v3627 = vsel %vm471, %v3581, %v3583
      %v3628 = vsel %vm471, %v3585, %v3587
      %v3629 = vsel %vm471, %v3587, %v3589
      %v3630 = vsel %vm471, %v3591, %v3593
      %v3631 = vsel %vm471, %v3593, %v3595
      %v3632 = vsel %vm471, %v3597, %v3599
      %v3633 = vsel %vm471, %v3599, %v3601
      %v3634 = vsel %vm471, %v3603, %v3605
      %v3635 = vsel %vm471, %v3605, %v3607
      %v3636 = vsel %vm471, %v3609, %v3611
      %v3637 = vsel %vm471, %v3611, %v3613
      %v3663 = vsel %vm1143, %v3531, 0
      %v3666 = vsel %vm1143, %v3533, 0
      %v3669 = vsel %vm1143, %v3535, 0
      %v3672 = vsel %vm1143, %v3537, 0
      %3674 = vmatprep.subr.bf16.mxu0 %v3629
      %3675 = vmatpush1.bf16.msra.mxu0 %v3628
      %3676 = vmatprep.subr.bf16.mxu0 %v3627
      %3677 = vmatpush1.bf16.msra.mxu0 %v3626
      %3678 = vmatprep.subr.bf16.mxu0 %v3625
      %3679 = vmatpush1.bf16.msra.mxu0 %v3624
      %3680 = vmatprep.subr.bf16.mxu0 %v3623
      %3681 = vmatpush1.bf16.msra.mxu0 %v3622
      %3682 = vmatprep.subr.bf16.mxu0 %v3621
      %3683 = vmatpush1.bf16.msra.mxu0 %v3620
      %3684 = vmatprep.subr.bf16.mxu0 %v3619
      %3685 = vmatpush1.bf16.msra.mxu0 %v3618
      %3686 = vmatprep.subr.bf16.mxu0 %v3617
      %3687 = vmatpush1.bf16.msra.mxu0 %v3616
      %3688 = vmatprep.subr.bf16.mxu0 %v3615
      %3689 = vmatpush1.bf16.msra.mxu0 %v3614
      %3690 = vmatprep.subr.bf16.mxu0 0
      %3691 = vmatpush2.bf16.msra.mxu0 0
      %3692 = vmatprep.subr.bf16.mxu0 0
      %3693 = vmatpush2.bf16.msra.mxu0 0
      %3694 = vmatprep.subr.bf16.mxu0 0
      %3695 = vmatpush2.bf16.msra.mxu0 0
      %3696 = vmatprep.subr.bf16.mxu0 0
      %3697 = vmatpush2.bf16.msra.mxu0 0
      %3698 = vmatprep.subr.bf16.mxu0 %v3637
      %3699 = vmatpush2.bf16.msra.mxu0 %v3636
      %3700 = vmatprep.subr.bf16.mxu0 %v3635
      %3701 = vmatpush2.bf16.msra.mxu0 %v3634
      %3702 = vmatprep.subr.bf16.mxu0 %v3633
      %3703 = vmatpush2.bf16.msra.mxu0 %v3632
      %3704 = vmatprep.subr.bf16.mxu0 %v3631
      %3705 = vmatpush2.bf16.msra.mxu0 %v3630
      %3706 = vmatprep.mubr.bf16.mxu0 %v3663
      %3707 = vmatmul.mubr.bf16.gmra.mxu0 %v3530
      %v3708 = vpop.f32.mrf.mxu0
      %v3709 = vadd.f32 0.0, %v3708
      %v3710 = vpop.f32.mrf.mxu0
      %v3711 = vadd.f32 0.0, %v3710
      %v3712 = vpop.f32.mrf.mxu0
      %v3713 = vadd.f32 0.0, %v3712
      %v3714 = vpop.f32.mrf.mxu0
      %v3715 = vadd.f32 0.0, %v3714
      %3716 = vmatprep.mubr.bf16.mxu0 %v3666
      %3717 = vmatmul.mubr.bf16.gmra.mxu0 %v3532
      %v3718 = vpop.f32.mrf.mxu0
      %v3719 = vadd.f32 0.0, %v3718
      %v3720 = vpop.f32.mrf.mxu0
      %v3721 = vadd.f32 0.0, %v3720
      %v3722 = vpop.f32.mrf.mxu0
      %v3723 = vadd.f32 0.0, %v3722
      %v3724 = vpop.f32.mrf.mxu0
      %v3725 = vadd.f32 0.0, %v3724
      %3726 = vmatprep.mubr.bf16.mxu0 %v3669
      %3727 = vmatmul.mubr.bf16.gmra.mxu0 %v3534
      %v3728 = vpop.f32.mrf.mxu0
      %v3729 = vadd.f32 0.0, %v3728
      %v3730 = vpop.f32.mrf.mxu0
      %v3731 = vadd.f32 0.0, %v3730
      %v3732 = vpop.f32.mrf.mxu0
      %v3733 = vadd.f32 0.0, %v3732
      %v3734 = vpop.f32.mrf.mxu0
      %v3735 = vadd.f32 0.0, %v3734
      %3736 = vmatprep.mubr.bf16.mxu0 %v3672
      %3737 = vmatmul.mubr.bf16.gmra.mxu0 %v3536
      %v3738 = vpop.f32.mrf.mxu0
      %v3739 = vadd.f32 0.0, %v3738
      %v3740 = vpop.f32.mrf.mxu0
      %v3741 = vadd.f32 0.0, %v3740
      %v3742 = vpop.f32.mrf.mxu0
      %v3743 = vadd.f32 0.0, %v3742
      %v3744 = vpop.f32.mrf.mxu0
      %v3745 = vadd.f32 0.0, %v3744
      %3746 = vdwg.mxu0
      %v3747 = vadd.f32 %v3207, %v3709
      %v3748 = vadd.f32 %v3209, %v3711
      %v3749 = vadd.f32 %v3211, %v3713
      %v3750 = vadd.f32 %v3213, %v3715
      %v3751 = vadd.f32 %v3217, %v3719
      %v3752 = vadd.f32 %v3219, %v3721
      %v3753 = vadd.f32 %v3221, %v3723
      %v3754 = vadd.f32 %v3223, %v3725
      %v3755 = vadd.f32 %v3227, %v3729
      %v3756 = vadd.f32 %v3229, %v3731
      %v3757 = vadd.f32 %v3231, %v3733
      %v3758 = vadd.f32 %v3233, %v3735
      %v3759 = vadd.f32 %v3237, %v3739
      %v3760 = vadd.f32 %v3239, %v3741
      %v3761 = vadd.f32 %v3241, %v3743
      %v3762 = vadd.f32 %v3243, %v3745
      %v3763 = vld [vmem:[%s5] sm:$0xff]
      %v3764 = vld [vmem:[%s5 + $0x8] sm:$0xff]
      %v3765 = vld [vmem:[%s5 + $0x10] sm:$0xff]
      %v3766 = vld [vmem:[%s5 + $0x18] sm:$0xff]
      %v3767 = vld [vmem:[%s5 + $0x20] sm:$0xff]
      %v3768 = vld [vmem:[%s5 + $0x28] sm:$0xff]
      %v3769 = vld [vmem:[%s5 + $0x30] sm:$0xff]
      %v3770 = vld [vmem:[%s5 + $0x38] sm:$0xff]
      %3772 = vset.pattern.permute.xlu0 0
      %3773 = vperm.xlu0 %3772, %v3763
      %v3774 = vpop.permute.xlu0 %3773
      %3777 = vset.pattern.permute.xlu0 0
      %3778 = vperm.xlu0 %3777, %v3764
      %v3779 = vpop.permute.xlu0 %3778
      %3782 = vset.pattern.permute.xlu0 0
      %3783 = vperm.xlu0 %3782, %v3765
      %v3784 = vpop.permute.xlu0 %3783
      %3787 = vset.pattern.permute.xlu0 0
      %3788 = vperm.xlu0 %3787, %v3766
      %v3789 = vpop.permute.xlu0 %3788
      %3792 = vset.pattern.permute.xlu0 0
      %3793 = vperm.xlu0 %3792, %v3767
      %v3794 = vpop.permute.xlu0 %3793
      %3797 = vset.pattern.permute.xlu0 0
      %3798 = vperm.xlu0 %3797, %v3768
      %v3799 = vpop.permute.xlu0 %3798
      %3802 = vset.pattern.permute.xlu0 0
      %3803 = vperm.xlu0 %3802, %v3769
      %v3804 = vpop.permute.xlu0 %3803
      %3807 = vset.pattern.permute.xlu0 0
      %3808 = vperm.xlu0 %3807, %v3770
      %v3809 = vpop.permute.xlu0 %3808
      %v3811 = vmul.f32 %v3747, %v3774
      %v3812 = vmul.f32 %v3748, %v3774
      %v3813 = vmul.f32 %v3749, %v3779
      %v3814 = vmul.f32 %v3750, %v3779
      %v3815 = vmul.f32 %v3751, %v3784
      %v3816 = vmul.f32 %v3752, %v3784
      %v3817 = vmul.f32 %v3753, %v3789
      %v3818 = vmul.f32 %v3754, %v3789
      %v3819 = vmul.f32 %v3755, %v3794
      %v3820 = vmul.f32 %v3756, %v3794
      %v3821 = vmul.f32 %v3757, %v3799
      %v3822 = vmul.f32 %v3758, %v3799
      %v3823 = vmul.f32 %v3759, %v3804
      %v3824 = vmul.f32 %v3760, %v3804
      %v3825 = vmul.f32 %v3761, %v3809
      %v3826 = vmul.f32 %v3762, %v3809
      %v3827 = vld [vmem:[%s6] sm:$0xff]
      %v3828 = vld [vmem:[%s6 + $0x8] sm:$0xff]
      %v3829 = vld [vmem:[%s6 + $0x10] sm:$0xff]
      %v3830 = vld [vmem:[%s6 + $0x18] sm:$0xff]
      %v3831 = vld [vmem:[%s6 + $0x20] sm:$0xff]
      %v3832 = vld [vmem:[%s6 + $0x28] sm:$0xff]
      %v3833 = vld [vmem:[%s6 + $0x30] sm:$0xff]
      %v3834 = vld [vmem:[%s6 + $0x38] sm:$0xff]
      %3836 = vset.pattern.permute.xlu0 0
      %3837 = vperm.xlu0 %3836, %v3827
      %v3838 = vpop.permute.xlu0 %3837
      %3841 = vset.pattern.permute.xlu0 0
      %3842 = vperm.xlu0 %3841, %v3828
      %v3843 = vpop.permute.xlu0 %3842
      %3846 = vset.pattern.permute.xlu0 0
      %3847 = vperm.xlu0 %3846, %v3829
      %v3848 = vpop.permute.xlu0 %3847
      %3851 = vset.pattern.permute.xlu0 0
      %3852 = vperm.xlu0 %3851, %v3830
      %v3853 = vpop.permute.xlu0 %3852
      %3856 = vset.pattern.permute.xlu0 0
      %3857 = vperm.xlu0 %3856, %v3831
      %v3858 = vpop.permute.xlu0 %3857
      %3861 = vset.pattern.permute.xlu0 0
      %3862 = vperm.xlu0 %3861, %v3832
      %v3863 = vpop.permute.xlu0 %3862
      %3866 = vset.pattern.permute.xlu0 0
      %3867 = vperm.xlu0 %3866, %v3833
      %v3868 = vpop.permute.xlu0 %3867
      %3871 = vset.pattern.permute.xlu0 0
      %3872 = vperm.xlu0 %3871, %v3834
      %v3873 = vpop.permute.xlu0 %3872
      %v3875 = vadd.f32 %v3811, %v3838
      %v3876 = vadd.f32 %v3812, %v3838
      %v3877 = vadd.f32 %v3813, %v3843
      %v3878 = vadd.f32 %v3814, %v3843
      %v3879 = vadd.f32 %v3815, %v3848
      %v3880 = vadd.f32 %v3816, %v3848
      %v3881 = vadd.f32 %v3817, %v3853
      %v3882 = vadd.f32 %v3818, %v3853
      %v3883 = vadd.f32 %v3819, %v3858
      %v3884 = vadd.f32 %v3820, %v3858
      %v3885 = vadd.f32 %v3821, %v3863
      %v3886 = vadd.f32 %v3822, %v3863
      %v3887 = vadd.f32 %v3823, %v3868
      %v3888 = vadd.f32 %v3824, %v3868
      %v3889 = vadd.f32 %v3825, %v3873
      %v3890 = vadd.f32 %v3826, %v3873
      %v3891 = vadd.f32 %v3875, %v345
      %v3892 = vadd.f32 %v3876, %v346
      %v3893 = vadd.f32 %v3877, %v347
      %v3894 = vadd.f32 %v3878, %v348
      %v3895 = vadd.f32 %v3879, %v349
      %v3896 = vadd.f32 %v3880, %v350
      %v3897 = vadd.f32 %v3881, %v351
      %v3898 = vadd.f32 %v3882, %v352
      %v3899 = vadd.f32 %v3883, %v353
      %v3900 = vadd.f32 %v3884, %v354
      %v3901 = vadd.f32 %v3885, %v355
      %v3902 = vadd.f32 %v3886, %v356
      %v3903 = vadd.f32 %v3887, %v357
      %v3904 = vadd.f32 %v3888, %v358
      %v3905 = vadd.f32 %v3889, %v359
      %v3906 = vadd.f32 %v3890, %v360
      %3907 = vst [vmem:[%s278] sm:$0xff] %v3891
      %3908 = vst [vmem:[%s278 + $0x8] sm:$0xff] %v3892
      %3909 = vst [vmem:[%s278 + $0x10] sm:$0xff] %v3893
      %3910 = vst [vmem:[%s278 + $0x18] sm:$0xff] %v3894
      %3911 = vst [vmem:[%s278 + $0x20] sm:$0xff] %v3895
      %3912 = vst [vmem:[%s278 + $0x28] sm:$0xff] %v3896
      %3913 = vst [vmem:[%s278 + $0x30] sm:$0xff] %v3897
      %3914 = vst [vmem:[%s278 + $0x38] sm:$0xff] %v3898
      %3915 = vst [vmem:[%s278 + $0x40] sm:$0xff] %v3899
      %3916 = vst [vmem:[%s278 + $0x48] sm:$0xff] %v3900
      %3917 = vst [vmem:[%s278 + $0x50] sm:$0xff] %v3901
      %3918 = vst [vmem:[%s278 + $0x58] sm:$0xff] %v3902
      %3919 = vst [vmem:[%s278 + $0x60] sm:$0xff] %v3903
      %3920 = vst [vmem:[%s278 + $0x68] sm:$0xff] %v3904
      %3921 = vst [vmem:[%s278 + $0x70] sm:$0xff] %v3905
      %3922 = vst [vmem:[%s278 + $0x78] sm:$0xff] %v3906
      %p3923 = scmp.lt.s32.totalorder %s18, 1
      %s3924 = scalar_select %p3923, %s18, 1
      %s3925 = smul.addr %s3924, 16
      %s3926 = smul.addr %s3925, 8
      %s3927 = scalar_lea.vmem %s7, %s3926
      // Predicated region
      $region49: #{residual_block.1} parent=47 // pred_check
        %p3928 = pneg %p188
      $region50: #{residual_block.1} parent=47 // pred_check_branch
        %3930 = sbr.rel (%p3928) target = $region52
      $region51: #{residual_block.1} parent=47 // pred_region
        _
      $region52: #{residual_block.1} parent=47 // pred_fallthru
        _
    $region48: #{residual_block.1} parent=5 // pred_fallthru
      _
    %p3931 = scmp.le.s32.totalorder 2, %s13
    // Predicated region
    $region53: #{residual_block.1} parent=5 // pred_check
      %p3932 = pneg %p3931
    $region54: #{residual_block.1} parent=5 // pred_check_branch
      %3934 = sbr.rel (%p3932) target = $region56
    $region55: #{residual_block.1} parent=5 // pred_region
      %s3935 = ssub.s32 %s13, 2
      // Predicated region
      $region57: #{residual_block.1} parent=55 // pred_check
        %p3936 = pneg %p194
      $region58: #{residual_block.1} parent=55 // pred_check_branch
        %3938 = sbr.rel (%p3936) target = $region60
      $region59: #{residual_block.1} parent=55 // pred_region
        %p3939 = scmp.lt.s32.totalorder %s19, 1
        %s3940 = scalar_select %p3939, %s19, 1
        %s3941 = smul.addr %s3940, 16
        %s3942 = smul.addr %s3941, 8
        %s3943 = scalar_lea.vmem %s7, %s3942
      $region60: #{residual_block.1} parent=55 // pred_fallthru
        _
    $region56: #{residual_block.1} parent=5 // pred_fallthru
      _
  $region6: #{residual_block.1} parent=0 // loop_footer
    %s17 = sadd.s32 1, %s13
  $region7: #{residual_block.1} parent=0 // loop_footer_branch
    %12 = sbr.rel target = $region3
  $region8: #{residual_block.1} parent=0 // loop_exit
    _

</llo_original>
